<compile_context>
chip_gen: v7x
topology: tpu7x:2x2x1
jax: 0.10.0
libtpu: 0.0.40
codegen_flags: <defaults>
</compile_context>

<pallas_src>
import functools

import jax
import jax.numpy as jnp
from jax.experimental import pallas as pl
from jax.experimental.pallas import tpu as pltpu


_EPS_LN = 1e-6
_EPS_GRN = 1e-6


# ----------------------------------------------------------------------------
# Generation-aware budgets and tiling helpers
# ----------------------------------------------------------------------------
def _tpu_budgets():
    """(scoped vmem_limit_bytes, accounted working-set budget) per generation."""
    try:
        cap = pltpu.get_tpu_info().vmem_capacity_bytes
    except Exception:
        cap = 64 * 1024 * 1024          # conservative default (v7x-class 64 MiB)
    vmem_limit = min(int(cap * 0.8), 100 * 1024 * 1024)   # ~100 MiB on v5e/v6e
    return vmem_limit, int(vmem_limit * 0.7)


def _pick_hw_tile(hw, per_row_bytes, fixed_bytes, budget_bytes, max_rows=2048):
    """Largest HW tile (preferring 256-, then 128-, then 8-aligned divisors of
    hw) whose working set fits budget_bytes.  None if nothing fits."""
    avail = budget_bytes - fixed_bytes
    if avail <= 0:
        return None
    cap = min(int(avail // max(per_row_bytes, 1)), max_rows)
    if cap <= 0:
        return None
    if hw <= cap:
        return hw                                   # full-extent block
    for align in (256, 128, 8):                     # 256 fills the v6e/v7x MXU
        t = (cap // align) * align
        while t >= align:
            if hw % t == 0:
                return t
            t -= align
    return None


def _plan(hw, c, c4, itemsize, hw_tile, force_two_pass):
    """Choose fused vs two-pass path and the HW tile size."""
    vmem_limit, budget = _tpu_budgets()
    f32 = 4
    # dense weights single-buffered (pl.Buffered(1)) + small param vectors
    w_bytes = 2 * c * c4 * itemsize + (3 * c4 + c) * itemsize
    # double-buffered activation tiles (x_ln, x_res, out) per row
    act_row = 2 * 3 * c * itemsize
    # in-kernel f32 temporaries per row (h, GRN-scaled g, c-wide result)
    tmp_row = (2 * c4 + c) * f32

    fused_fixed = w_bytes + hw * c4 * itemsize + 2 * c4 * f32   # resident h
    fused_row = act_row + tmp_row
    two_fixed = w_bytes + 2 * c4 * f32
    two_row = act_row + 2 * 2 * c4 * itemsize + tmp_row         # h tile 2x-buffered

    if hw_tile is not None:
        fused_ok = (not force_two_pass
                    and fused_fixed + hw_tile * fused_row <= budget)
        return ("fused" if fused_ok else "two_pass"), hw_tile, vmem_limit

    if not force_two_pass:
        t = _pick_hw_tile(hw, fused_row, fused_fixed, budget)
        if t is not None:
            return "fused", t, vmem_limit
    t = _pick_hw_tile(hw, two_row, two_fixed, budget)
    if t is None:
        t = 8   # weights dominate: needs the TODO weight N/K tiling
    return "two_pass", t, vmem_limit


def _const_spec(shape, grid_rank):
    """Constant-index parameter block: fetched once and single-buffered so it
    does not pay a second (wasted) pipeline buffer in VMEM."""
    zero = (0,) * len(shape)
    idx = {1: (lambda a: zero),
           2: (lambda a, b: zero),
           3: (lambda a, b, c: zero)}[grid_rank]
    return pl.BlockSpec(shape, idx, pipeline_mode=pl.Buffered(1))


# ----------------------------------------------------------------------------
# Shared math helpers (traced inside the kernels)
# ----------------------------------------------------------------------------
def _gelu_exact(x):
    # torch.nn.GELU() is the exact erf-based GELU.  erf via the Abramowitz &
    # Stegun 7.1.26 polynomial (|err| < 1.5e-7): VPU ops + one exp (EUP) only.
    a1, a2, a3, a4, a5 = (0.254829592, -0.284496736, 1.421413741,
                          -1.453152027, 1.061405429)
    p = 0.3275911
    z = x * 0.7071067811865476           # x / sqrt(2)
    az = jnp.abs(z)
    t = 1.0 / (1.0 + p * az)
    poly = ((((a5 * t + a4) * t + a3) * t + a2) * t + a1) * t
    erf_abs = 1.0 - poly * jnp.exp(-az * az)
    erf = jnp.where(z < 0.0, -erf_abs, erf_abs)
    return 0.5 * x * (1.0 + erf)


def _grn_coef(ss, gamma):
    # GRN folded-epilogue coefficient, computed once per batch element:
    # gamma*(h*stand) + beta + h == h*(gamma*stand + 1) + beta.
    agg = jnp.sqrt(ss)                                    # ||h||_2 over HW
    stand = agg / (jnp.mean(agg, axis=-1, keepdims=True) + _EPS_GRN)
    return gamma.astype(jnp.float32) * stand + 1.0


# ----------------------------------------------------------------------------
# K1: depthwise 3x3 conv + channel LayerNorm (no affine, eps=1e-6)
# ----------------------------------------------------------------------------
def _dwconv_ln_kernel(xp_ref, w_ref, b_ref, o_ref):
    # xp_ref: (H+2, W+2, C) zero-padded image; w_ref: (3, 3, C); b_ref: (1,1,C)
    H, W, C = o_ref.shape
    xp = xp_ref[...].astype(jnp.float32)          # f32 accumulation (VPU work)
    w = w_ref[...].astype(jnp.float32)
    acc = jnp.zeros((H, W, C), jnp.float32)
    # Only 3 sublane(W)-offset slices total; the inner taps shift the major H
    # axis only (alignment-friendly).
    for kw in range(3):
        xw = xp[:, kw:kw + W, :]                  # (H+2, W, C)
        for kh in range(3):
            acc = acc + xw[kh:kh + H, :, :] * w[kh:kh + 1, kw:kw + 1, :]
    acc = acc + b_ref[...].astype(jnp.float32)
    # SDCascadeLayerNorm: LN over channels, biased variance, eps=1e-6, no affine.
    mu = jnp.mean(acc, axis=-1, keepdims=True)
    d = acc - mu
    var = jnp.mean(d * d, axis=-1, keepdims=True)
    o_ref[...] = (d * jax.lax.rsqrt(var + _EPS_LN)).astype(o_ref.dtype)


# ----------------------------------------------------------------------------
# Fused K2+K3: MLP-in + GELU + GRN reduce (phase 0), GRN apply + MLP-out +
# residual (phase 1), with the 4C intermediate resident in VMEM.
# ----------------------------------------------------------------------------
def _fused_mlp_grn_kernel(xln_ref, w1_ref, b1_ref, g_ref, bt_ref, w2_ref,
                          b2_ref, xres_ref, o_ref, h_vmem, ss_vmem, coef_vmem):
    p = pl.program_id(1)
    i = pl.program_id(2)
    hw_t = xln_ref.shape[0]
    start = i * hw_t
    if hw_t % 8 == 0:
        start = pl.multiple_of(start, 8)

    @pl.when(p == 0)
    def _reduce():
        @pl.when(i == 0)
        def _():
            ss_vmem[...] = jnp.zeros_like(ss_vmem)

        # Native-dtype MXU operands, f32 accumulation.
        h = jnp.dot(xln_ref[...], w1_ref[...],
                    preferred_element_type=jnp.float32)
        h = _gelu_exact(h + b1_ref[...].astype(jnp.float32))
        h_vmem[pl.ds(start, hw_t), :] = h.astype(h_vmem.dtype)
        # GRN reduce: per-(batch, channel) sum of squares over HW, in f32.
        ss_vmem[...] += jnp.sum(h * h, axis=0, keepdims=True)

        @pl.when(i == pl.num_programs(2) - 1)
        def _():
            # Hoisted once-per-batch GRN epilogue coefficient.
            coef_vmem[...] = _grn_coef(ss_vmem[...], g_ref[...])

    @pl.when(p == 1)
    def _apply():
        h = h_vmem[pl.ds(start, hw_t), :].astype(jnp.float32)
        g = h * coef_vmem[...] + bt_ref[...].astype(jnp.float32)
        # nn.Dropout is the identity at inference.
        y = jnp.dot(g.astype(w2_ref.dtype), w2_ref[...],
                    preferred_element_type=jnp.float32)
        y = y + b2_ref[...].astype(jnp.float32) + xres_ref[...].astype(jnp.float32)
        o_ref[...] = y.astype(o_ref.dtype)


# ----------------------------------------------------------------------------
# Two-pass fallback (when HW*4C does not fit the VMEM budget)
# ----------------------------------------------------------------------------
def _mlp_in_grn_reduce_kernel(xln_ref, w1_ref, b1_ref, g_ref,
                              h_ref, coef_ref, ss_ref):
    i = pl.program_id(1)

    @pl.when(i == 0)
    def _():
        ss_ref[...] = jnp.zeros_like(ss_ref)

    h = jnp.dot(xln_ref[...], w1_ref[...], preferred_element_type=jnp.float32)
    h = _gelu_exact(h + b1_ref[...].astype(jnp.float32))
    h_ref[...] = h.astype(h_ref.dtype)            # model dtype, never f32, in HBM
    ss_ref[...] += jnp.sum(h * h, axis=0, keepdims=True)

    @pl.when(i == pl.num_programs(1) - 1)
    def _():
        coef_ref[...] = _grn_coef(ss_ref[...], g_ref[...])


def _grn_apply_mlp_out_kernel(h_ref, coef_ref, bt_ref, w2_ref, b2_ref,
                              xres_ref, o_ref):
    h = h_ref[...].astype(jnp.float32)
    g = h * coef_ref[...] + bt_ref[...].astype(jnp.float32)
    y = jnp.dot(g.astype(w2_ref.dtype), w2_ref[...],
                preferred_element_type=jnp.float32)
    y = y + b2_ref[...].astype(jnp.float32) + xres_ref[...].astype(jnp.float32)
    o_ref[...] = y.astype(o_ref.dtype)


# ----------------------------------------------------------------------------
# Wrapper
# ----------------------------------------------------------------------------
@functools.partial(jax.jit, static_argnames=("hw_tile", "force_two_pass"))
def sd_cascade_res_block(x, dw_w, dw_b, w1, b1, gamma, beta, w2, b2,
                         hw_tile=None, force_two_pass=False):
    """SDCascadeResBlock forward (x_skip=None / c_skip=0 path).

    x: (B, C, H, W) NCHW; parameters in PyTorch layouts:
      dw_w (C,1,3,3), dw_b (C,), w1 (4C, C), b1 (4C,),
      gamma/beta (1,1,1,4C), w2 (C, 4C), b2 (C,).
    """
    B, C, H, W = x.shape
    C4 = w1.shape[0]
    assert w1.shape[1] == C
    HW = H * W
    dt = x.dtype
    isz = jnp.dtype(dt).itemsize
    mode, hw_t, vmem_limit = _plan(HW, C, C4, isz, hw_tile, force_two_pass)
    assert HW % hw_t == 0, "hw_tile must divide H*W"
    n_hw = HW // hw_t

    x_nhwc = jnp.transpose(x, (0, 2, 3, 1))                    # (B, H, W, C)
    xp = jnp.pad(x_nhwc, ((0, 0), (1, 1), (1, 1), (0, 0)))     # zero pad for 3x3
    w_dw = jnp.transpose(dw_w[:, 0], (1, 2, 0))                # (3, 3, C)
    b_dw = dw_b.reshape(1, 1, C)

    # --- K1: depthwise conv + LayerNorm ------------------------------------
    x_ln = pl.pallas_call(
        _dwconv_ln_kernel,
        out_shape=jax.ShapeDtypeStruct((B, H, W, C), dt),
        grid_spec=pltpu.PrefetchScalarGridSpec(
            num_scalar_prefetch=0,
            grid=(B,),
            in_specs=[
                pl.BlockSpec((None, H + 2, W + 2, C), lambda b: (b, 0, 0, 0)),
                _const_spec((3, 3, C), 1),
                _const_spec((1, 1, C), 1),
            ],
            out_specs=pl.BlockSpec((None, H, W, C), lambda b: (b, 0, 0, 0)),
        ),
        compiler_params=pltpu.CompilerParams(
            dimension_semantics=("parallel",),
            vmem_limit_bytes=vmem_limit),
    )(xp, w_dw, b_dw)

    x_ln2 = x_ln.reshape(B, HW, C)
    xres2 = x_nhwc.reshape(B, HW, C)
    w1_t = jnp.transpose(w1)            # (C, 4C)
    b1_2 = b1.reshape(1, C4)
    g2 = gamma.reshape(1, C4)
    bt2 = beta.reshape(1, C4)
    w2_t = jnp.transpose(w2)            # (4C, C)
    b2_2 = b2.reshape(1, C)

    if mode == "fused":
        # --- fused K2+K3: h never leaves VMEM --------------------------------
        out2 = pl.pallas_call(
            _fused_mlp_grn_kernel,
            out_shape=jax.ShapeDtypeStruct((B, HW, C), dt),
            grid_spec=pltpu.PrefetchScalarGridSpec(
                num_scalar_prefetch=0,
                grid=(B, 2, n_hw),          # (batch, phase, HW tile)
                in_specs=[
                    # x_ln walks tiles in phase 0, pinned at tile 0 in phase 1
                    pl.BlockSpec((None, hw_t, C),
                                 lambda b, p, i: (b, (1 - p) * i, 0)),
                    _const_spec((C, C4), 3),
                    _const_spec((1, C4), 3),
                    _const_spec((1, C4), 3),
                    _const_spec((1, C4), 3),
                    _const_spec((C4, C), 3),
                    _const_spec((1, C), 3),
                    # residual only needed in phase 1
                    pl.BlockSpec((None, hw_t, C),
                                 lambda b, p, i: (b, p * i, 0)),
                ],
                out_specs=pl.BlockSpec((None, hw_t, C),
                                       lambda b, p, i: (b, p * i, 0)),
                scratch_shapes=[
                    pltpu.VMEM((HW, C4), dt),            # resident h
                    pltpu.VMEM((1, C4), jnp.float32),    # sum-of-squares
                    pltpu.VMEM((1, C4), jnp.float32),    # folded GRN coef
                ],
            ),
            compiler_params=pltpu.CompilerParams(
                dimension_semantics=("parallel", "arbitrary", "arbitrary"),
                vmem_limit_bytes=vmem_limit),
        )(x_ln2, w1_t, b1_2, g2, bt2, w2_t, b2_2, xres2)
    else:
        # --- fallback: reduce pass (h stored in model dtype) + apply pass ----
        h, coef = pl.pallas_call(
            _mlp_in_grn_reduce_kernel,
            out_shape=(jax.ShapeDtypeStruct((B, HW, C4), dt),
                       jax.ShapeDtypeStruct((B, 1, C4), jnp.float32)),
            grid_spec=pltpu.PrefetchScalarGridSpec(
                num_scalar_prefetch=0,
                grid=(B, n_hw),
                in_specs=[
                    pl.BlockSpec((None, hw_t, C), lambda b, i: (b, i, 0)),
                    _const_spec((C, C4), 2),
                    _const_spec((1, C4), 2),
                    _const_spec((1, C4), 2),
                ],
                out_specs=[
                    pl.BlockSpec((None, hw_t, C4), lambda b, i: (b, i, 0)),
                    pl.BlockSpec((None, 1, C4), lambda b, i: (b, 0, 0)),
                ],
                scratch_shapes=[pltpu.VMEM((1, C4), jnp.float32)],
            ),
            compiler_params=pltpu.CompilerParams(
                dimension_semantics=("parallel", "arbitrary"),
                vmem_limit_bytes=vmem_limit),
        )(x_ln2, w1_t, b1_2, g2)

        out2 = pl.pallas_call(
            _grn_apply_mlp_out_kernel,
            out_shape=jax.ShapeDtypeStruct((B, HW, C), dt),
            grid_spec=pltpu.PrefetchScalarGridSpec(
                num_scalar_prefetch=0,
                grid=(B, n_hw),
                in_specs=[
                    pl.BlockSpec((None, hw_t, C4), lambda b, i: (b, i, 0)),
                    pl.BlockSpec((None, 1, C4), lambda b, i: (b, 0, 0)),
                    _const_spec((1, C4), 2),
                    _const_spec((C4, C), 2),
                    _const_spec((1, C), 2),
                    pl.BlockSpec((None, hw_t, C), lambda b, i: (b, i, 0)),
                ],
                out_specs=pl.BlockSpec((None, hw_t, C), lambda b, i: (b, i, 0)),
            ),
            compiler_params=pltpu.CompilerParams(
                dimension_semantics=("parallel", "parallel"),
                vmem_limit_bytes=vmem_limit),
        )(h, coef, bt2, w2_t, b2_2, xres2)

    return jnp.transpose(out2.reshape(B, H, W, C), (0, 3, 1, 2))


# ----------------------------------------------------------------------------
# Pure-JAX reference mirroring the PyTorch forward exactly
# ----------------------------------------------------------------------------
def _reference(x, dw_w, dw_b, w1, b1, gamma, beta, w2, b2):
    B, C, H, W = x.shape
    hp = jax.lax.Precision.HIGHEST
    y = jax.lax.conv_general_dilated(
        x, dw_w, window_strides=(1, 1), padding=((1, 1), (1, 1)),
        dimension_numbers=("NCHW", "OIHW", "NCHW"),
        feature_group_count=C, precision=hp)
    y = y + dw_b[None, :, None, None]
    y = jnp.transpose(y, (0, 2, 3, 1))
    mu = jnp.mean(y, axis=-1, keepdims=True)
    var = jnp.mean((y - mu) ** 2, axis=-1, keepdims=True)
    z = (y - mu) * jax.lax.rsqrt(var + _EPS_LN)
    h = jnp.dot(z, w1.T, precision=hp) + b1
    h = jax.nn.gelu(h, approximate=False)                       # exact erf GELU
    agg = jnp.sqrt(jnp.sum(h * h, axis=(1, 2), keepdims=True))  # GRN
    stand = agg / (jnp.mean(agg, axis=-1, keepdims=True) + _EPS_GRN)
    h = gamma * (h * stand) + beta + h
    o = jnp.dot(h, w2.T, precision=hp) + b2
    return jnp.transpose(o, (0, 3, 1, 2)) + x


if __name__ == "__main__":
    key = jax.random.PRNGKey(0)
    ks = jax.random.split(key, 9)
    B, C, H, W = 2, 16, 16, 16            # c=16 -> GRN dim 4c=64, HW=256
    C4 = 4 * C

    x = jax.random.normal(ks[0], (B, C, H, W), dtype=jnp.float32)
    # Parameters in PyTorch layouts.  Module init zeros gamma/beta; use small
    # nonzero values so every term of the forward is actually exercised.
    dw_w = 0.1 * jax.random.normal(ks[1], (C, 1, 3, 3), dtype=jnp.float32)
    dw_b = 0.1 * jax.random.normal(ks[2], (C,), dtype=jnp.float32)
    w1 = 0.1 * jax.random.normal(ks[3], (C4, C), dtype=jnp.float32)
    b1 = 0.1 * jax.random.normal(ks[4], (C4,), dtype=jnp.float32)
    gamma = 0.1 * jax.random.normal(ks[5], (1, 1, 1, C4), dtype=jnp.float32)
    beta = 0.1 * jax.random.normal(ks[6], (1, 1, 1, C4), dtype=jnp.float32)
    w2 = 0.1 * jax.random.normal(ks[7], (C, C4), dtype=jnp.float32)
    b2 = 0.1 * jax.random.normal(ks[8], (C,), dtype=jnp.float32)

    ref = _reference(x, dw_w, dw_b, w1, b1, gamma, beta, w2, b2)

    # (a) auto-planned fused path (single full-HW tile at this toy size)
    out_auto = jax.block_until_ready(
        sd_cascade_res_block(x, dw_w, dw_b, w1, b1, gamma, beta, w2, b2))
    # (b) fused path with multiple HW tiles -> exercises the two-phase
    #     reduce/apply over the VMEM-resident h and the ss accumulator
    out_fused = jax.block_until_ready(
        sd_cascade_res_block(x, dw_w, dw_b, w1, b1, gamma, beta, w2, b2,
                             hw_tile=128))
    # (c) two-pass fallback path (forced), hw_tile=64
    out_two = jax.block_until_ready(
        sd_cascade_res_block(x, dw_w, dw_b, w1, b1, gamma, beta, w2, b2,
                             hw_tile=64, force_two_pass=True))

    for name, out in (("auto", out_auto), ("fused", out_fused),
                      ("two_pass", out_two)):
        assert out.shape == (B, C, H, W)
        err = float(jnp.max(jnp.abs(out - ref)))
        assert jnp.allclose(out, ref, atol=5e-5, rtol=5e-5), (
            f"{name} path mismatch vs reference, max abs err = {err}")
    print("KERNEL_OK")
</pallas_src>

<mosaic_0001>
module attributes {stable_mosaic.version = 11 : i64} {
  func.func @_dwconv_ln_kernel(%arg0: i32, %arg1: memref<1x18x18x16xf32, #tpu.memory_space<vmem>>, %arg2: memref<3x3x16xf32, #tpu.memory_space<vmem>>, %arg3: memref<1x1x16xf32, #tpu.memory_space<vmem>>, %arg4: memref<1x16x16x16xf32, #tpu.memory_space<vmem>>) attributes {dimension_semantics = [#tpu.dimension_semantics<parallel>], iteration_bounds = array<i64: 2>, scalar_prefetch = 0 : i64, scratch_operands = 0 : i64, tpu.core_type = #tpu.core_type<tc>, window_params = [{transform_indices = @transform_0, window_bounds = array<i64: 1, 18, 18, 16>}, {pipeline_mode = #tpu.pipeline_mode<synchronous>, transform_indices = @transform_1, window_bounds = array<i64: 3, 3, 16>}, {pipeline_mode = #tpu.pipeline_mode<synchronous>, transform_indices = @transform_2, window_bounds = array<i64: 1, 1, 16>}, {transform_indices = @transform_3, window_bounds = array<i64: 1, 16, 16, 16>}]} {
    %c0 = arith.constant 0 : index
    %c0_0 = arith.constant 0 : index
    %c0_1 = arith.constant 0 : index
    %c0_2 = arith.constant 0 : index
    %0 = vector.load %arg1[%c0, %c0_0, %c0_1, %c0_2] : memref<1x18x18x16xf32, #tpu.memory_space<vmem>>, vector<1x18x18x16xf32>
    %1 = vector.shape_cast %0 : vector<1x18x18x16xf32> to vector<18x18x16xf32>
    %c0_3 = arith.constant 0 : index
    %c0_4 = arith.constant 0 : index
    %c0_5 = arith.constant 0 : index
    %2 = vector.load %arg2[%c0_3, %c0_4, %c0_5] : memref<3x3x16xf32, #tpu.memory_space<vmem>>, vector<3x3x16xf32>
    %cst = arith.constant 0.000000e+00 : f32
    %3 = vector.broadcast %cst : f32 to vector<16x16x16xf32>
    %4 = vector.extract_strided_slice %1 {offsets = [0, 0, 0], sizes = [18, 16, 16], strides = [1, 1, 1]} : vector<18x18x16xf32> to vector<18x16x16xf32>
    %5 = vector.extract_strided_slice %4 {offsets = [0, 0, 0], sizes = [16, 16, 16], strides = [1, 1, 1]} : vector<18x16x16xf32> to vector<16x16x16xf32>
    %6 = vector.extract_strided_slice %2 {offsets = [0, 0, 0], sizes = [1, 1, 16], strides = [1, 1, 1]} : vector<3x3x16xf32> to vector<1x1x16xf32>
    %7 = vector.broadcast %6 : vector<1x1x16xf32> to vector<16x16x16xf32>
    %8 = arith.mulf %5, %7 : vector<16x16x16xf32>
    %9 = arith.addf %3, %8 : vector<16x16x16xf32>
    %10 = vector.extract_strided_slice %4 {offsets = [1, 0, 0], sizes = [16, 16, 16], strides = [1, 1, 1]} : vector<18x16x16xf32> to vector<16x16x16xf32>
    %11 = vector.extract_strided_slice %2 {offsets = [1, 0, 0], sizes = [1, 1, 16], strides = [1, 1, 1]} : vector<3x3x16xf32> to vector<1x1x16xf32>
    %12 = vector.broadcast %11 : vector<1x1x16xf32> to vector<16x16x16xf32>
    %13 = arith.mulf %10, %12 : vector<16x16x16xf32>
    %14 = arith.addf %9, %13 : vector<16x16x16xf32>
    %15 = vector.extract_strided_slice %4 {offsets = [2, 0, 0], sizes = [16, 16, 16], strides = [1, 1, 1]} : vector<18x16x16xf32> to vector<16x16x16xf32>
    %16 = vector.extract_strided_slice %2 {offsets = [2, 0, 0], sizes = [1, 1, 16], strides = [1, 1, 1]} : vector<3x3x16xf32> to vector<1x1x16xf32>
    %17 = vector.broadcast %16 : vector<1x1x16xf32> to vector<16x16x16xf32>
    %18 = arith.mulf %15, %17 : vector<16x16x16xf32>
    %19 = arith.addf %14, %18 : vector<16x16x16xf32>
    %20 = vector.extract_strided_slice %1 {offsets = [0, 1, 0], sizes = [18, 16, 16], strides = [1, 1, 1]} : vector<18x18x16xf32> to vector<18x16x16xf32>
    %21 = vector.extract_strided_slice %20 {offsets = [0, 0, 0], sizes = [16, 16, 16], strides = [1, 1, 1]} : vector<18x16x16xf32> to vector<16x16x16xf32>
    %22 = vector.extract_strided_slice %2 {offsets = [0, 1, 0], sizes = [1, 1, 16], strides = [1, 1, 1]} : vector<3x3x16xf32> to vector<1x1x16xf32>
    %23 = vector.broadcast %22 : vector<1x1x16xf32> to vector<16x16x16xf32>
    %24 = arith.mulf %21, %23 : vector<16x16x16xf32>
    %25 = arith.addf %19, %24 : vector<16x16x16xf32>
    %26 = vector.extract_strided_slice %20 {offsets = [1, 0, 0], sizes = [16, 16, 16], strides = [1, 1, 1]} : vector<18x16x16xf32> to vector<16x16x16xf32>
    %27 = vector.extract_strided_slice %2 {offsets = [1, 1, 0], sizes = [1, 1, 16], strides = [1, 1, 1]} : vector<3x3x16xf32> to vector<1x1x16xf32>
    %28 = vector.broadcast %27 : vector<1x1x16xf32> to vector<16x16x16xf32>
    %29 = arith.mulf %26, %28 : vector<16x16x16xf32>
    %30 = arith.addf %25, %29 : vector<16x16x16xf32>
    %31 = vector.extract_strided_slice %20 {offsets = [2, 0, 0], sizes = [16, 16, 16], strides = [1, 1, 1]} : vector<18x16x16xf32> to vector<16x16x16xf32>
    %32 = vector.extract_strided_slice %2 {offsets = [2, 1, 0], sizes = [1, 1, 16], strides = [1, 1, 1]} : vector<3x3x16xf32> to vector<1x1x16xf32>
    %33 = vector.broadcast %32 : vector<1x1x16xf32> to vector<16x16x16xf32>
    %34 = arith.mulf %31, %33 : vector<16x16x16xf32>
    %35 = arith.addf %30, %34 : vector<16x16x16xf32>
    %36 = vector.extract_strided_slice %1 {offsets = [0, 2, 0], sizes = [18, 16, 16], strides = [1, 1, 1]} : vector<18x18x16xf32> to vector<18x16x16xf32>
    %37 = vector.extract_strided_slice %36 {offsets = [0, 0, 0], sizes = [16, 16, 16], strides = [1, 1, 1]} : vector<18x16x16xf32> to vector<16x16x16xf32>
    %38 = vector.extract_strided_slice %2 {offsets = [0, 2, 0], sizes = [1, 1, 16], strides = [1, 1, 1]} : vector<3x3x16xf32> to vector<1x1x16xf32>
    %39 = vector.broadcast %38 : vector<1x1x16xf32> to vector<16x16x16xf32>
    %40 = arith.mulf %37, %39 : vector<16x16x16xf32>
    %41 = arith.addf %35, %40 : vector<16x16x16xf32>
    %42 = vector.extract_strided_slice %36 {offsets = [1, 0, 0], sizes = [16, 16, 16], strides = [1, 1, 1]} : vector<18x16x16xf32> to vector<16x16x16xf32>
    %43 = vector.extract_strided_slice %2 {offsets = [1, 2, 0], sizes = [1, 1, 16], strides = [1, 1, 1]} : vector<3x3x16xf32> to vector<1x1x16xf32>
    %44 = vector.broadcast %43 : vector<1x1x16xf32> to vector<16x16x16xf32>
    %45 = arith.mulf %42, %44 : vector<16x16x16xf32>
    %46 = arith.addf %41, %45 : vector<16x16x16xf32>
    %47 = vector.extract_strided_slice %36 {offsets = [2, 0, 0], sizes = [16, 16, 16], strides = [1, 1, 1]} : vector<18x16x16xf32> to vector<16x16x16xf32>
    %48 = vector.extract_strided_slice %2 {offsets = [2, 2, 0], sizes = [1, 1, 16], strides = [1, 1, 1]} : vector<3x3x16xf32> to vector<1x1x16xf32>
    %49 = vector.broadcast %48 : vector<1x1x16xf32> to vector<16x16x16xf32>
    %50 = arith.mulf %47, %49 : vector<16x16x16xf32>
    %51 = arith.addf %46, %50 : vector<16x16x16xf32>
    %c0_6 = arith.constant 0 : index
    %c0_7 = arith.constant 0 : index
    %c0_8 = arith.constant 0 : index
    %52 = vector.load %arg3[%c0_6, %c0_7, %c0_8] : memref<1x1x16xf32, #tpu.memory_space<vmem>>, vector<1x1x16xf32>
    %53 = vector.broadcast %52 : vector<1x1x16xf32> to vector<16x16x16xf32>
    %54 = arith.addf %51, %53 : vector<16x16x16xf32>
    %cst_9 = arith.constant dense<0.000000e+00> : vector<16x16xf32>
    %55 = vector.multi_reduction <add>, %54, %cst_9 [2] : vector<16x16x16xf32> to vector<16x16xf32>
    %56 = vector.shape_cast %55 : vector<16x16xf32> to vector<16x16x1xf32>
    %cst_10 = arith.constant 1.600000e+01 : f32
    %57 = vector.broadcast %cst_10 : f32 to vector<16x16x1xf32>
    %58 = arith.divf %56, %57 : vector<16x16x1xf32>
    %59 = vector.broadcast %58 : vector<16x16x1xf32> to vector<16x16x16xf32>
    %60 = arith.subf %54, %59 : vector<16x16x16xf32>
    %61 = arith.mulf %60, %60 : vector<16x16x16xf32>
    %cst_11 = arith.constant dense<0.000000e+00> : vector<16x16xf32>
    %62 = vector.multi_reduction <add>, %61, %cst_11 [2] : vector<16x16x16xf32> to vector<16x16xf32>
    %63 = vector.shape_cast %62 : vector<16x16xf32> to vector<16x16x1xf32>
    %cst_12 = arith.constant 1.600000e+01 : f32
    %64 = vector.broadcast %cst_12 : f32 to vector<16x16x1xf32>
    %65 = arith.divf %63, %64 : vector<16x16x1xf32>
    %cst_13 = arith.constant 9.99999997E-7 : f32
    %66 = vector.broadcast %cst_13 : f32 to vector<16x16x1xf32>
    %67 = arith.addf %65, %66 : vector<16x16x1xf32>
    %68 = math.rsqrt %67 : vector<16x16x1xf32>
    %69 = vector.broadcast %68 : vector<16x16x1xf32> to vector<16x16x16xf32>
    %70 = arith.mulf %60, %69 : vector<16x16x16xf32>
    %c0_14 = arith.constant 0 : index
    %c0_15 = arith.constant 0 : index
    %c0_16 = arith.constant 0 : index
    %c0_17 = arith.constant 0 : index
    %71 = vector.load %arg4[%c0_14, %c0_15, %c0_16, %c0_17] : memref<1x16x16x16xf32, #tpu.memory_space<vmem>>, vector<1x16x16x16xf32>
    %72 = vector.shape_cast %71 : vector<1x16x16x16xf32> to vector<16x16x16xf32>
    %73 = vector.shape_cast %70 : vector<16x16x16xf32> to vector<1x16x16x16xf32>
    tpu.vector_store %arg4[%c0_14, %c0_15, %c0_16, %c0_17], %73 {strides = array<i32>} : memref<1x16x16x16xf32, #tpu.memory_space<vmem>>, vector<1x16x16x16xf32>,
    return
  }
  func.func @transform_0(%arg0: i32) -> (i32, i32, i32, i32) {
    %c0_i32 = arith.constant 0 : i32
    %c0_i32_0 = arith.constant 0 : i32
    %c0_i32_1 = arith.constant 0 : i32
    %c0_i32_2 = arith.constant 0 : i32
    return %arg0, %c0_i32, %c0_i32_0, %c0_i32_1 : i32, i32, i32, i32
  }
  func.func @transform_1(%arg0: i32) -> (i32, i32, i32) {
    %c0_i32 = arith.constant 0 : i32
    %c0_i32_0 = arith.constant 0 : i32
    %c0_i32_1 = arith.constant 0 : i32
    %c0_i32_2 = arith.constant 0 : i32
    return %c0_i32, %c0_i32_0, %c0_i32_1 : i32, i32, i32
  }
  func.func @transform_2(%arg0: i32) -> (i32, i32, i32) {
    %c0_i32 = arith.constant 0 : i32
    %c0_i32_0 = arith.constant 0 : i32
    %c0_i32_1 = arith.constant 0 : i32
    %c0_i32_2 = arith.constant 0 : i32
    return %c0_i32, %c0_i32_0, %c0_i32_1 : i32, i32, i32
  }
  func.func @transform_3(%arg0: i32) -> (i32, i32, i32, i32) {
    %c0_i32 = arith.constant 0 : i32
    %c0_i32_0 = arith.constant 0 : i32
    %c0_i32_1 = arith.constant 0 : i32
    %c0_i32_2 = arith.constant 0 : i32
    return %arg0, %c0_i32, %c0_i32_0, %c0_i32_1 : i32, i32, i32, i32
  }
}

module attributes {stable_mosaic.version = 11 : i64} {
  func.func @_fused_mlp_grn_kernel(%arg0: i32, %arg1: i32, %arg2: i32, %arg3: memref<1x256x16xf32, #tpu.memory_space<vmem>>, %arg4: memref<16x64xf32, #tpu.memory_space<vmem>>, %arg5: memref<1x64xf32, #tpu.memory_space<vmem>>, %arg6: memref<1x64xf32, #tpu.memory_space<vmem>>, %arg7: memref<1x64xf32, #tpu.memory_space<vmem>>, %arg8: memref<64x16xf32, #tpu.memory_space<vmem>>, %arg9: memref<1x16xf32, #tpu.memory_space<vmem>>, %arg10: memref<1x256x16xf32, #tpu.memory_space<vmem>>, %arg11: memref<1x256x16xf32, #tpu.memory_space<vmem>>, %arg12: memref<256x64xf32, #tpu.memory_space<vmem>>, %arg13: memref<1x64xf32, #tpu.memory_space<vmem>>, %arg14: memref<1x64xf32, #tpu.memory_space<vmem>>) attributes {dimension_semantics = [#tpu.dimension_semantics<parallel>, #tpu.dimension_semantics<arbitrary>, #tpu.dimension_semantics<arbitrary>], iteration_bounds = array<i64: 2, 2, 1>, scalar_prefetch = 0 : i64, scratch_operands = 3 : i64, tpu.core_type = #tpu.core_type<tc>, window_params = [{transform_indices = @transform_0, window_bounds = array<i64: 1, 256, 16>}, {pipeline_mode = #tpu.pipeline_mode<synchronous>, transform_indices = @transform_1, window_bounds = array<i64: 16, 64>}, {pipeline_mode = #tpu.pipeline_mode<synchronous>, transform_indices = @transform_2, window_bounds = array<i64: 1, 64>}, {pipeline_mode = #tpu.pipeline_mode<synchronous>, transform_indices = @transform_3, window_bounds = array<i64: 1, 64>}, {pipeline_mode = #tpu.pipeline_mode<synchronous>, transform_indices = @transform_4, window_bounds = array<i64: 1, 64>}, {pipeline_mode = #tpu.pipeline_mode<synchronous>, transform_indices = @transform_5, window_bounds = array<i64: 64, 16>}, {pipeline_mode = #tpu.pipeline_mode<synchronous>, transform_indices = @transform_6, window_bounds = array<i64: 1, 16>}, {transform_indices = @transform_7, window_bounds = array<i64: 1, 256, 16>}, {transform_indices = @transform_8, window_bounds = array<i64: 1, 256, 16>}]} {
    %c256_i32 = arith.constant 256 : i32
    %0 = arith.muli %arg2, %c256_i32 : i32
    %1 = tpu.assume_multiple %0, 8 : i32
    %c0_i32 = arith.constant 0 : i32
    %2 = arith.cmpi eq, %arg1, %c0_i32 : i32
    %3 = arith.extui %2 : i1 to i32
    %c0_i32_0 = arith.constant 0 : i32
    %4 = arith.cmpi ne, %3, %c0_i32_0 : i32
    scf.if %4 {
      %c0_i32_2 = arith.constant 0 : i32
      %8 = arith.cmpi eq, %arg2, %c0_i32_2 : i32
      %9 = arith.extui %8 : i1 to i32
      %c0_i32_3 = arith.constant 0 : i32
      %10 = arith.cmpi ne, %9, %c0_i32_3 : i32
      scf.if %10 {
        %cst_33 = arith.constant 0.000000e+00 : f32
        %69 = vector.broadcast %cst_33 : f32 to vector<1x64xf32>
        %c0_34 = arith.constant 0 : index
        %c0_35 = arith.constant 0 : index
        %70 = vector.load %arg13[%c0_34, %c0_35] : memref<1x64xf32, #tpu.memory_space<vmem>>, vector<1x64xf32>
        tpu.vector_store %arg13[%c0_34, %c0_35], %69 {strides = array<i32>} : memref<1x64xf32, #tpu.memory_space<vmem>>, vector<1x64xf32>,
      } else {
      }
      %c0 = arith.constant 0 : index
      %c0_4 = arith.constant 0 : index
      %c0_5 = arith.constant 0 : index
      %11 = vector.load %arg3[%c0, %c0_4, %c0_5] : memref<1x256x16xf32, #tpu.memory_space<vmem>>, vector<1x256x16xf32>
      %12 = vector.shape_cast %11 : vector<1x256x16xf32> to vector<256x16xf32>
      %c0_6 = arith.constant 0 : index
      %c0_7 = arith.constant 0 : index
      %13 = vector.load %arg4[%c0_6, %c0_7] : memref<16x64xf32, #tpu.memory_space<vmem>>, vector<16x64xf32>
      %cst = arith.constant dense<0.000000e+00> : vector<256x64xf32>
      %14 = tpu.matmul %12, %13, %cst {dimension_numbers = #tpu.dot_dimension_numbers<[1], [0], [0], [1], [0, 0, 1, 1], [], []>} : vector<256x16xf32>, vector<16x64xf32>, vector<256x64xf32> -> vector<256x64xf32>
      %c0_8 = arith.constant 0 : index
      %c0_9 = arith.constant 0 : index
      %15 = vector.load %arg5[%c0_8, %c0_9] : memref<1x64xf32, #tpu.memory_space<vmem>>, vector<1x64xf32>
      %16 = vector.broadcast %15 : vector<1x64xf32> to vector<256x64xf32>
      %17 = arith.addf %14, %16 : vector<256x64xf32>
      %cst_10 = arith.constant 0.707106769 : f32
      %18 = vector.broadcast %cst_10 : f32 to vector<256x64xf32>
      %19 = arith.mulf %17, %18 : vector<256x64xf32>
      %20 = math.absf %19 : vector<256x64xf32>
      %cst_11 = arith.constant 0.327591091 : f32
      %21 = vector.broadcast %cst_11 : f32 to vector<256x64xf32>
      %22 = arith.mulf %21, %20 : vector<256x64xf32>
      %cst_12 = arith.constant 1.000000e+00 : f32
      %23 = vector.broadcast %cst_12 : f32 to vector<256x64xf32>
      %24 = arith.addf %23, %22 : vector<256x64xf32>
      %cst_13 = arith.constant 1.000000e+00 : f32
      %25 = vector.broadcast %cst_13 : f32 to vector<256x64xf32>
      %26 = arith.divf %25, %24 : vector<256x64xf32>
      %cst_14 = arith.constant 1.06140542 : f32
      %27 = vector.broadcast %cst_14 : f32 to vector<256x64xf32>
      %28 = arith.mulf %27, %26 : vector<256x64xf32>
      %cst_15 = arith.constant -1.45315206 : f32
      %29 = vector.broadcast %cst_15 : f32 to vector<256x64xf32>
      %30 = arith.addf %28, %29 : vector<256x64xf32>
      %31 = arith.mulf %30, %26 : vector<256x64xf32>
      %cst_16 = arith.constant 1.42141378 : f32
      %32 = vector.broadcast %cst_16 : f32 to vector<256x64xf32>
      %33 = arith.addf %31, %32 : vector<256x64xf32>
      %34 = arith.mulf %33, %26 : vector<256x64xf32>
      %cst_17 = arith.constant -0.284496725 : f32
      %35 = vector.broadcast %cst_17 : f32 to vector<256x64xf32>
      %36 = arith.addf %34, %35 : vector<256x64xf32>
      %37 = arith.mulf %36, %26 : vector<256x64xf32>
      %cst_18 = arith.constant 0.254829586 : f32
      %38 = vector.broadcast %cst_18 : f32 to vector<256x64xf32>
      %39 = arith.addf %37, %38 : vector<256x64xf32>
      %40 = arith.mulf %39, %26 : vector<256x64xf32>
      %cst_19 = arith.constant 0.000000e+00 : f32
      %41 = vector.broadcast %cst_19 : f32 to vector<256x64xf32>
      %42 = arith.subf %41, %20 : vector<256x64xf32>
      %43 = arith.mulf %42, %20 : vector<256x64xf32>
      %44 = math.exp %43 : vector<256x64xf32>
      %45 = arith.mulf %40, %44 : vector<256x64xf32>
      %cst_20 = arith.constant 1.000000e+00 : f32
      %46 = vector.broadcast %cst_20 : f32 to vector<256x64xf32>
      %47 = arith.subf %46, %45 : vector<256x64xf32>
      %cst_21 = arith.constant 0.000000e+00 : f32
      %48 = vector.broadcast %cst_21 : f32 to vector<256x64xf32>
      %49 = arith.cmpf olt, %19, %48 : vector<256x64xf32>
      %cst_22 = arith.constant 0.000000e+00 : f32
      %50 = vector.broadcast %cst_22 : f32 to vector<256x64xf32>
      %51 = arith.subf %50, %47 : vector<256x64xf32>
      %52 = arith.select %49, %51, %47 : vector<256x64xi1>, vector<256x64xf32>
      %cst_23 = arith.constant 5.000000e-01 : f32
      %53 = vector.broadcast %cst_23 : f32 to vector<256x64xf32>
      %54 = arith.mulf %53, %17 : vector<256x64xf32>
      %cst_24 = arith.constant 1.000000e+00 : f32
      %55 = vector.broadcast %cst_24 : f32 to vector<256x64xf32>
      %56 = arith.addf %55, %52 : vector<256x64xf32>
      %57 = arith.mulf %54, %56 : vector<256x64xf32>
      %58 = arith.index_cast %1 : i32 to index
      %c0_25 = arith.constant 0 : index
      %59 = vector.load %arg12[%58, %c0_25] : memref<256x64xf32, #tpu.memory_space<vmem>>, vector<256x64xf32>
      tpu.vector_store %arg12[%58, %c0_25], %57 {strides = array<i32>} : memref<256x64xf32, #tpu.memory_space<vmem>>, vector<256x64xf32>,
      %c0_26 = arith.constant 0 : index
      %c0_27 = arith.constant 0 : index
      %60 = vector.load %arg13[%c0_26, %c0_27] : memref<1x64xf32, #tpu.memory_space<vmem>>, vector<1x64xf32>
      %61 = arith.mulf %57, %57 : vector<256x64xf32>
      %cst_28 = arith.constant dense<0.000000e+00> : vector<64xf32>
      %62 = vector.multi_reduction <add>, %61, %cst_28 [0] : vector<256x64xf32> to vector<64xf32>
      %63 = vector.shape_cast %62 : vector<64xf32> to vector<1x64xf32>
      %64 = arith.addf %60, %63 : vector<1x64xf32>
      %c0_29 = arith.constant 0 : index
      %c0_30 = arith.constant 0 : index
      %65 = vector.load %arg13[%c0_29, %c0_30] : memref<1x64xf32, #tpu.memory_space<vmem>>, vector<1x64xf32>
      tpu.vector_store %arg13[%c0_29, %c0_30], %64 {strides = array<i32>} : memref<1x64xf32, #tpu.memory_space<vmem>>, vector<1x64xf32>,
      %c0_i32_31 = arith.constant 0 : i32
      %66 = arith.cmpi eq, %arg2, %c0_i32_31 : i32
      %67 = arith.extui %66 : i1 to i32
      %c0_i32_32 = arith.constant 0 : i32
      %68 = arith.cmpi ne, %67, %c0_i32_32 : i32
      scf.if %68 {
        %c0_33 = arith.constant 0 : index
        %c0_34 = arith.constant 0 : index
        %69 = vector.load %arg13[%c0_33, %c0_34] : memref<1x64xf32, #tpu.memory_space<vmem>>, vector<1x64xf32>
        %c0_35 = arith.constant 0 : index
        %c0_36 = arith.constant 0 : index
        %70 = vector.load %arg6[%c0_35, %c0_36] : memref<1x64xf32, #tpu.memory_space<vmem>>, vector<1x64xf32>
        %71 = math.sqrt %69 : vector<1x64xf32>
        %cst_37 = arith.constant dense<0.000000e+00> : vector<1xf32>
        %72 = vector.multi_reduction <add>, %71, %cst_37 [1] : vector<1x64xf32> to vector<1xf32>
        %73 = vector.shape_cast %72 : vector<1xf32> to vector<1x1xf32>
        %cst_38 = arith.constant 6.400000e+01 : f32
        %74 = vector.broadcast %cst_38 : f32 to vector<1x1xf32>
        %75 = arith.divf %73, %74 : vector<1x1xf32>
        %cst_39 = arith.constant 9.99999997E-7 : f32
        %76 = vector.broadcast %cst_39 : f32 to vector<1x1xf32>
        %77 = arith.addf %75, %76 : vector<1x1xf32>
        %78 = vector.broadcast %77 : vector<1x1xf32> to vector<1x64xf32>
        %79 = arith.divf %71, %78 : vector<1x64xf32>
        %80 = arith.mulf %70, %79 : vector<1x64xf32>
        %cst_40 = arith.constant 1.000000e+00 : f32
        %81 = vector.broadcast %cst_40 : f32 to vector<1x64xf32>
        %82 = arith.addf %80, %81 : vector<1x64xf32>
        %c0_41 = arith.constant 0 : index
        %c0_42 = arith.constant 0 : index
        %83 = vector.load %arg14[%c0_41, %c0_42] : memref<1x64xf32, #tpu.memory_space<vmem>>, vector<1x64xf32>
        tpu.vector_store %arg14[%c0_41, %c0_42], %82 {strides = array<i32>} : memref<1x64xf32, #tpu.memory_space<vmem>>, vector<1x64xf32>,
      } else {
      }
    } else {
    }
    %c1_i32 = arith.constant 1 : i32
    %5 = arith.cmpi eq, %arg1, %c1_i32 : i32
    %6 = arith.extui %5 : i1 to i32
    %c0_i32_1 = arith.constant 0 : i32
    %7 = arith.cmpi ne, %6, %c0_i32_1 : i32
    scf.if %7 {
      %8 = arith.index_cast %1 : i32 to index
      %c0 = arith.constant 0 : index
      %9 = vector.load %arg12[%8, %c0] : memref<256x64xf32, #tpu.memory_space<vmem>>, vector<256x64xf32>
      %c0_2 = arith.constant 0 : index
      %c0_3 = arith.constant 0 : index
      %10 = vector.load %arg14[%c0_2, %c0_3] : memref<1x64xf32, #tpu.memory_space<vmem>>, vector<1x64xf32>
      %11 = vector.broadcast %10 : vector<1x64xf32> to vector<256x64xf32>
      %12 = arith.mulf %9, %11 : vector<256x64xf32>
      %c0_4 = arith.constant 0 : index
      %c0_5 = arith.constant 0 : index
      %13 = vector.load %arg7[%c0_4, %c0_5] : memref<1x64xf32, #tpu.memory_space<vmem>>, vector<1x64xf32>
      %14 = vector.broadcast %13 : vector<1x64xf32> to vector<256x64xf32>
      %15 = arith.addf %12, %14 : vector<256x64xf32>
      %c0_6 = arith.constant 0 : index
      %c0_7 = arith.constant 0 : index
      %16 = vector.load %arg8[%c0_6, %c0_7] : memref<64x16xf32, #tpu.memory_space<vmem>>, vector<64x16xf32>
      %cst = arith.constant dense<0.000000e+00> : vector<256x16xf32>
      %17 = tpu.matmul %15, %16, %cst {dimension_numbers = #tpu.dot_dimension_numbers<[1], [0], [0], [1], [0, 0, 1, 1], [], []>} : vector<256x64xf32>, vector<64x16xf32>, vector<256x16xf32> -> vector<256x16xf32>
      %c0_8 = arith.constant 0 : index
      %c0_9 = arith.constant 0 : index
      %18 = vector.load %arg9[%c0_8, %c0_9] : memref<1x16xf32, #tpu.memory_space<vmem>>, vector<1x16xf32>
      %19 = vector.broadcast %18 : vector<1x16xf32> to vector<256x16xf32>
      %20 = arith.addf %17, %19 : vector<256x16xf32>
      %c0_10 = arith.constant 0 : index
      %c0_11 = arith.constant 0 : index
      %c0_12 = arith.constant 0 : index
      %21 = vector.load %arg10[%c0_10, %c0_11, %c0_12] : memref<1x256x16xf32, #tpu.memory_space<vmem>>, vector<1x256x16xf32>
      %22 = vector.shape_cast %21 : vector<1x256x16xf32> to vector<256x16xf32>
      %23 = arith.addf %20, %22 : vector<256x16xf32>
      %c0_13 = arith.constant 0 : index
      %c0_14 = arith.constant 0 : index
      %c0_15 = arith.constant 0 : index
      %24 = vector.load %arg11[%c0_13, %c0_14, %c0_15] : memref<1x256x16xf32, #tpu.memory_space<vmem>>, vector<1x256x16xf32>
      %25 = vector.shape_cast %24 : vector<1x256x16xf32> to vector<256x16xf32>
      %26 = vector.shape_cast %23 : vector<256x16xf32> to vector<1x256x16xf32>
      tpu.vector_store %arg11[%c0_13, %c0_14, %c0_15], %26 {strides = array<i32>} : memref<1x256x16xf32, #tpu.memory_space<vmem>>, vector<1x256x16xf32>,
    } else {
    }
    return
  }
  func.func @transform_0(%arg0: i32, %arg1: i32, %arg2: i32) -> (i32, i32, i32) {
    %c1_i32 = arith.constant 1 : i32
    %0 = arith.subi %c1_i32, %arg1 : i32
    %1 = arith.muli %0, %arg2 : i32
    %c0_i32 = arith.constant 0 : i32
    %c0_i32_0 = arith.constant 0 : i32
    return %arg0, %1, %c0_i32 : i32, i32, i32
  }
  func.func @transform_1(%arg0: i32, %arg1: i32, %arg2: i32) -> (i32, i32) {
    %c0_i32 = arith.constant 0 : i32
    %c0_i32_0 = arith.constant 0 : i32
    %c0_i32_1 = arith.constant 0 : i32
    return %c0_i32, %c0_i32_0 : i32, i32
  }
  func.func @transform_2(%arg0: i32, %arg1: i32, %arg2: i32) -> (i32, i32) {
    %c0_i32 = arith.constant 0 : i32
    %c0_i32_0 = arith.constant 0 : i32
    %c0_i32_1 = arith.constant 0 : i32
    return %c0_i32, %c0_i32_0 : i32, i32
  }
  func.func @transform_3(%arg0: i32, %arg1: i32, %arg2: i32) -> (i32, i32) {
    %c0_i32 = arith.constant 0 : i32
    %c0_i32_0 = arith.constant 0 : i32
    %c0_i32_1 = arith.constant 0 : i32
    return %c0_i32, %c0_i32_0 : i32, i32
  }
  func.func @transform_4(%arg0: i32, %arg1: i32, %arg2: i32) -> (i32, i32) {
    %c0_i32 = arith.constant 0 : i32
    %c0_i32_0 = arith.constant 0 : i32
    %c0_i32_1 = arith.constant 0 : i32
    return %c0_i32, %c0_i32_0 : i32, i32
  }
  func.func @transform_5(%arg0: i32, %arg1: i32, %arg2: i32) -> (i32, i32) {
    %c0_i32 = arith.constant 0 : i32
    %c0_i32_0 = arith.constant 0 : i32
    %c0_i32_1 = arith.constant 0 : i32
    return %c0_i32, %c0_i32_0 : i32, i32
  }
  func.func @transform_6(%arg0: i32, %arg1: i32, %arg2: i32) -> (i32, i32) {
    %c0_i32 = arith.constant 0 : i32
    %c0_i32_0 = arith.constant 0 : i32
    %c0_i32_1 = arith.constant 0 : i32
    return %c0_i32, %c0_i32_0 : i32, i32
  }
  func.func @transform_7(%arg0: i32, %arg1: i32, %arg2: i32) -> (i32, i32, i32) {
    %0 = arith.muli %arg1, %arg2 : i32
    %c0_i32 = arith.constant 0 : i32
    %c0_i32_0 = arith.constant 0 : i32
    return %arg0, %0, %c0_i32 : i32, i32, i32
  }
  func.func @transform_8(%arg0: i32, %arg1: i32, %arg2: i32) -> (i32, i32, i32) {
    %0 = arith.muli %arg1, %arg2 : i32
    %c0_i32 = arith.constant 0 : i32
    %c0_i32_0 = arith.constant 0 : i32
    return %arg0, %0, %c0_i32 : i32, i32, i32
  }
}

</mosaic_0001>

<llo_original>
// kernel: sd_cascade_res_block.2
$region0: #{sd_cascade_res_block.2}
  #allocation0 [shape = 'u32[]', space=smem, size = 0x4, offset = 0x4, fixed_abs, tag = 'smem constant byte address 0x4 - core index']
  #allocation1 [shape = 'u32[144,128]{1,0:T(1,128)}', space=vmem, size = 0x12000, scoped, tag = 'internal scratch']
  %s0 = inlined_call_operand.vmem [shape: f32[2,18,18,16], index: 0, kind: input, shape index: {}]
  %s1 = inlined_call_operand.vmem [shape: f32[3,3,16], index: 1, kind: input, shape index: {}]
  %s2 = inlined_call_operand.vmem [shape: f32[1,1,16], index: 2, kind: input, shape index: {}]
  %s3 = inlined_call_operand.vmem [shape: f32[2,16,16,16], index: 3, kind: output, shape index: {}]
  %s4 = sld [smem:[#allocation0]]
  $region45: #{sd_cascade_res_block.2} parent=0
    _
  %s6 = ssub.s32 1, %s4
  %s7 = scalar_select 0, %s6, %s4
  loop: start=0, step=1, limit=4
  $region2: #{sd_cascade_res_block.2} parent=0 // loop_pre_header
    _
  $region3: #{sd_cascade_res_block.2} parent=0 // loop_header
    %s9 = sphi 0, %s13
    %p10 = scmp.ge.s32.totalorder %s9, 4
    %s19 = sphi 0, %s21
    %s22 = sphi 0, %s19
    %s23 = sphi 0, %s22
    %s39 = sphi 0, %s23
    %s43 = sphi 0, %s43
    %s45 = sphi 0, %s43
    %s46 = sphi 0, %s45
    %s60 = sphi 0, %s46
    %s64 = sphi 0, %s64
    %s66 = sphi 0, %s64
    %s67 = sphi 0, %s66
    %s81 = sphi 0, %s67
    %s87 = sphi 0, %s89
    %s90 = sphi 0, %s87
    %s91 = sphi 0, %s90
    %s107 = sphi 0, %s91
  $region4: #{sd_cascade_res_block.2} parent=0 // loop_header_branch
    %12 = sbr.rel (%p10) target = $region8
  $region5: #{sd_cascade_res_block.2} parent=0 // loop_body
    %s14 = ssub.s32 %s9, 1
    %s15 = ssub.s32 %s9, 2
    %s16 = sadd.s32 %s9, 1
    %s17 = ssub.s32 %s9, %s16
    %p18 = scmp.eq.s32.totalorder %s17, 0
    %s20 = sadd.s32 %s19, 1
    %s21 = scalar_select %p18, %s19, %s20
    %p24 = pneg %p18
    %p25 = scmp.eq.s32.totalorder %s9, 1
    %p26 = por %p24, %p25
    %p27 = scmp.ne.s32.totalorder %s19, %s22
    %p28 = scmp.eq.s32.totalorder %s9, 0
    %p29 = por %p27, %p28
    %p30 = scmp.ne.s32.totalorder %s19, %s22
    %p31 = scmp.eq.s32.totalorder %s14, 1
    %p32 = por %p30, %p31
    %p33 = scmp.ne.s32.totalorder %s22, %s23
    %p34 = scmp.eq.s32.totalorder %s14, 0
    %p35 = por %p33, %p34
    %p36 = scmp.ne.s32.totalorder %s22, %s23
    %p37 = scmp.eq.s32.totalorder %s15, 1
    %p38 = por %p36, %p37
    %p40 = scmp.ne.s32.totalorder %s23, %s39
    %p41 = scmp.eq.s32.totalorder %s15, 0
    %p42 = por %p40, %p41
    %s44 = sadd.s32 %s43, 1
    %p47 = scmp.eq.s32.totalorder %s9, 1
    %p48 = scmp.ne.s32.totalorder %s43, %s45
    %p49 = scmp.eq.s32.totalorder %s9, 0
    %p50 = por %p48, %p49
    %p51 = scmp.ne.s32.totalorder %s43, %s45
    %p52 = scmp.eq.s32.totalorder %s14, 1
    %p53 = por %p51, %p52
    %p54 = scmp.ne.s32.totalorder %s45, %s46
    %p55 = scmp.eq.s32.totalorder %s14, 0
    %p56 = por %p54, %p55
    %p57 = scmp.ne.s32.totalorder %s45, %s46
    %p58 = scmp.eq.s32.totalorder %s15, 1
    %p59 = por %p57, %p58
    %p61 = scmp.ne.s32.totalorder %s46, %s60
    %p62 = scmp.eq.s32.totalorder %s15, 0
    %p63 = por %p61, %p62
    %s65 = sadd.s32 %s64, 1
    %p68 = scmp.eq.s32.totalorder %s9, 1
    %p69 = scmp.ne.s32.totalorder %s64, %s66
    %p70 = scmp.eq.s32.totalorder %s9, 0
    %p71 = por %p69, %p70
    %p72 = scmp.ne.s32.totalorder %s64, %s66
    %p73 = scmp.eq.s32.totalorder %s14, 1
    %p74 = por %p72, %p73
    %p75 = scmp.ne.s32.totalorder %s66, %s67
    %p76 = scmp.eq.s32.totalorder %s14, 0
    %p77 = por %p75, %p76
    %p78 = scmp.ne.s32.totalorder %s66, %s67
    %p79 = scmp.eq.s32.totalorder %s15, 1
    %p80 = por %p78, %p79
    %p82 = scmp.ne.s32.totalorder %s67, %s81
    %p83 = scmp.eq.s32.totalorder %s15, 0
    %p84 = por %p82, %p83
    %s85 = ssub.s32 %s9, %s16
    %p86 = scmp.eq.s32.totalorder %s85, 0
    %s88 = sadd.s32 %s87, 1
    %s89 = scalar_select %p86, %s87, %s88
    %p92 = pneg %p86
    %p93 = scmp.eq.s32.totalorder %s9, 1
    %p94 = por %p92, %p93
    %p95 = scmp.ne.s32.totalorder %s87, %s90
    %p96 = scmp.eq.s32.totalorder %s9, 0
    %p97 = por %p95, %p96
    %p98 = scmp.ne.s32.totalorder %s87, %s90
    %p99 = scmp.eq.s32.totalorder %s14, 1
    %p100 = por %p98, %p99
    %p101 = scmp.ne.s32.totalorder %s90, %s91
    %p102 = scmp.eq.s32.totalorder %s14, 0
    %p103 = por %p101, %p102
    %p104 = scmp.ne.s32.totalorder %s90, %s91
    %p105 = scmp.eq.s32.totalorder %s15, 1
    %p106 = por %p104, %p105
    %p108 = scmp.ne.s32.totalorder %s91, %s107
    %p109 = scmp.eq.s32.totalorder %s15, 0
    %p110 = por %p108, %p109
    %p111 = scmp.le.s32.totalorder 1, %s9
    %p112 = scmp.lt.s32.totalorder %s9, 3
    %p113 = pnand %p111, %p112
    %p114 = pneg %p113
    // Predicated region
    $region9: #{sd_cascade_res_block.2} parent=5 // pred_check
      _
    $region10: #{sd_cascade_res_block.2} parent=5 // pred_check_branch
      %116 = sbr.rel (%p113) target = $region12
    $region11: #{sd_cascade_res_block.2} parent=5 // pred_region
      %s117 = ssub.s32 %s9, 1
      // Predicated region
      $region13: #{sd_cascade_res_block.2} parent=11 // pred_check
        %p118 = pneg %p56
      $region14: #{sd_cascade_res_block.2} parent=11 // pred_check_branch
        %120 = sbr.rel (%p118) target = $region16
      $region15: #{sd_cascade_res_block.2} parent=11 // pred_region
        _
      $region16: #{sd_cascade_res_block.2} parent=11 // pred_fallthru
        _
      // Predicated region
      $region17: #{sd_cascade_res_block.2} parent=11 // pred_check
        %p121 = pneg %p77
      $region18: #{sd_cascade_res_block.2} parent=11 // pred_check_branch
        %123 = sbr.rel (%p121) target = $region20
      $region19: #{sd_cascade_res_block.2} parent=11 // pred_region
        _
      $region20: #{sd_cascade_res_block.2} parent=11 // pred_fallthru
        _
    $region12: #{sd_cascade_res_block.2} parent=5 // pred_fallthru
      _
    %p124 = scmp.lt.s32.totalorder %s9, 2
    // Predicated region
    $region21: #{sd_cascade_res_block.2} parent=5 // pred_check
      %p125 = pneg %p124
    $region22: #{sd_cascade_res_block.2} parent=5 // pred_check_branch
      %127 = sbr.rel (%p125) target = $region24
    $region23: #{sd_cascade_res_block.2} parent=5 // pred_region
      // Predicated region
      $region25: #{sd_cascade_res_block.2} parent=23 // pred_check
        %p128 = pneg %p29
      $region26: #{sd_cascade_res_block.2} parent=23 // pred_check_branch
        %130 = sbr.rel (%p128) target = $region28
      $region27: #{sd_cascade_res_block.2} parent=23 // pred_region
        %p131 = scmp.lt.s32.totalorder %s9, 1
        %s132 = scalar_select %p131, %s9, 1
        %s133 = smul.addr %s132, 54
        %s134 = smul.addr %s133, 8
        %s135 = scalar_lea.vmem %s0, %s134
      $region28: #{sd_cascade_res_block.2} parent=23 // pred_fallthru
        _
    $region24: #{sd_cascade_res_block.2} parent=5 // pred_fallthru
      _
    %p136 = scmp.le.s32.totalorder 1, %s9
    %p137 = scmp.lt.s32.totalorder %s9, 3
    %p138 = pnand %p136, %p137
    %p139 = pneg %p138
    // Predicated region
    $region29: #{sd_cascade_res_block.2} parent=5 // pred_check
      _
    $region30: #{sd_cascade_res_block.2} parent=5 // pred_check_branch
      %141 = sbr.rel (%p138) target = $region32
    $region31: #{sd_cascade_res_block.2} parent=5 // pred_region
      %s142 = ssub.s32 %s9, 1
      %p143 = scmp.lt.s32.totalorder %s14, 1
      %s144 = scalar_select %p143, %s14, 1
      %s145 = smul.addr %s144, 54
      %s146 = smul.addr %s145, 8
      %s147 = scalar_lea.vmem %s0, %s146
      %p148 = pneg %p35
      %p149 = pneg %p32
      %p150 = pneg %p56
      %p151 = pneg %p53
      %p152 = pneg %p77
      %p153 = pneg %p74
      %p154 = pneg %p103
      %p155 = pneg %p100
      %p156 = scmp.lt.s32.totalorder %s14, 1
      %s157 = scalar_select %p156, %s14, 1
      %s158 = smul.addr %s157, 32
      %s159 = smul.addr %s158, 8
      %s160 = scalar_lea.vmem %s3, %s159
      %p161 = scmp.lt.s32.totalorder %s14, 1
      %s162 = scalar_select %p161, %s14, 1
      %s163 = smul.addr %s162, 54
      %s164 = smul.addr %s163, 8
      %s165 = scalar_lea.vmem %s0, %s164
      %p166 = scmp.lt.s32.totalorder %s14, 1
      %s167 = scalar_select %p166, %s14, 1
      %s168 = smul.addr %s167, 32
      %s169 = smul.addr %s168, 8
      %s170 = scalar_lea.vmem %s3, %s169
      %v171 = vld [vmem:[%s165] sm:$0xff]
      %v172 = vld [vmem:[%s165 + $0x8] sm:$0xff]
      %v173 = vld [vmem:[%s165 + $0x10] sm:$0x3]
      %v174 = vld [vmem:[%s165 + $0x18] sm:$0xff]
      %v175 = vld [vmem:[%s165 + $0x20] sm:$0xff]
      %v176 = vld [vmem:[%s165 + $0x28] sm:$0x3]
      %v177 = vld [vmem:[%s165 + $0x30] sm:$0xff]
      %v178 = vld [vmem:[%s165 + $0x38] sm:$0xff]
      %v179 = vld [vmem:[%s165 + $0x40] sm:$0x3]
      %v180 = vld [vmem:[%s165 + $0x48] sm:$0xff]
      %v181 = vld [vmem:[%s165 + $0x50] sm:$0xff]
      %v182 = vld [vmem:[%s165 + $0x58] sm:$0x3]
      %v183 = vld [vmem:[%s165 + $0x60] sm:$0xff]
      %v184 = vld [vmem:[%s165 + $0x68] sm:$0xff]
      %v185 = vld [vmem:[%s165 + $0x70] sm:$0x3]
      %v186 = vld [vmem:[%s165 + $0x78] sm:$0xff]
      %v187 = vld [vmem:[%s165 + $0x80] sm:$0xff]
      %v188 = vld [vmem:[%s165 + $0x88] sm:$0x3]
      %v189 = vld [vmem:[%s165 + $0x90] sm:$0xff]
      %v190 = vld [vmem:[%s165 + $0x98] sm:$0xff]
      %v191 = vld [vmem:[%s165 + $0xa0] sm:$0x3]
      %v192 = vld [vmem:[%s165 + $0xa8] sm:$0xff]
      %v193 = vld [vmem:[%s165 + $0xb0] sm:$0xff]
      %v194 = vld [vmem:[%s165 + $0xb8] sm:$0x3]
      %v195 = vld [vmem:[%s165 + $0xc0] sm:$0xff]
      %v196 = vld [vmem:[%s165 + $0xc8] sm:$0xff]
      %v197 = vld [vmem:[%s165 + $0xd0] sm:$0x3]
      %v198 = vld [vmem:[%s165 + $0xd8] sm:$0xff]
      %v199 = vld [vmem:[%s165 + $0xe0] sm:$0xff]
      %v200 = vld [vmem:[%s165 + $0xe8] sm:$0x3]
      %v201 = vld [vmem:[%s165 + $0xf0] sm:$0xff]
      %v202 = vld [vmem:[%s165 + $0xf8] sm:$0xff]
      %v203 = vld [vmem:[%s165 + $0x100] sm:$0x3]
      %v204 = vld [vmem:[%s165 + $0x108] sm:$0xff]
      %v205 = vld [vmem:[%s165 + $0x110] sm:$0xff]
      %v206 = vld [vmem:[%s165 + $0x118] sm:$0x3]
      %v207 = vld [vmem:[%s165 + $0x120] sm:$0xff]
      %v208 = vld [vmem:[%s165 + $0x128] sm:$0xff]
      %v209 = vld [vmem:[%s165 + $0x130] sm:$0x3]
      %v210 = vld [vmem:[%s165 + $0x138] sm:$0xff]
      %v211 = vld [vmem:[%s165 + $0x140] sm:$0xff]
      %v212 = vld [vmem:[%s165 + $0x148] sm:$0x3]
      %v213 = vld [vmem:[%s165 + $0x150] sm:$0xff]
      %v214 = vld [vmem:[%s165 + $0x158] sm:$0xff]
      %v215 = vld [vmem:[%s165 + $0x160] sm:$0x3]
      %v216 = vld [vmem:[%s165 + $0x168] sm:$0xff]
      %v217 = vld [vmem:[%s165 + $0x170] sm:$0xff]
      %v218 = vld [vmem:[%s165 + $0x178] sm:$0x3]
      %v219 = vld [vmem:[%s165 + $0x180] sm:$0xff]
      %v220 = vld [vmem:[%s165 + $0x188] sm:$0xff]
      %v221 = vld [vmem:[%s165 + $0x190] sm:$0x3]
      %v222 = vld [vmem:[%s165 + $0x198] sm:$0xff]
      %v223 = vld [vmem:[%s165 + $0x1a0] sm:$0xff]
      %v224 = vld [vmem:[%s165 + $0x1a8] sm:$0x3]
      %v225 = vld [vmem:[%s1] sm:$0x7]
      %v226 = vld [vmem:[%s1 + $0x4] sm:$0x7]
      %v227 = vld [vmem:[%s1 + $0x8] sm:$0x7]
      %v228 = vlaneseq
      %v229 = vshrl.u32 %v228, 7
      %v230 = vsub.s32 0, %v229
      %v231 = vrot.slane %v225, %v230
      %v232 = vmul.f32 %v171, %v231
      %v233 = vmul.f32 %v172, %v231
      %v234 = vmul.f32 %v174, %v231
      %v235 = vmul.f32 %v175, %v231
      %v236 = vmul.f32 %v177, %v231
      %v237 = vmul.f32 %v178, %v231
      %v238 = vmul.f32 %v180, %v231
      %v239 = vmul.f32 %v181, %v231
      %v240 = vmul.f32 %v183, %v231
      %v241 = vmul.f32 %v184, %v231
      %v242 = vmul.f32 %v186, %v231
      %v243 = vmul.f32 %v187, %v231
      %v244 = vmul.f32 %v189, %v231
      %v245 = vmul.f32 %v190, %v231
      %v246 = vmul.f32 %v192, %v231
      %v247 = vmul.f32 %v193, %v231
      %v248 = vmul.f32 %v195, %v231
      %v249 = vmul.f32 %v196, %v231
      %v250 = vmul.f32 %v198, %v231
      %v251 = vmul.f32 %v199, %v231
      %v252 = vmul.f32 %v201, %v231
      %v253 = vmul.f32 %v202, %v231
      %v254 = vmul.f32 %v204, %v231
      %v255 = vmul.f32 %v205, %v231
      %v256 = vmul.f32 %v207, %v231
      %v257 = vmul.f32 %v208, %v231
      %v258 = vmul.f32 %v210, %v231
      %v259 = vmul.f32 %v211, %v231
      %v260 = vmul.f32 %v213, %v231
      %v261 = vmul.f32 %v214, %v231
      %v262 = vmul.f32 %v216, %v231
      %v263 = vmul.f32 %v217, %v231
      %v264 = vadd.f32 %v232, 0.0
      %v265 = vadd.f32 %v233, 0.0
      %v266 = vadd.f32 %v234, 0.0
      %v267 = vadd.f32 %v235, 0.0
      %v268 = vadd.f32 %v236, 0.0
      %v269 = vadd.f32 %v237, 0.0
      %v270 = vadd.f32 %v238, 0.0
      %v271 = vadd.f32 %v239, 0.0
      %v272 = vadd.f32 %v240, 0.0
      %v273 = vadd.f32 %v241, 0.0
      %v274 = vadd.f32 %v242, 0.0
      %v275 = vadd.f32 %v243, 0.0
      %v276 = vadd.f32 %v244, 0.0
      %v277 = vadd.f32 %v245, 0.0
      %v278 = vadd.f32 %v246, 0.0
      %v279 = vadd.f32 %v247, 0.0
      %v280 = vadd.f32 %v248, 0.0
      %v281 = vadd.f32 %v249, 0.0
      %v282 = vadd.f32 %v250, 0.0
      %v283 = vadd.f32 %v251, 0.0
      %v284 = vadd.f32 %v252, 0.0
      %v285 = vadd.f32 %v253, 0.0
      %v286 = vadd.f32 %v254, 0.0
      %v287 = vadd.f32 %v255, 0.0
      %v288 = vadd.f32 %v256, 0.0
      %v289 = vadd.f32 %v257, 0.0
      %v290 = vadd.f32 %v258, 0.0
      %v291 = vadd.f32 %v259, 0.0
      %v292 = vadd.f32 %v260, 0.0
      %v293 = vadd.f32 %v261, 0.0
      %v294 = vadd.f32 %v262, 0.0
      %v295 = vadd.f32 %v263, 0.0
      %v296 = vlaneseq
      %v297 = vshrl.u32 %v296, 7
      %v298 = vsub.s32 0, %v297
      %v299 = vrot.slane %v226, %v298
      %v300 = vmul.f32 %v174, %v299
      %v301 = vmul.f32 %v175, %v299
      %v302 = vmul.f32 %v177, %v299
      %v303 = vmul.f32 %v178, %v299
      %v304 = vmul.f32 %v180, %v299
      %v305 = vmul.f32 %v181, %v299
      %v306 = vmul.f32 %v183, %v299
      %v307 = vmul.f32 %v184, %v299
      %v308 = vmul.f32 %v186, %v299
      %v309 = vmul.f32 %v187, %v299
      %v310 = vmul.f32 %v189, %v299
      %v311 = vmul.f32 %v190, %v299
      %v312 = vmul.f32 %v192, %v299
      %v313 = vmul.f32 %v193, %v299
      %v314 = vmul.f32 %v195, %v299
      %v315 = vmul.f32 %v196, %v299
      %v316 = vmul.f32 %v198, %v299
      %v317 = vmul.f32 %v199, %v299
      %v318 = vmul.f32 %v201, %v299
      %v319 = vmul.f32 %v202, %v299
      %v320 = vmul.f32 %v204, %v299
      %v321 = vmul.f32 %v205, %v299
      %v322 = vmul.f32 %v207, %v299
      %v323 = vmul.f32 %v208, %v299
      %v324 = vmul.f32 %v210, %v299
      %v325 = vmul.f32 %v211, %v299
      %v326 = vmul.f32 %v213, %v299
      %v327 = vmul.f32 %v214, %v299
      %v328 = vmul.f32 %v216, %v299
      %v329 = vmul.f32 %v217, %v299
      %v330 = vmul.f32 %v219, %v299
      %v331 = vmul.f32 %v220, %v299
      %v332 = vadd.f32 %v264, %v300
      %v333 = vadd.f32 %v265, %v301
      %v334 = vadd.f32 %v266, %v302
      %v335 = vadd.f32 %v267, %v303
      %v336 = vadd.f32 %v268, %v304
      %v337 = vadd.f32 %v269, %v305
      %v338 = vadd.f32 %v270, %v306
      %v339 = vadd.f32 %v271, %v307
      %v340 = vadd.f32 %v272, %v308
      %v341 = vadd.f32 %v273, %v309
      %v342 = vadd.f32 %v274, %v310
      %v343 = vadd.f32 %v275, %v311
      %v344 = vadd.f32 %v276, %v312
      %v345 = vadd.f32 %v277, %v313
      %v346 = vadd.f32 %v278, %v314
      %v347 = vadd.f32 %v279, %v315
      %v348 = vadd.f32 %v280, %v316
      %v349 = vadd.f32 %v281, %v317
      %v350 = vadd.f32 %v282, %v318
      %v351 = vadd.f32 %v283, %v319
      %v352 = vadd.f32 %v284, %v320
      %v353 = vadd.f32 %v285, %v321
      %v354 = vadd.f32 %v286, %v322
      %v355 = vadd.f32 %v287, %v323
      %v356 = vadd.f32 %v288, %v324
      %v357 = vadd.f32 %v289, %v325
      %v358 = vadd.f32 %v290, %v326
      %v359 = vadd.f32 %v291, %v327
      %v360 = vadd.f32 %v292, %v328
      %v361 = vadd.f32 %v293, %v329
      %v362 = vadd.f32 %v294, %v330
      %v363 = vadd.f32 %v295, %v331
      %v364 = vlaneseq
      %v365 = vshrl.u32 %v364, 7
      %v366 = vsub.s32 0, %v365
      %v367 = vrot.slane %v227, %v366
      %v368 = vmul.f32 %v177, %v367
      %v369 = vmul.f32 %v178, %v367
      %v370 = vmul.f32 %v180, %v367
      %v371 = vmul.f32 %v181, %v367
      %v372 = vmul.f32 %v183, %v367
      %v373 = vmul.f32 %v184, %v367
      %v374 = vmul.f32 %v186, %v367
      %v375 = vmul.f32 %v187, %v367
      %v376 = vmul.f32 %v189, %v367
      %v377 = vmul.f32 %v190, %v367
      %v378 = vmul.f32 %v192, %v367
      %v379 = vmul.f32 %v193, %v367
      %v380 = vmul.f32 %v195, %v367
      %v381 = vmul.f32 %v196, %v367
      %v382 = vmul.f32 %v198, %v367
      %v383 = vmul.f32 %v199, %v367
      %v384 = vmul.f32 %v201, %v367
      %v385 = vmul.f32 %v202, %v367
      %v386 = vmul.f32 %v204, %v367
      %v387 = vmul.f32 %v205, %v367
      %v388 = vmul.f32 %v207, %v367
      %v389 = vmul.f32 %v208, %v367
      %v390 = vmul.f32 %v210, %v367
      %v391 = vmul.f32 %v211, %v367
      %v392 = vmul.f32 %v213, %v367
      %v393 = vmul.f32 %v214, %v367
      %v394 = vmul.f32 %v216, %v367
      %v395 = vmul.f32 %v217, %v367
      %v396 = vmul.f32 %v219, %v367
      %v397 = vmul.f32 %v220, %v367
      %v398 = vmul.f32 %v222, %v367
      %v399 = vmul.f32 %v223, %v367
      %v400 = vadd.f32 %v332, %v368
      %v401 = vadd.f32 %v333, %v369
      %v402 = vadd.f32 %v334, %v370
      %v403 = vadd.f32 %v335, %v371
      %v404 = vadd.f32 %v336, %v372
      %v405 = vadd.f32 %v337, %v373
      %v406 = vadd.f32 %v338, %v374
      %v407 = vadd.f32 %v339, %v375
      %v408 = vadd.f32 %v340, %v376
      %v409 = vadd.f32 %v341, %v377
      %v410 = vadd.f32 %v342, %v378
      %v411 = vadd.f32 %v343, %v379
      %v412 = vadd.f32 %v344, %v380
      %v413 = vadd.f32 %v345, %v381
      %v414 = vadd.f32 %v346, %v382
      %v415 = vadd.f32 %v347, %v383
      %v416 = vadd.f32 %v348, %v384
      %v417 = vadd.f32 %v349, %v385
      %v418 = vadd.f32 %v350, %v386
      %v419 = vadd.f32 %v351, %v387
      %v420 = vadd.f32 %v352, %v388
      %v421 = vadd.f32 %v353, %v389
      %v422 = vadd.f32 %v354, %v390
      %v423 = vadd.f32 %v355, %v391
      %v424 = vadd.f32 %v356, %v392
      %v425 = vadd.f32 %v357, %v393
      %v426 = vadd.f32 %v358, %v394
      %v427 = vadd.f32 %v359, %v395
      %v428 = vadd.f32 %v360, %v396
      %v429 = vadd.f32 %v361, %v397
      %v430 = vadd.f32 %v362, %v398
      %v431 = vadd.f32 %v363, %v399
      %v432 = vlaneseq
      %v433 = vshrl.u32 %v432, 7
      %v434 = vsub.s32 1, %v433
      %v435 = vrot.slane %v225, %v434
      %v436 = vmul.f32 %v171, %v435
      %v437 = vmul.f32 %v172, %v435
      %v438 = vmul.f32 %v173, %v435
      %v439 = vmul.f32 %v174, %v435
      %v440 = vmul.f32 %v175, %v435
      %v441 = vmul.f32 %v176, %v435
      %v442 = vmul.f32 %v177, %v435
      %v443 = vmul.f32 %v178, %v435
      %v444 = vmul.f32 %v179, %v435
      %v445 = vmul.f32 %v180, %v435
      %v446 = vmul.f32 %v181, %v435
      %v447 = vmul.f32 %v182, %v435
      %v448 = vmul.f32 %v183, %v435
      %v449 = vmul.f32 %v184, %v435
      %v450 = vmul.f32 %v185, %v435
      %v451 = vmul.f32 %v186, %v435
      %v452 = vmul.f32 %v187, %v435
      %v453 = vmul.f32 %v188, %v435
      %v454 = vmul.f32 %v189, %v435
      %v455 = vmul.f32 %v190, %v435
      %v456 = vmul.f32 %v191, %v435
      %v457 = vmul.f32 %v192, %v435
      %v458 = vmul.f32 %v193, %v435
      %v459 = vmul.f32 %v194, %v435
      %v460 = vmul.f32 %v195, %v435
      %v461 = vmul.f32 %v196, %v435
      %v462 = vmul.f32 %v197, %v435
      %v463 = vmul.f32 %v198, %v435
      %v464 = vmul.f32 %v199, %v435
      %v465 = vmul.f32 %v200, %v435
      %v466 = vmul.f32 %v201, %v435
      %v467 = vmul.f32 %v202, %v435
      %v468 = vmul.f32 %v203, %v435
      %v469 = vmul.f32 %v204, %v435
      %v470 = vmul.f32 %v205, %v435
      %v471 = vmul.f32 %v206, %v435
      %v472 = vmul.f32 %v207, %v435
      %v473 = vmul.f32 %v208, %v435
      %v474 = vmul.f32 %v209, %v435
      %v475 = vmul.f32 %v210, %v435
      %v476 = vmul.f32 %v211, %v435
      %v477 = vmul.f32 %v212, %v435
      %v478 = vmul.f32 %v213, %v435
      %v479 = vmul.f32 %v214, %v435
      %v480 = vmul.f32 %v215, %v435
      %v481 = vmul.f32 %v216, %v435
      %v482 = vmul.f32 %v217, %v435
      %v483 = vmul.f32 %v218, %v435
      %vm532 = vcmask 1046528
      %v533 = vrot.slane %v436, 1
      %v534 = vrot.slane %v437, 1
      %v535 = vsel %vm532, %v533, %v534
      %v536 = vrot.slane %v438, 1
      %v537 = vsel %vm532, %v534, %v536
      %v538 = vrot.slane %v439, 1
      %v539 = vrot.slane %v440, 1
      %v540 = vsel %vm532, %v538, %v539
      %v541 = vrot.slane %v441, 1
      %v542 = vsel %vm532, %v539, %v541
      %v543 = vrot.slane %v442, 1
      %v544 = vrot.slane %v443, 1
      %v545 = vsel %vm532, %v543, %v544
      %v546 = vrot.slane %v444, 1
      %v547 = vsel %vm532, %v544, %v546
      %v548 = vrot.slane %v445, 1
      %v549 = vrot.slane %v446, 1
      %v550 = vsel %vm532, %v548, %v549
      %v551 = vrot.slane %v447, 1
      %v552 = vsel %vm532, %v549, %v551
      %v553 = vrot.slane %v448, 1
      %v554 = vrot.slane %v449, 1
      %v555 = vsel %vm532, %v553, %v554
      %v556 = vrot.slane %v450, 1
      %v557 = vsel %vm532, %v554, %v556
      %v558 = vrot.slane %v451, 1
      %v559 = vrot.slane %v452, 1
      %v560 = vsel %vm532, %v558, %v559
      %v561 = vrot.slane %v453, 1
      %v562 = vsel %vm532, %v559, %v561
      %v563 = vrot.slane %v454, 1
      %v564 = vrot.slane %v455, 1
      %v565 = vsel %vm532, %v563, %v564
      %v566 = vrot.slane %v456, 1
      %v567 = vsel %vm532, %v564, %v566
      %v568 = vrot.slane %v457, 1
      %v569 = vrot.slane %v458, 1
      %v570 = vsel %vm532, %v568, %v569
      %v571 = vrot.slane %v459, 1
      %v572 = vsel %vm532, %v569, %v571
      %v573 = vrot.slane %v460, 1
      %v574 = vrot.slane %v461, 1
      %v575 = vsel %vm532, %v573, %v574
      %v576 = vrot.slane %v462, 1
      %v577 = vsel %vm532, %v574, %v576
      %v578 = vrot.slane %v463, 1
      %v579 = vrot.slane %v464, 1
      %v580 = vsel %vm532, %v578, %v579
      %v581 = vrot.slane %v465, 1
      %v582 = vsel %vm532, %v579, %v581
      %v583 = vrot.slane %v466, 1
      %v584 = vrot.slane %v467, 1
      %v585 = vsel %vm532, %v583, %v584
      %v586 = vrot.slane %v468, 1
      %v587 = vsel %vm532, %v584, %v586
      %v588 = vrot.slane %v469, 1
      %v589 = vrot.slane %v470, 1
      %v590 = vsel %vm532, %v588, %v589
      %v591 = vrot.slane %v471, 1
      %v592 = vsel %vm532, %v589, %v591
      %v593 = vrot.slane %v472, 1
      %v594 = vrot.slane %v473, 1
      %v595 = vsel %vm532, %v593, %v594
      %v596 = vrot.slane %v474, 1
      %v597 = vsel %vm532, %v594, %v596
      %v598 = vrot.slane %v475, 1
      %v599 = vrot.slane %v476, 1
      %v600 = vsel %vm532, %v598, %v599
      %v601 = vrot.slane %v477, 1
      %v602 = vsel %vm532, %v599, %v601
      %v603 = vrot.slane %v478, 1
      %v604 = vrot.slane %v479, 1
      %v605 = vsel %vm532, %v603, %v604
      %v606 = vrot.slane %v480, 1
      %v607 = vsel %vm532, %v604, %v606
      %v608 = vrot.slane %v481, 1
      %v609 = vrot.slane %v482, 1
      %v610 = vsel %vm532, %v608, %v609
      %v611 = vrot.slane %v483, 1
      %v612 = vsel %vm532, %v609, %v611
      %v645 = vadd.f32 %v400, %v535
      %v646 = vadd.f32 %v401, %v537
      %v647 = vadd.f32 %v402, %v540
      %v648 = vadd.f32 %v403, %v542
      %v649 = vadd.f32 %v404, %v545
      %v650 = vadd.f32 %v405, %v547
      %v651 = vadd.f32 %v406, %v550
      %v652 = vadd.f32 %v407, %v552
      %v653 = vadd.f32 %v408, %v555
      %v654 = vadd.f32 %v409, %v557
      %v655 = vadd.f32 %v410, %v560
      %v656 = vadd.f32 %v411, %v562
      %v657 = vadd.f32 %v412, %v565
      %v658 = vadd.f32 %v413, %v567
      %v659 = vadd.f32 %v414, %v570
      %v660 = vadd.f32 %v415, %v572
      %v661 = vadd.f32 %v416, %v575
      %v662 = vadd.f32 %v417, %v577
      %v663 = vadd.f32 %v418, %v580
      %v664 = vadd.f32 %v419, %v582
      %v665 = vadd.f32 %v420, %v585
      %v666 = vadd.f32 %v421, %v587
      %v667 = vadd.f32 %v422, %v590
      %v668 = vadd.f32 %v423, %v592
      %v669 = vadd.f32 %v424, %v595
      %v670 = vadd.f32 %v425, %v597
      %v671 = vadd.f32 %v426, %v600
      %v672 = vadd.f32 %v427, %v602
      %v673 = vadd.f32 %v428, %v605
      %v674 = vadd.f32 %v429, %v607
      %v675 = vadd.f32 %v430, %v610
      %v676 = vadd.f32 %v431, %v612
      %v677 = vlaneseq
      %v678 = vshrl.u32 %v677, 7
      %v679 = vsub.s32 1, %v678
      %v680 = vrot.slane %v226, %v679
      %v681 = vmul.f32 %v174, %v680
      %v682 = vmul.f32 %v175, %v680
      %v683 = vmul.f32 %v176, %v680
      %v684 = vmul.f32 %v177, %v680
      %v685 = vmul.f32 %v178, %v680
      %v686 = vmul.f32 %v179, %v680
      %v687 = vmul.f32 %v180, %v680
      %v688 = vmul.f32 %v181, %v680
      %v689 = vmul.f32 %v182, %v680
      %v690 = vmul.f32 %v183, %v680
      %v691 = vmul.f32 %v184, %v680
      %v692 = vmul.f32 %v185, %v680
      %v693 = vmul.f32 %v186, %v680
      %v694 = vmul.f32 %v187, %v680
      %v695 = vmul.f32 %v188, %v680
      %v696 = vmul.f32 %v189, %v680
      %v697 = vmul.f32 %v190, %v680
      %v698 = vmul.f32 %v191, %v680
      %v699 = vmul.f32 %v192, %v680
      %v700 = vmul.f32 %v193, %v680
      %v701 = vmul.f32 %v194, %v680
      %v702 = vmul.f32 %v195, %v680
      %v703 = vmul.f32 %v196, %v680
      %v704 = vmul.f32 %v197, %v680
      %v705 = vmul.f32 %v198, %v680
      %v706 = vmul.f32 %v199, %v680
      %v707 = vmul.f32 %v200, %v680
      %v708 = vmul.f32 %v201, %v680
      %v709 = vmul.f32 %v202, %v680
      %v710 = vmul.f32 %v203, %v680
      %v711 = vmul.f32 %v204, %v680
      %v712 = vmul.f32 %v205, %v680
      %v713 = vmul.f32 %v206, %v680
      %v714 = vmul.f32 %v207, %v680
      %v715 = vmul.f32 %v208, %v680
      %v716 = vmul.f32 %v209, %v680
      %v717 = vmul.f32 %v210, %v680
      %v718 = vmul.f32 %v211, %v680
      %v719 = vmul.f32 %v212, %v680
      %v720 = vmul.f32 %v213, %v680
      %v721 = vmul.f32 %v214, %v680
      %v722 = vmul.f32 %v215, %v680
      %v723 = vmul.f32 %v216, %v680
      %v724 = vmul.f32 %v217, %v680
      %v725 = vmul.f32 %v218, %v680
      %v726 = vmul.f32 %v219, %v680
      %v727 = vmul.f32 %v220, %v680
      %v728 = vmul.f32 %v221, %v680
      %v777 = vrot.slane %v681, 1
      %v778 = vrot.slane %v682, 1
      %v779 = vsel %vm532, %v777, %v778
      %v780 = vrot.slane %v683, 1
      %v781 = vsel %vm532, %v778, %v780
      %v782 = vrot.slane %v684, 1
      %v783 = vrot.slane %v685, 1
      %v784 = vsel %vm532, %v782, %v783
      %v785 = vrot.slane %v686, 1
      %v786 = vsel %vm532, %v783, %v785
      %v787 = vrot.slane %v687, 1
      %v788 = vrot.slane %v688, 1
      %v789 = vsel %vm532, %v787, %v788
      %v790 = vrot.slane %v689, 1
      %v791 = vsel %vm532, %v788, %v790
      %v792 = vrot.slane %v690, 1
      %v793 = vrot.slane %v691, 1
      %v794 = vsel %vm532, %v792, %v793
      %v795 = vrot.slane %v692, 1
      %v796 = vsel %vm532, %v793, %v795
      %v797 = vrot.slane %v693, 1
      %v798 = vrot.slane %v694, 1
      %v799 = vsel %vm532, %v797, %v798
      %v800 = vrot.slane %v695, 1
      %v801 = vsel %vm532, %v798, %v800
      %v802 = vrot.slane %v696, 1
      %v803 = vrot.slane %v697, 1
      %v804 = vsel %vm532, %v802, %v803
      %v805 = vrot.slane %v698, 1
      %v806 = vsel %vm532, %v803, %v805
      %v807 = vrot.slane %v699, 1
      %v808 = vrot.slane %v700, 1
      %v809 = vsel %vm532, %v807, %v808
      %v810 = vrot.slane %v701, 1
      %v811 = vsel %vm532, %v808, %v810
      %v812 = vrot.slane %v702, 1
      %v813 = vrot.slane %v703, 1
      %v814 = vsel %vm532, %v812, %v813
      %v815 = vrot.slane %v704, 1
      %v816 = vsel %vm532, %v813, %v815
      %v817 = vrot.slane %v705, 1
      %v818 = vrot.slane %v706, 1
      %v819 = vsel %vm532, %v817, %v818
      %v820 = vrot.slane %v707, 1
      %v821 = vsel %vm532, %v818, %v820
      %v822 = vrot.slane %v708, 1
      %v823 = vrot.slane %v709, 1
      %v824 = vsel %vm532, %v822, %v823
      %v825 = vrot.slane %v710, 1
      %v826 = vsel %vm532, %v823, %v825
      %v827 = vrot.slane %v711, 1
      %v828 = vrot.slane %v712, 1
      %v829 = vsel %vm532, %v827, %v828
      %v830 = vrot.slane %v713, 1
      %v831 = vsel %vm532, %v828, %v830
      %v832 = vrot.slane %v714, 1
      %v833 = vrot.slane %v715, 1
      %v834 = vsel %vm532, %v832, %v833
      %v835 = vrot.slane %v716, 1
      %v836 = vsel %vm532, %v833, %v835
      %v837 = vrot.slane %v717, 1
      %v838 = vrot.slane %v718, 1
      %v839 = vsel %vm532, %v837, %v838
      %v840 = vrot.slane %v719, 1
      %v841 = vsel %vm532, %v838, %v840
      %v842 = vrot.slane %v720, 1
      %v843 = vrot.slane %v721, 1
      %v844 = vsel %vm532, %v842, %v843
      %v845 = vrot.slane %v722, 1
      %v846 = vsel %vm532, %v843, %v845
      %v847 = vrot.slane %v723, 1
      %v848 = vrot.slane %v724, 1
      %v849 = vsel %vm532, %v847, %v848
      %v850 = vrot.slane %v725, 1
      %v851 = vsel %vm532, %v848, %v850
      %v852 = vrot.slane %v726, 1
      %v853 = vrot.slane %v727, 1
      %v854 = vsel %vm532, %v852, %v853
      %v855 = vrot.slane %v728, 1
      %v856 = vsel %vm532, %v853, %v855
      %v889 = vadd.f32 %v645, %v779
      %v890 = vadd.f32 %v646, %v781
      %v891 = vadd.f32 %v647, %v784
      %v892 = vadd.f32 %v648, %v786
      %v893 = vadd.f32 %v649, %v789
      %v894 = vadd.f32 %v650, %v791
      %v895 = vadd.f32 %v651, %v794
      %v896 = vadd.f32 %v652, %v796
      %v897 = vadd.f32 %v653, %v799
      %v898 = vadd.f32 %v654, %v801
      %v899 = vadd.f32 %v655, %v804
      %v900 = vadd.f32 %v656, %v806
      %v901 = vadd.f32 %v657, %v809
      %v902 = vadd.f32 %v658, %v811
      %v903 = vadd.f32 %v659, %v814
      %v904 = vadd.f32 %v660, %v816
      %v905 = vadd.f32 %v661, %v819
      %v906 = vadd.f32 %v662, %v821
      %v907 = vadd.f32 %v663, %v824
      %v908 = vadd.f32 %v664, %v826
      %v909 = vadd.f32 %v665, %v829
      %v910 = vadd.f32 %v666, %v831
      %v911 = vadd.f32 %v667, %v834
      %v912 = vadd.f32 %v668, %v836
      %v913 = vadd.f32 %v669, %v839
      %v914 = vadd.f32 %v670, %v841
      %v915 = vadd.f32 %v671, %v844
      %v916 = vadd.f32 %v672, %v846
      %v917 = vadd.f32 %v673, %v849
      %v918 = vadd.f32 %v674, %v851
      %v919 = vadd.f32 %v675, %v854
      %v920 = vadd.f32 %v676, %v856
      %v921 = vlaneseq
      %v922 = vshrl.u32 %v921, 7
      %v923 = vsub.s32 1, %v922
      %v924 = vrot.slane %v227, %v923
      %v925 = vmul.f32 %v177, %v924
      %v926 = vmul.f32 %v178, %v924
      %v927 = vmul.f32 %v179, %v924
      %v928 = vmul.f32 %v180, %v924
      %v929 = vmul.f32 %v181, %v924
      %v930 = vmul.f32 %v182, %v924
      %v931 = vmul.f32 %v183, %v924
      %v932 = vmul.f32 %v184, %v924
      %v933 = vmul.f32 %v185, %v924
      %v934 = vmul.f32 %v186, %v924
      %v935 = vmul.f32 %v187, %v924
      %v936 = vmul.f32 %v188, %v924
      %v937 = vmul.f32 %v189, %v924
      %v938 = vmul.f32 %v190, %v924
      %v939 = vmul.f32 %v191, %v924
      %v940 = vmul.f32 %v192, %v924
      %v941 = vmul.f32 %v193, %v924
      %v942 = vmul.f32 %v194, %v924
      %v943 = vmul.f32 %v195, %v924
      %v944 = vmul.f32 %v196, %v924
      %v945 = vmul.f32 %v197, %v924
      %v946 = vmul.f32 %v198, %v924
      %v947 = vmul.f32 %v199, %v924
      %v948 = vmul.f32 %v200, %v924
      %v949 = vmul.f32 %v201, %v924
      %v950 = vmul.f32 %v202, %v924
      %v951 = vmul.f32 %v203, %v924
      %v952 = vmul.f32 %v204, %v924
      %v953 = vmul.f32 %v205, %v924
      %v954 = vmul.f32 %v206, %v924
      %v955 = vmul.f32 %v207, %v924
      %v956 = vmul.f32 %v208, %v924
      %v957 = vmul.f32 %v209, %v924
      %v958 = vmul.f32 %v210, %v924
      %v959 = vmul.f32 %v211, %v924
      %v960 = vmul.f32 %v212, %v924
      %v961 = vmul.f32 %v213, %v924
      %v962 = vmul.f32 %v214, %v924
      %v963 = vmul.f32 %v215, %v924
      %v964 = vmul.f32 %v216, %v924
      %v965 = vmul.f32 %v217, %v924
      %v966 = vmul.f32 %v218, %v924
      %v967 = vmul.f32 %v219, %v924
      %v968 = vmul.f32 %v220, %v924
      %v969 = vmul.f32 %v221, %v924
      %v970 = vmul.f32 %v222, %v924
      %v971 = vmul.f32 %v223, %v924
      %v972 = vmul.f32 %v224, %v924
      %v1021 = vrot.slane %v925, 1
      %v1022 = vrot.slane %v926, 1
      %v1023 = vsel %vm532, %v1021, %v1022
      %v1024 = vrot.slane %v927, 1
      %v1025 = vsel %vm532, %v1022, %v1024
      %v1026 = vrot.slane %v928, 1
      %v1027 = vrot.slane %v929, 1
      %v1028 = vsel %vm532, %v1026, %v1027
      %v1029 = vrot.slane %v930, 1
      %v1030 = vsel %vm532, %v1027, %v1029
      %v1031 = vrot.slane %v931, 1
      %v1032 = vrot.slane %v932, 1
      %v1033 = vsel %vm532, %v1031, %v1032
      %v1034 = vrot.slane %v933, 1
      %v1035 = vsel %vm532, %v1032, %v1034
      %v1036 = vrot.slane %v934, 1
      %v1037 = vrot.slane %v935, 1
      %v1038 = vsel %vm532, %v1036, %v1037
      %v1039 = vrot.slane %v936, 1
      %v1040 = vsel %vm532, %v1037, %v1039
      %v1041 = vrot.slane %v937, 1
      %v1042 = vrot.slane %v938, 1
      %v1043 = vsel %vm532, %v1041, %v1042
      %v1044 = vrot.slane %v939, 1
      %v1045 = vsel %vm532, %v1042, %v1044
      %v1046 = vrot.slane %v940, 1
      %v1047 = vrot.slane %v941, 1
      %v1048 = vsel %vm532, %v1046, %v1047
      %v1049 = vrot.slane %v942, 1
      %v1050 = vsel %vm532, %v1047, %v1049
      %v1051 = vrot.slane %v943, 1
      %v1052 = vrot.slane %v944, 1
      %v1053 = vsel %vm532, %v1051, %v1052
      %v1054 = vrot.slane %v945, 1
      %v1055 = vsel %vm532, %v1052, %v1054
      %v1056 = vrot.slane %v946, 1
      %v1057 = vrot.slane %v947, 1
      %v1058 = vsel %vm532, %v1056, %v1057
      %v1059 = vrot.slane %v948, 1
      %v1060 = vsel %vm532, %v1057, %v1059
      %v1061 = vrot.slane %v949, 1
      %v1062 = vrot.slane %v950, 1
      %v1063 = vsel %vm532, %v1061, %v1062
      %v1064 = vrot.slane %v951, 1
      %v1065 = vsel %vm532, %v1062, %v1064
      %v1066 = vrot.slane %v952, 1
      %v1067 = vrot.slane %v953, 1
      %v1068 = vsel %vm532, %v1066, %v1067
      %v1069 = vrot.slane %v954, 1
      %v1070 = vsel %vm532, %v1067, %v1069
      %v1071 = vrot.slane %v955, 1
      %v1072 = vrot.slane %v956, 1
      %v1073 = vsel %vm532, %v1071, %v1072
      %v1074 = vrot.slane %v957, 1
      %v1075 = vsel %vm532, %v1072, %v1074
      %v1076 = vrot.slane %v958, 1
      %v1077 = vrot.slane %v959, 1
      %v1078 = vsel %vm532, %v1076, %v1077
      %v1079 = vrot.slane %v960, 1
      %v1080 = vsel %vm532, %v1077, %v1079
      %v1081 = vrot.slane %v961, 1
      %v1082 = vrot.slane %v962, 1
      %v1083 = vsel %vm532, %v1081, %v1082
      %v1084 = vrot.slane %v963, 1
      %v1085 = vsel %vm532, %v1082, %v1084
      %v1086 = vrot.slane %v964, 1
      %v1087 = vrot.slane %v965, 1
      %v1088 = vsel %vm532, %v1086, %v1087
      %v1089 = vrot.slane %v966, 1
      %v1090 = vsel %vm532, %v1087, %v1089
      %v1091 = vrot.slane %v967, 1
      %v1092 = vrot.slane %v968, 1
      %v1093 = vsel %vm532, %v1091, %v1092
      %v1094 = vrot.slane %v969, 1
      %v1095 = vsel %vm532, %v1092, %v1094
      %v1096 = vrot.slane %v970, 1
      %v1097 = vrot.slane %v971, 1
      %v1098 = vsel %vm532, %v1096, %v1097
      %v1099 = vrot.slane %v972, 1
      %v1100 = vsel %vm532, %v1097, %v1099
      %v1133 = vadd.f32 %v889, %v1023
      %v1134 = vadd.f32 %v890, %v1025
      %v1135 = vadd.f32 %v891, %v1028
      %v1136 = vadd.f32 %v892, %v1030
      %v1137 = vadd.f32 %v893, %v1033
      %v1138 = vadd.f32 %v894, %v1035
      %v1139 = vadd.f32 %v895, %v1038
      %v1140 = vadd.f32 %v896, %v1040
      %v1141 = vadd.f32 %v897, %v1043
      %v1142 = vadd.f32 %v898, %v1045
      %v1143 = vadd.f32 %v899, %v1048
      %v1144 = vadd.f32 %v900, %v1050
      %v1145 = vadd.f32 %v901, %v1053
      %v1146 = vadd.f32 %v902, %v1055
      %v1147 = vadd.f32 %v903, %v1058
      %v1148 = vadd.f32 %v904, %v1060
      %v1149 = vadd.f32 %v905, %v1063
      %v1150 = vadd.f32 %v906, %v1065
      %v1151 = vadd.f32 %v907, %v1068
      %v1152 = vadd.f32 %v908, %v1070
      %v1153 = vadd.f32 %v909, %v1073
      %v1154 = vadd.f32 %v910, %v1075
      %v1155 = vadd.f32 %v911, %v1078
      %v1156 = vadd.f32 %v912, %v1080
      %v1157 = vadd.f32 %v913, %v1083
      %v1158 = vadd.f32 %v914, %v1085
      %v1159 = vadd.f32 %v915, %v1088
      %v1160 = vadd.f32 %v916, %v1090
      %v1161 = vadd.f32 %v917, %v1093
      %v1162 = vadd.f32 %v918, %v1095
      %v1163 = vadd.f32 %v919, %v1098
      %v1164 = vadd.f32 %v920, %v1100
      %v1165 = vlaneseq
      %v1166 = vshrl.u32 %v1165, 7
      %v1167 = vsub.s32 2, %v1166
      %v1168 = vrot.slane %v225, %v1167
      %v1169 = vmul.f32 %v171, %v1168
      %v1170 = vmul.f32 %v172, %v1168
      %v1171 = vmul.f32 %v173, %v1168
      %v1172 = vmul.f32 %v174, %v1168
      %v1173 = vmul.f32 %v175, %v1168
      %v1174 = vmul.f32 %v176, %v1168
      %v1175 = vmul.f32 %v177, %v1168
      %v1176 = vmul.f32 %v178, %v1168
      %v1177 = vmul.f32 %v179, %v1168
      %v1178 = vmul.f32 %v180, %v1168
      %v1179 = vmul.f32 %v181, %v1168
      %v1180 = vmul.f32 %v182, %v1168
      %v1181 = vmul.f32 %v183, %v1168
      %v1182 = vmul.f32 %v184, %v1168
      %v1183 = vmul.f32 %v185, %v1168
      %v1184 = vmul.f32 %v186, %v1168
      %v1185 = vmul.f32 %v187, %v1168
      %v1186 = vmul.f32 %v188, %v1168
      %v1187 = vmul.f32 %v189, %v1168
      %v1188 = vmul.f32 %v190, %v1168
      %v1189 = vmul.f32 %v191, %v1168
      %v1190 = vmul.f32 %v192, %v1168
      %v1191 = vmul.f32 %v193, %v1168
      %v1192 = vmul.f32 %v194, %v1168
      %v1193 = vmul.f32 %v195, %v1168
      %v1194 = vmul.f32 %v196, %v1168
      %v1195 = vmul.f32 %v197, %v1168
      %v1196 = vmul.f32 %v198, %v1168
      %v1197 = vmul.f32 %v199, %v1168
      %v1198 = vmul.f32 %v200, %v1168
      %v1199 = vmul.f32 %v201, %v1168
      %v1200 = vmul.f32 %v202, %v1168
      %v1201 = vmul.f32 %v203, %v1168
      %v1202 = vmul.f32 %v204, %v1168
      %v1203 = vmul.f32 %v205, %v1168
      %v1204 = vmul.f32 %v206, %v1168
      %v1205 = vmul.f32 %v207, %v1168
      %v1206 = vmul.f32 %v208, %v1168
      %v1207 = vmul.f32 %v209, %v1168
      %v1208 = vmul.f32 %v210, %v1168
      %v1209 = vmul.f32 %v211, %v1168
      %v1210 = vmul.f32 %v212, %v1168
      %v1211 = vmul.f32 %v213, %v1168
      %v1212 = vmul.f32 %v214, %v1168
      %v1213 = vmul.f32 %v215, %v1168
      %v1214 = vmul.f32 %v216, %v1168
      %v1215 = vmul.f32 %v217, %v1168
      %v1216 = vmul.f32 %v218, %v1168
      %vm1265 = vcmask 1045504
      %v1266 = vrot.slane %v1169, 2
      %v1267 = vrot.slane %v1170, 2
      %v1268 = vsel %vm1265, %v1266, %v1267
      %v1269 = vrot.slane %v1171, 2
      %v1270 = vsel %vm1265, %v1267, %v1269
      %v1271 = vrot.slane %v1172, 2
      %v1272 = vrot.slane %v1173, 2
      %v1273 = vsel %vm1265, %v1271, %v1272
      %v1274 = vrot.slane %v1174, 2
      %v1275 = vsel %vm1265, %v1272, %v1274
      %v1276 = vrot.slane %v1175, 2
      %v1277 = vrot.slane %v1176, 2
      %v1278 = vsel %vm1265, %v1276, %v1277
      %v1279 = vrot.slane %v1177, 2
      %v1280 = vsel %vm1265, %v1277, %v1279
      %v1281 = vrot.slane %v1178, 2
      %v1282 = vrot.slane %v1179, 2
      %v1283 = vsel %vm1265, %v1281, %v1282
      %v1284 = vrot.slane %v1180, 2
      %v1285 = vsel %vm1265, %v1282, %v1284
      %v1286 = vrot.slane %v1181, 2
      %v1287 = vrot.slane %v1182, 2
      %v1288 = vsel %vm1265, %v1286, %v1287
      %v1289 = vrot.slane %v1183, 2
      %v1290 = vsel %vm1265, %v1287, %v1289
      %v1291 = vrot.slane %v1184, 2
      %v1292 = vrot.slane %v1185, 2
      %v1293 = vsel %vm1265, %v1291, %v1292
      %v1294 = vrot.slane %v1186, 2
      %v1295 = vsel %vm1265, %v1292, %v1294
      %v1296 = vrot.slane %v1187, 2
      %v1297 = vrot.slane %v1188, 2
      %v1298 = vsel %vm1265, %v1296, %v1297
      %v1299 = vrot.slane %v1189, 2
      %v1300 = vsel %vm1265, %v1297, %v1299
      %v1301 = vrot.slane %v1190, 2
      %v1302 = vrot.slane %v1191, 2
      %v1303 = vsel %vm1265, %v1301, %v1302
      %v1304 = vrot.slane %v1192, 2
      %v1305 = vsel %vm1265, %v1302, %v1304
      %v1306 = vrot.slane %v1193, 2
      %v1307 = vrot.slane %v1194, 2
      %v1308 = vsel %vm1265, %v1306, %v1307
      %v1309 = vrot.slane %v1195, 2
      %v1310 = vsel %vm1265, %v1307, %v1309
      %v1311 = vrot.slane %v1196, 2
      %v1312 = vrot.slane %v1197, 2
      %v1313 = vsel %vm1265, %v1311, %v1312
      %v1314 = vrot.slane %v1198, 2
      %v1315 = vsel %vm1265, %v1312, %v1314
      %v1316 = vrot.slane %v1199, 2
      %v1317 = vrot.slane %v1200, 2
      %v1318 = vsel %vm1265, %v1316, %v1317
      %v1319 = vrot.slane %v1201, 2
      %v1320 = vsel %vm1265, %v1317, %v1319
      %v1321 = vrot.slane %v1202, 2
      %v1322 = vrot.slane %v1203, 2
      %v1323 = vsel %vm1265, %v1321, %v1322
      %v1324 = vrot.slane %v1204, 2
      %v1325 = vsel %vm1265, %v1322, %v1324
      %v1326 = vrot.slane %v1205, 2
      %v1327 = vrot.slane %v1206, 2
      %v1328 = vsel %vm1265, %v1326, %v1327
      %v1329 = vrot.slane %v1207, 2
      %v1330 = vsel %vm1265, %v1327, %v1329
      %v1331 = vrot.slane %v1208, 2
      %v1332 = vrot.slane %v1209, 2
      %v1333 = vsel %vm1265, %v1331, %v1332
      %v1334 = vrot.slane %v1210, 2
      %v1335 = vsel %vm1265, %v1332, %v1334
      %v1336 = vrot.slane %v1211, 2
      %v1337 = vrot.slane %v1212, 2
      %v1338 = vsel %vm1265, %v1336, %v1337
      %v1339 = vrot.slane %v1213, 2
      %v1340 = vsel %vm1265, %v1337, %v1339
      %v1341 = vrot.slane %v1214, 2
      %v1342 = vrot.slane %v1215, 2
      %v1343 = vsel %vm1265, %v1341, %v1342
      %v1344 = vrot.slane %v1216, 2
      %v1345 = vsel %vm1265, %v1342, %v1344
      %v1378 = vadd.f32 %v1133, %v1268
      %v1379 = vadd.f32 %v1134, %v1270
      %v1380 = vadd.f32 %v1135, %v1273
      %v1381 = vadd.f32 %v1136, %v1275
      %v1382 = vadd.f32 %v1137, %v1278
      %v1383 = vadd.f32 %v1138, %v1280
      %v1384 = vadd.f32 %v1139, %v1283
      %v1385 = vadd.f32 %v1140, %v1285
      %v1386 = vadd.f32 %v1141, %v1288
      %v1387 = vadd.f32 %v1142, %v1290
      %v1388 = vadd.f32 %v1143, %v1293
      %v1389 = vadd.f32 %v1144, %v1295
      %v1390 = vadd.f32 %v1145, %v1298
      %v1391 = vadd.f32 %v1146, %v1300
      %v1392 = vadd.f32 %v1147, %v1303
      %v1393 = vadd.f32 %v1148, %v1305
      %v1394 = vadd.f32 %v1149, %v1308
      %v1395 = vadd.f32 %v1150, %v1310
      %v1396 = vadd.f32 %v1151, %v1313
      %v1397 = vadd.f32 %v1152, %v1315
      %v1398 = vadd.f32 %v1153, %v1318
      %v1399 = vadd.f32 %v1154, %v1320
      %v1400 = vadd.f32 %v1155, %v1323
      %v1401 = vadd.f32 %v1156, %v1325
      %v1402 = vadd.f32 %v1157, %v1328
      %v1403 = vadd.f32 %v1158, %v1330
      %v1404 = vadd.f32 %v1159, %v1333
      %v1405 = vadd.f32 %v1160, %v1335
      %v1406 = vadd.f32 %v1161, %v1338
      %v1407 = vadd.f32 %v1162, %v1340
      %v1408 = vadd.f32 %v1163, %v1343
      %v1409 = vadd.f32 %v1164, %v1345
      %v1410 = vlaneseq
      %v1411 = vshrl.u32 %v1410, 7
      %v1412 = vsub.s32 2, %v1411
      %v1413 = vrot.slane %v226, %v1412
      %v1414 = vmul.f32 %v174, %v1413
      %v1415 = vmul.f32 %v175, %v1413
      %v1416 = vmul.f32 %v176, %v1413
      %v1417 = vmul.f32 %v177, %v1413
      %v1418 = vmul.f32 %v178, %v1413
      %v1419 = vmul.f32 %v179, %v1413
      %v1420 = vmul.f32 %v180, %v1413
      %v1421 = vmul.f32 %v181, %v1413
      %v1422 = vmul.f32 %v182, %v1413
      %v1423 = vmul.f32 %v183, %v1413
      %v1424 = vmul.f32 %v184, %v1413
      %v1425 = vmul.f32 %v185, %v1413
      %v1426 = vmul.f32 %v186, %v1413
      %v1427 = vmul.f32 %v187, %v1413
      %v1428 = vmul.f32 %v188, %v1413
      %v1429 = vmul.f32 %v189, %v1413
      %v1430 = vmul.f32 %v190, %v1413
      %v1431 = vmul.f32 %v191, %v1413
      %v1432 = vmul.f32 %v192, %v1413
      %v1433 = vmul.f32 %v193, %v1413
      %v1434 = vmul.f32 %v194, %v1413
      %v1435 = vmul.f32 %v195, %v1413
      %v1436 = vmul.f32 %v196, %v1413
      %v1437 = vmul.f32 %v197, %v1413
      %v1438 = vmul.f32 %v198, %v1413
      %v1439 = vmul.f32 %v199, %v1413
      %v1440 = vmul.f32 %v200, %v1413
      %v1441 = vmul.f32 %v201, %v1413
      %v1442 = vmul.f32 %v202, %v1413
      %v1443 = vmul.f32 %v203, %v1413
      %v1444 = vmul.f32 %v204, %v1413
      %v1445 = vmul.f32 %v205, %v1413
      %v1446 = vmul.f32 %v206, %v1413
      %v1447 = vmul.f32 %v207, %v1413
      %v1448 = vmul.f32 %v208, %v1413
      %v1449 = vmul.f32 %v209, %v1413
      %v1450 = vmul.f32 %v210, %v1413
      %v1451 = vmul.f32 %v211, %v1413
      %v1452 = vmul.f32 %v212, %v1413
      %v1453 = vmul.f32 %v213, %v1413
      %v1454 = vmul.f32 %v214, %v1413
      %v1455 = vmul.f32 %v215, %v1413
      %v1456 = vmul.f32 %v216, %v1413
      %v1457 = vmul.f32 %v217, %v1413
      %v1458 = vmul.f32 %v218, %v1413
      %v1459 = vmul.f32 %v219, %v1413
      %v1460 = vmul.f32 %v220, %v1413
      %v1461 = vmul.f32 %v221, %v1413
      %v1510 = vrot.slane %v1414, 2
      %v1511 = vrot.slane %v1415, 2
      %v1512 = vsel %vm1265, %v1510, %v1511
      %v1513 = vrot.slane %v1416, 2
      %v1514 = vsel %vm1265, %v1511, %v1513
      %v1515 = vrot.slane %v1417, 2
      %v1516 = vrot.slane %v1418, 2
      %v1517 = vsel %vm1265, %v1515, %v1516
      %v1518 = vrot.slane %v1419, 2
      %v1519 = vsel %vm1265, %v1516, %v1518
      %v1520 = vrot.slane %v1420, 2
      %v1521 = vrot.slane %v1421, 2
      %v1522 = vsel %vm1265, %v1520, %v1521
      %v1523 = vrot.slane %v1422, 2
      %v1524 = vsel %vm1265, %v1521, %v1523
      %v1525 = vrot.slane %v1423, 2
      %v1526 = vrot.slane %v1424, 2
      %v1527 = vsel %vm1265, %v1525, %v1526
      %v1528 = vrot.slane %v1425, 2
      %v1529 = vsel %vm1265, %v1526, %v1528
      %v1530 = vrot.slane %v1426, 2
      %v1531 = vrot.slane %v1427, 2
      %v1532 = vsel %vm1265, %v1530, %v1531
      %v1533 = vrot.slane %v1428, 2
      %v1534 = vsel %vm1265, %v1531, %v1533
      %v1535 = vrot.slane %v1429, 2
      %v1536 = vrot.slane %v1430, 2
      %v1537 = vsel %vm1265, %v1535, %v1536
      %v1538 = vrot.slane %v1431, 2
      %v1539 = vsel %vm1265, %v1536, %v1538
      %v1540 = vrot.slane %v1432, 2
      %v1541 = vrot.slane %v1433, 2
      %v1542 = vsel %vm1265, %v1540, %v1541
      %v1543 = vrot.slane %v1434, 2
      %v1544 = vsel %vm1265, %v1541, %v1543
      %v1545 = vrot.slane %v1435, 2
      %v1546 = vrot.slane %v1436, 2
      %v1547 = vsel %vm1265, %v1545, %v1546
      %v1548 = vrot.slane %v1437, 2
      %v1549 = vsel %vm1265, %v1546, %v1548
      %v1550 = vrot.slane %v1438, 2
      %v1551 = vrot.slane %v1439, 2
      %v1552 = vsel %vm1265, %v1550, %v1551
      %v1553 = vrot.slane %v1440, 2
      %v1554 = vsel %vm1265, %v1551, %v1553
      %v1555 = vrot.slane %v1441, 2
      %v1556 = vrot.slane %v1442, 2
      %v1557 = vsel %vm1265, %v1555, %v1556
      %v1558 = vrot.slane %v1443, 2
      %v1559 = vsel %vm1265, %v1556, %v1558
      %v1560 = vrot.slane %v1444, 2
      %v1561 = vrot.slane %v1445, 2
      %v1562 = vsel %vm1265, %v1560, %v1561
      %v1563 = vrot.slane %v1446, 2
      %v1564 = vsel %vm1265, %v1561, %v1563
      %v1565 = vrot.slane %v1447, 2
      %v1566 = vrot.slane %v1448, 2
      %v1567 = vsel %vm1265, %v1565, %v1566
      %v1568 = vrot.slane %v1449, 2
      %v1569 = vsel %vm1265, %v1566, %v1568
      %v1570 = vrot.slane %v1450, 2
      %v1571 = vrot.slane %v1451, 2
      %v1572 = vsel %vm1265, %v1570, %v1571
      %v1573 = vrot.slane %v1452, 2
      %v1574 = vsel %vm1265, %v1571, %v1573
      %v1575 = vrot.slane %v1453, 2
      %v1576 = vrot.slane %v1454, 2
      %v1577 = vsel %vm1265, %v1575, %v1576
      %v1578 = vrot.slane %v1455, 2
      %v1579 = vsel %vm1265, %v1576, %v1578
      %v1580 = vrot.slane %v1456, 2
      %v1581 = vrot.slane %v1457, 2
      %v1582 = vsel %vm1265, %v1580, %v1581
      %v1583 = vrot.slane %v1458, 2
      %v1584 = vsel %vm1265, %v1581, %v1583
      %v1585 = vrot.slane %v1459, 2
      %v1586 = vrot.slane %v1460, 2
      %v1587 = vsel %vm1265, %v1585, %v1586
      %v1588 = vrot.slane %v1461, 2
      %v1589 = vsel %vm1265, %v1586, %v1588
      %v1622 = vadd.f32 %v1378, %v1512
      %v1623 = vadd.f32 %v1379, %v1514
      %v1624 = vadd.f32 %v1380, %v1517
      %v1625 = vadd.f32 %v1381, %v1519
      %v1626 = vadd.f32 %v1382, %v1522
      %v1627 = vadd.f32 %v1383, %v1524
      %v1628 = vadd.f32 %v1384, %v1527
      %v1629 = vadd.f32 %v1385, %v1529
      %v1630 = vadd.f32 %v1386, %v1532
      %v1631 = vadd.f32 %v1387, %v1534
      %v1632 = vadd.f32 %v1388, %v1537
      %v1633 = vadd.f32 %v1389, %v1539
      %v1634 = vadd.f32 %v1390, %v1542
      %v1635 = vadd.f32 %v1391, %v1544
      %v1636 = vadd.f32 %v1392, %v1547
      %v1637 = vadd.f32 %v1393, %v1549
      %v1638 = vadd.f32 %v1394, %v1552
      %v1639 = vadd.f32 %v1395, %v1554
      %v1640 = vadd.f32 %v1396, %v1557
      %v1641 = vadd.f32 %v1397, %v1559
      %v1642 = vadd.f32 %v1398, %v1562
      %v1643 = vadd.f32 %v1399, %v1564
      %v1644 = vadd.f32 %v1400, %v1567
      %v1645 = vadd.f32 %v1401, %v1569
      %v1646 = vadd.f32 %v1402, %v1572
      %v1647 = vadd.f32 %v1403, %v1574
      %v1648 = vadd.f32 %v1404, %v1577
      %v1649 = vadd.f32 %v1405, %v1579
      %v1650 = vadd.f32 %v1406, %v1582
      %v1651 = vadd.f32 %v1407, %v1584
      %v1652 = vadd.f32 %v1408, %v1587
      %v1653 = vadd.f32 %v1409, %v1589
      %v1654 = vlaneseq
      %v1655 = vshrl.u32 %v1654, 7
      %v1656 = vsub.s32 2, %v1655
      %v1657 = vrot.slane %v227, %v1656
      %v1658 = vmul.f32 %v177, %v1657
      %v1659 = vmul.f32 %v178, %v1657
      %v1660 = vmul.f32 %v179, %v1657
      %v1661 = vmul.f32 %v180, %v1657
      %v1662 = vmul.f32 %v181, %v1657
      %v1663 = vmul.f32 %v182, %v1657
      %v1664 = vmul.f32 %v183, %v1657
      %v1665 = vmul.f32 %v184, %v1657
      %v1666 = vmul.f32 %v185, %v1657
      %v1667 = vmul.f32 %v186, %v1657
      %v1668 = vmul.f32 %v187, %v1657
      %v1669 = vmul.f32 %v188, %v1657
      %v1670 = vmul.f32 %v189, %v1657
      %v1671 = vmul.f32 %v190, %v1657
      %v1672 = vmul.f32 %v191, %v1657
      %v1673 = vmul.f32 %v192, %v1657
      %v1674 = vmul.f32 %v193, %v1657
      %v1675 = vmul.f32 %v194, %v1657
      %v1676 = vmul.f32 %v195, %v1657
      %v1677 = vmul.f32 %v196, %v1657
      %v1678 = vmul.f32 %v197, %v1657
      %v1679 = vmul.f32 %v198, %v1657
      %v1680 = vmul.f32 %v199, %v1657
      %v1681 = vmul.f32 %v200, %v1657
      %v1682 = vmul.f32 %v201, %v1657
      %v1683 = vmul.f32 %v202, %v1657
      %v1684 = vmul.f32 %v203, %v1657
      %v1685 = vmul.f32 %v204, %v1657
      %v1686 = vmul.f32 %v205, %v1657
      %v1687 = vmul.f32 %v206, %v1657
      %v1688 = vmul.f32 %v207, %v1657
      %v1689 = vmul.f32 %v208, %v1657
      %v1690 = vmul.f32 %v209, %v1657
      %v1691 = vmul.f32 %v210, %v1657
      %v1692 = vmul.f32 %v211, %v1657
      %v1693 = vmul.f32 %v212, %v1657
      %v1694 = vmul.f32 %v213, %v1657
      %v1695 = vmul.f32 %v214, %v1657
      %v1696 = vmul.f32 %v215, %v1657
      %v1697 = vmul.f32 %v216, %v1657
      %v1698 = vmul.f32 %v217, %v1657
      %v1699 = vmul.f32 %v218, %v1657
      %v1700 = vmul.f32 %v219, %v1657
      %v1701 = vmul.f32 %v220, %v1657
      %v1702 = vmul.f32 %v221, %v1657
      %v1703 = vmul.f32 %v222, %v1657
      %v1704 = vmul.f32 %v223, %v1657
      %v1705 = vmul.f32 %v224, %v1657
      %v1754 = vrot.slane %v1658, 2
      %v1755 = vrot.slane %v1659, 2
      %v1756 = vsel %vm1265, %v1754, %v1755
      %v1757 = vrot.slane %v1660, 2
      %v1758 = vsel %vm1265, %v1755, %v1757
      %v1759 = vrot.slane %v1661, 2
      %v1760 = vrot.slane %v1662, 2
      %v1761 = vsel %vm1265, %v1759, %v1760
      %v1762 = vrot.slane %v1663, 2
      %v1763 = vsel %vm1265, %v1760, %v1762
      %v1764 = vrot.slane %v1664, 2
      %v1765 = vrot.slane %v1665, 2
      %v1766 = vsel %vm1265, %v1764, %v1765
      %v1767 = vrot.slane %v1666, 2
      %v1768 = vsel %vm1265, %v1765, %v1767
      %v1769 = vrot.slane %v1667, 2
      %v1770 = vrot.slane %v1668, 2
      %v1771 = vsel %vm1265, %v1769, %v1770
      %v1772 = vrot.slane %v1669, 2
      %v1773 = vsel %vm1265, %v1770, %v1772
      %v1774 = vrot.slane %v1670, 2
      %v1775 = vrot.slane %v1671, 2
      %v1776 = vsel %vm1265, %v1774, %v1775
      %v1777 = vrot.slane %v1672, 2
      %v1778 = vsel %vm1265, %v1775, %v1777
      %v1779 = vrot.slane %v1673, 2
      %v1780 = vrot.slane %v1674, 2
      %v1781 = vsel %vm1265, %v1779, %v1780
      %v1782 = vrot.slane %v1675, 2
      %v1783 = vsel %vm1265, %v1780, %v1782
      %v1784 = vrot.slane %v1676, 2
      %v1785 = vrot.slane %v1677, 2
      %v1786 = vsel %vm1265, %v1784, %v1785
      %v1787 = vrot.slane %v1678, 2
      %v1788 = vsel %vm1265, %v1785, %v1787
      %v1789 = vrot.slane %v1679, 2
      %v1790 = vrot.slane %v1680, 2
      %v1791 = vsel %vm1265, %v1789, %v1790
      %v1792 = vrot.slane %v1681, 2
      %v1793 = vsel %vm1265, %v1790, %v1792
      %v1794 = vrot.slane %v1682, 2
      %v1795 = vrot.slane %v1683, 2
      %v1796 = vsel %vm1265, %v1794, %v1795
      %v1797 = vrot.slane %v1684, 2
      %v1798 = vsel %vm1265, %v1795, %v1797
      %v1799 = vrot.slane %v1685, 2
      %v1800 = vrot.slane %v1686, 2
      %v1801 = vsel %vm1265, %v1799, %v1800
      %v1802 = vrot.slane %v1687, 2
      %v1803 = vsel %vm1265, %v1800, %v1802
      %v1804 = vrot.slane %v1688, 2
      %v1805 = vrot.slane %v1689, 2
      %v1806 = vsel %vm1265, %v1804, %v1805
      %v1807 = vrot.slane %v1690, 2
      %v1808 = vsel %vm1265, %v1805, %v1807
      %v1809 = vrot.slane %v1691, 2
      %v1810 = vrot.slane %v1692, 2
      %v1811 = vsel %vm1265, %v1809, %v1810
      %v1812 = vrot.slane %v1693, 2
      %v1813 = vsel %vm1265, %v1810, %v1812
      %v1814 = vrot.slane %v1694, 2
      %v1815 = vrot.slane %v1695, 2
      %v1816 = vsel %vm1265, %v1814, %v1815
      %v1817 = vrot.slane %v1696, 2
      %v1818 = vsel %vm1265, %v1815, %v1817
      %v1819 = vrot.slane %v1697, 2
      %v1820 = vrot.slane %v1698, 2
      %v1821 = vsel %vm1265, %v1819, %v1820
      %v1822 = vrot.slane %v1699, 2
      %v1823 = vsel %vm1265, %v1820, %v1822
      %v1824 = vrot.slane %v1700, 2
      %v1825 = vrot.slane %v1701, 2
      %v1826 = vsel %vm1265, %v1824, %v1825
      %v1827 = vrot.slane %v1702, 2
      %v1828 = vsel %vm1265, %v1825, %v1827
      %v1829 = vrot.slane %v1703, 2
      %v1830 = vrot.slane %v1704, 2
      %v1831 = vsel %vm1265, %v1829, %v1830
      %v1832 = vrot.slane %v1705, 2
      %v1833 = vsel %vm1265, %v1830, %v1832
      %v1866 = vadd.f32 %v1622, %v1756
      %v1867 = vadd.f32 %v1623, %v1758
      %v1868 = vadd.f32 %v1624, %v1761
      %v1869 = vadd.f32 %v1625, %v1763
      %v1870 = vadd.f32 %v1626, %v1766
      %v1871 = vadd.f32 %v1627, %v1768
      %v1872 = vadd.f32 %v1628, %v1771
      %v1873 = vadd.f32 %v1629, %v1773
      %v1874 = vadd.f32 %v1630, %v1776
      %v1875 = vadd.f32 %v1631, %v1778
      %v1876 = vadd.f32 %v1632, %v1781
      %v1877 = vadd.f32 %v1633, %v1783
      %v1878 = vadd.f32 %v1634, %v1786
      %v1879 = vadd.f32 %v1635, %v1788
      %v1880 = vadd.f32 %v1636, %v1791
      %v1881 = vadd.f32 %v1637, %v1793
      %v1882 = vadd.f32 %v1638, %v1796
      %v1883 = vadd.f32 %v1639, %v1798
      %v1884 = vadd.f32 %v1640, %v1801
      %v1885 = vadd.f32 %v1641, %v1803
      %v1886 = vadd.f32 %v1642, %v1806
      %v1887 = vadd.f32 %v1643, %v1808
      %v1888 = vadd.f32 %v1644, %v1811
      %v1889 = vadd.f32 %v1645, %v1813
      %v1890 = vadd.f32 %v1646, %v1816
      %v1891 = vadd.f32 %v1647, %v1818
      %v1892 = vadd.f32 %v1648, %v1821
      %v1893 = vadd.f32 %v1649, %v1823
      %v1894 = vadd.f32 %v1650, %v1826
      %v1895 = vadd.f32 %v1651, %v1828
      %v1896 = vadd.f32 %v1652, %v1831
      %v1897 = vadd.f32 %v1653, %v1833
      %v1898 = vld [vmem:[%s2] sm:$0x1]
      %v1900 = vlaneseq
      %v1901 = vshrl.u32 %v1900, 7
      %v1902 = vsub.s32 0, %v1901
      %v1903 = vrot.slane %v1898, %v1902
      %v1905 = vadd.f32 %v1866, %v1903
      %v1906 = vadd.f32 %v1867, %v1903
      %v1907 = vadd.f32 %v1868, %v1903
      %v1908 = vadd.f32 %v1869, %v1903
      %v1909 = vadd.f32 %v1870, %v1903
      %v1910 = vadd.f32 %v1871, %v1903
      %v1911 = vadd.f32 %v1872, %v1903
      %v1912 = vadd.f32 %v1873, %v1903
      %v1913 = vadd.f32 %v1874, %v1903
      %v1914 = vadd.f32 %v1875, %v1903
      %v1915 = vadd.f32 %v1876, %v1903
      %v1916 = vadd.f32 %v1877, %v1903
      %v1917 = vadd.f32 %v1878, %v1903
      %v1918 = vadd.f32 %v1879, %v1903
      %v1919 = vadd.f32 %v1880, %v1903
      %v1920 = vadd.f32 %v1881, %v1903
      %v1921 = vadd.f32 %v1882, %v1903
      %v1922 = vadd.f32 %v1883, %v1903
      %v1923 = vadd.f32 %v1884, %v1903
      %v1924 = vadd.f32 %v1885, %v1903
      %v1925 = vadd.f32 %v1886, %v1903
      %v1926 = vadd.f32 %v1887, %v1903
      %v1927 = vadd.f32 %v1888, %v1903
      %v1928 = vadd.f32 %v1889, %v1903
      %v1929 = vadd.f32 %v1890, %v1903
      %v1930 = vadd.f32 %v1891, %v1903
      %v1931 = vadd.f32 %v1892, %v1903
      %v1932 = vadd.f32 %v1893, %v1903
      %v1933 = vadd.f32 %v1894, %v1903
      %v1934 = vadd.f32 %v1895, %v1903
      %v1935 = vadd.f32 %v1896, %v1903
      %v1936 = vadd.f32 %v1897, %v1903
      %vm1937 = vcmask 130048
      %v1938 = vsel %vm1937, %v1905, 0.0
      %1939 = vadd.xlane.f32.xlu0 %v1938
      %v1940 = vpop.xlane.xlu0 %1939
      %v1941 = vsel %vm1937, %v1906, 0.0
      %1942 = vadd.xlane.f32.xlu0 %v1941
      %v1943 = vpop.xlane.xlu0 %1942
      %v1944 = vsel %vm1937, %v1907, 0.0
      %1945 = vadd.xlane.f32.xlu0 %v1944
      %v1946 = vpop.xlane.xlu0 %1945
      %v1947 = vsel %vm1937, %v1908, 0.0
      %1948 = vadd.xlane.f32.xlu0 %v1947
      %v1949 = vpop.xlane.xlu0 %1948
      %v1950 = vsel %vm1937, %v1909, 0.0
      %1951 = vadd.xlane.f32.xlu0 %v1950
      %v1952 = vpop.xlane.xlu0 %1951
      %v1953 = vsel %vm1937, %v1910, 0.0
      %1954 = vadd.xlane.f32.xlu0 %v1953
      %v1955 = vpop.xlane.xlu0 %1954
      %v1956 = vsel %vm1937, %v1911, 0.0
      %1957 = vadd.xlane.f32.xlu0 %v1956
      %v1958 = vpop.xlane.xlu0 %1957
      %v1959 = vsel %vm1937, %v1912, 0.0
      %1960 = vadd.xlane.f32.xlu0 %v1959
      %v1961 = vpop.xlane.xlu0 %1960
      %v1962 = vsel %vm1937, %v1913, 0.0
      %1963 = vadd.xlane.f32.xlu0 %v1962
      %v1964 = vpop.xlane.xlu0 %1963
      %v1965 = vsel %vm1937, %v1914, 0.0
      %1966 = vadd.xlane.f32.xlu0 %v1965
      %v1967 = vpop.xlane.xlu0 %1966
      %v1968 = vsel %vm1937, %v1915, 0.0
      %1969 = vadd.xlane.f32.xlu0 %v1968
      %v1970 = vpop.xlane.xlu0 %1969
      %v1971 = vsel %vm1937, %v1916, 0.0
      %1972 = vadd.xlane.f32.xlu0 %v1971
      %v1973 = vpop.xlane.xlu0 %1972
      %v1974 = vsel %vm1937, %v1917, 0.0
      %1975 = vadd.xlane.f32.xlu0 %v1974
      %v1976 = vpop.xlane.xlu0 %1975
      %v1977 = vsel %vm1937, %v1918, 0.0
      %1978 = vadd.xlane.f32.xlu0 %v1977
      %v1979 = vpop.xlane.xlu0 %1978
      %v1980 = vsel %vm1937, %v1919, 0.0
      %1981 = vadd.xlane.f32.xlu0 %v1980
      %v1982 = vpop.xlane.xlu0 %1981
      %v1983 = vsel %vm1937, %v1920, 0.0
      %1984 = vadd.xlane.f32.xlu0 %v1983
      %v1985 = vpop.xlane.xlu0 %1984
      %v1986 = vsel %vm1937, %v1921, 0.0
      %1987 = vadd.xlane.f32.xlu0 %v1986
      %v1988 = vpop.xlane.xlu0 %1987
      %v1989 = vsel %vm1937, %v1922, 0.0
      %1990 = vadd.xlane.f32.xlu0 %v1989
      %v1991 = vpop.xlane.xlu0 %1990
      %v1992 = vsel %vm1937, %v1923, 0.0
      %1993 = vadd.xlane.f32.xlu0 %v1992
      %v1994 = vpop.xlane.xlu0 %1993
      %v1995 = vsel %vm1937, %v1924, 0.0
      %1996 = vadd.xlane.f32.xlu0 %v1995
      %v1997 = vpop.xlane.xlu0 %1996
      %v1998 = vsel %vm1937, %v1925, 0.0
      %1999 = vadd.xlane.f32.xlu0 %v1998
      %v2000 = vpop.xlane.xlu0 %1999
      %v2001 = vsel %vm1937, %v1926, 0.0
      %2002 = vadd.xlane.f32.xlu0 %v2001
      %v2003 = vpop.xlane.xlu0 %2002
      %v2004 = vsel %vm1937, %v1927, 0.0
      %2005 = vadd.xlane.f32.xlu0 %v2004
      %v2006 = vpop.xlane.xlu0 %2005
      %v2007 = vsel %vm1937, %v1928, 0.0
      %2008 = vadd.xlane.f32.xlu0 %v2007
      %v2009 = vpop.xlane.xlu0 %2008
      %v2010 = vsel %vm1937, %v1929, 0.0
      %2011 = vadd.xlane.f32.xlu0 %v2010
      %v2012 = vpop.xlane.xlu0 %2011
      %v2013 = vsel %vm1937, %v1930, 0.0
      %2014 = vadd.xlane.f32.xlu0 %v2013
      %v2015 = vpop.xlane.xlu0 %2014
      %v2016 = vsel %vm1937, %v1931, 0.0
      %2017 = vadd.xlane.f32.xlu0 %v2016
      %v2018 = vpop.xlane.xlu0 %2017
      %v2019 = vsel %vm1937, %v1932, 0.0
      %2020 = vadd.xlane.f32.xlu0 %v2019
      %v2021 = vpop.xlane.xlu0 %2020
      %v2022 = vsel %vm1937, %v1933, 0.0
      %2023 = vadd.xlane.f32.xlu0 %v2022
      %v2024 = vpop.xlane.xlu0 %2023
      %v2025 = vsel %vm1937, %v1934, 0.0
      %2026 = vadd.xlane.f32.xlu0 %v2025
      %v2027 = vpop.xlane.xlu0 %2026
      %v2028 = vsel %vm1937, %v1935, 0.0
      %2029 = vadd.xlane.f32.xlu0 %v2028
      %v2030 = vpop.xlane.xlu0 %2029
      %v2031 = vsel %vm1937, %v1936, 0.0
      %2032 = vadd.xlane.f32.xlu0 %v2031
      %v2033 = vpop.xlane.xlu0 %2032
      %v2034 = vrcp.pop 16.0
      %v2035 = vmul.f32 %v1940, %v2034
      %v2036 = vmul.f32 %v1943, %v2034
      %v2037 = vmul.f32 %v1946, %v2034
      %v2038 = vmul.f32 %v1949, %v2034
      %v2039 = vmul.f32 %v1952, %v2034
      %v2040 = vmul.f32 %v1955, %v2034
      %v2041 = vmul.f32 %v1958, %v2034
      %v2042 = vmul.f32 %v1961, %v2034
      %v2043 = vmul.f32 %v1964, %v2034
      %v2044 = vmul.f32 %v1967, %v2034
      %v2045 = vmul.f32 %v1970, %v2034
      %v2046 = vmul.f32 %v1973, %v2034
      %v2047 = vmul.f32 %v1976, %v2034
      %v2048 = vmul.f32 %v1979, %v2034
      %v2049 = vmul.f32 %v1982, %v2034
      %v2050 = vmul.f32 %v1985, %v2034
      %v2051 = vmul.f32 %v1988, %v2034
      %v2052 = vmul.f32 %v1991, %v2034
      %v2053 = vmul.f32 %v1994, %v2034
      %v2054 = vmul.f32 %v1997, %v2034
      %v2055 = vmul.f32 %v2000, %v2034
      %v2056 = vmul.f32 %v2003, %v2034
      %v2057 = vmul.f32 %v2006, %v2034
      %v2058 = vmul.f32 %v2009, %v2034
      %v2059 = vmul.f32 %v2012, %v2034
      %v2060 = vmul.f32 %v2015, %v2034
      %v2061 = vmul.f32 %v2018, %v2034
      %v2062 = vmul.f32 %v2021, %v2034
      %v2063 = vmul.f32 %v2024, %v2034
      %v2064 = vmul.f32 %v2027, %v2034
      %v2065 = vmul.f32 %v2030, %v2034
      %v2066 = vmul.f32 %v2033, %v2034
      %v2067 = vsub.f32 %v1905, %v2035
      %v2068 = vsub.f32 %v1906, %v2036
      %v2069 = vsub.f32 %v1907, %v2037
      %v2070 = vsub.f32 %v1908, %v2038
      %v2071 = vsub.f32 %v1909, %v2039
      %v2072 = vsub.f32 %v1910, %v2040
      %v2073 = vsub.f32 %v1911, %v2041
      %v2074 = vsub.f32 %v1912, %v2042
      %v2075 = vsub.f32 %v1913, %v2043
      %v2076 = vsub.f32 %v1914, %v2044
      %v2077 = vsub.f32 %v1915, %v2045
      %v2078 = vsub.f32 %v1916, %v2046
      %v2079 = vsub.f32 %v1917, %v2047
      %v2080 = vsub.f32 %v1918, %v2048
      %v2081 = vsub.f32 %v1919, %v2049
      %v2082 = vsub.f32 %v1920, %v2050
      %v2083 = vsub.f32 %v1921, %v2051
      %v2084 = vsub.f32 %v1922, %v2052
      %v2085 = vsub.f32 %v1923, %v2053
      %v2086 = vsub.f32 %v1924, %v2054
      %v2087 = vsub.f32 %v1925, %v2055
      %v2088 = vsub.f32 %v1926, %v2056
      %v2089 = vsub.f32 %v1927, %v2057
      %v2090 = vsub.f32 %v1928, %v2058
      %v2091 = vsub.f32 %v1929, %v2059
      %v2092 = vsub.f32 %v1930, %v2060
      %v2093 = vsub.f32 %v1931, %v2061
      %v2094 = vsub.f32 %v1932, %v2062
      %v2095 = vsub.f32 %v1933, %v2063
      %v2096 = vsub.f32 %v1934, %v2064
      %v2097 = vsub.f32 %v1935, %v2065
      %v2098 = vsub.f32 %v1936, %v2066
      %v2099 = vmul.f32 %v2067, %v2067
      %v2100 = vmul.f32 %v2068, %v2068
      %v2101 = vmul.f32 %v2069, %v2069
      %v2102 = vmul.f32 %v2070, %v2070
      %v2103 = vmul.f32 %v2071, %v2071
      %v2104 = vmul.f32 %v2072, %v2072
      %v2105 = vmul.f32 %v2073, %v2073
      %v2106 = vmul.f32 %v2074, %v2074
      %v2107 = vmul.f32 %v2075, %v2075
      %v2108 = vmul.f32 %v2076, %v2076
      %v2109 = vmul.f32 %v2077, %v2077
      %v2110 = vmul.f32 %v2078, %v2078
      %v2111 = vmul.f32 %v2079, %v2079
      %v2112 = vmul.f32 %v2080, %v2080
      %v2113 = vmul.f32 %v2081, %v2081
      %v2114 = vmul.f32 %v2082, %v2082
      %v2115 = vmul.f32 %v2083, %v2083
      %v2116 = vmul.f32 %v2084, %v2084
      %v2117 = vmul.f32 %v2085, %v2085
      %v2118 = vmul.f32 %v2086, %v2086
      %v2119 = vmul.f32 %v2087, %v2087
      %v2120 = vmul.f32 %v2088, %v2088
      %v2121 = vmul.f32 %v2089, %v2089
      %v2122 = vmul.f32 %v2090, %v2090
      %v2123 = vmul.f32 %v2091, %v2091
      %v2124 = vmul.f32 %v2092, %v2092
      %v2125 = vmul.f32 %v2093, %v2093
      %v2126 = vmul.f32 %v2094, %v2094
      %v2127 = vmul.f32 %v2095, %v2095
      %v2128 = vmul.f32 %v2096, %v2096
      %v2129 = vmul.f32 %v2097, %v2097
      %v2130 = vmul.f32 %v2098, %v2098
      %v2131 = vsel %vm1937, %v2099, 0.0
      %2132 = vadd.xlane.f32.xlu0 %v2131
      %v2133 = vpop.xlane.xlu0 %2132
      %v2134 = vsel %vm1937, %v2100, 0.0
      %2135 = vadd.xlane.f32.xlu0 %v2134
      %v2136 = vpop.xlane.xlu0 %2135
      %v2137 = vsel %vm1937, %v2101, 0.0
      %2138 = vadd.xlane.f32.xlu0 %v2137
      %v2139 = vpop.xlane.xlu0 %2138
      %v2140 = vsel %vm1937, %v2102, 0.0
      %2141 = vadd.xlane.f32.xlu0 %v2140
      %v2142 = vpop.xlane.xlu0 %2141
      %v2143 = vsel %vm1937, %v2103, 0.0
      %2144 = vadd.xlane.f32.xlu0 %v2143
      %v2145 = vpop.xlane.xlu0 %2144
      %v2146 = vsel %vm1937, %v2104, 0.0
      %2147 = vadd.xlane.f32.xlu0 %v2146
      %v2148 = vpop.xlane.xlu0 %2147
      %v2149 = vsel %vm1937, %v2105, 0.0
      %2150 = vadd.xlane.f32.xlu0 %v2149
      %v2151 = vpop.xlane.xlu0 %2150
      %v2152 = vsel %vm1937, %v2106, 0.0
      %2153 = vadd.xlane.f32.xlu0 %v2152
      %v2154 = vpop.xlane.xlu0 %2153
      %v2155 = vsel %vm1937, %v2107, 0.0
      %2156 = vadd.xlane.f32.xlu0 %v2155
      %v2157 = vpop.xlane.xlu0 %2156
      %v2158 = vsel %vm1937, %v2108, 0.0
      %2159 = vadd.xlane.f32.xlu0 %v2158
      %v2160 = vpop.xlane.xlu0 %2159
      %v2161 = vsel %vm1937, %v2109, 0.0
      %2162 = vadd.xlane.f32.xlu0 %v2161
      %v2163 = vpop.xlane.xlu0 %2162
      %v2164 = vsel %vm1937, %v2110, 0.0
      %2165 = vadd.xlane.f32.xlu0 %v2164
      %v2166 = vpop.xlane.xlu0 %2165
      %v2167 = vsel %vm1937, %v2111, 0.0
      %2168 = vadd.xlane.f32.xlu0 %v2167
      %v2169 = vpop.xlane.xlu0 %2168
      %v2170 = vsel %vm1937, %v2112, 0.0
      %2171 = vadd.xlane.f32.xlu0 %v2170
      %v2172 = vpop.xlane.xlu0 %2171
      %v2173 = vsel %vm1937, %v2113, 0.0
      %2174 = vadd.xlane.f32.xlu0 %v2173
      %v2175 = vpop.xlane.xlu0 %2174
      %v2176 = vsel %vm1937, %v2114, 0.0
      %2177 = vadd.xlane.f32.xlu0 %v2176
      %v2178 = vpop.xlane.xlu0 %2177
      %v2179 = vsel %vm1937, %v2115, 0.0
      %2180 = vadd.xlane.f32.xlu0 %v2179
      %v2181 = vpop.xlane.xlu0 %2180
      %v2182 = vsel %vm1937, %v2116, 0.0
      %2183 = vadd.xlane.f32.xlu0 %v2182
      %v2184 = vpop.xlane.xlu0 %2183
      %v2185 = vsel %vm1937, %v2117, 0.0
      %2186 = vadd.xlane.f32.xlu0 %v2185
      %v2187 = vpop.xlane.xlu0 %2186
      %v2188 = vsel %vm1937, %v2118, 0.0
      %2189 = vadd.xlane.f32.xlu0 %v2188
      %v2190 = vpop.xlane.xlu0 %2189
      %v2191 = vsel %vm1937, %v2119, 0.0
      %2192 = vadd.xlane.f32.xlu0 %v2191
      %v2193 = vpop.xlane.xlu0 %2192
      %v2194 = vsel %vm1937, %v2120, 0.0
      %2195 = vadd.xlane.f32.xlu0 %v2194
      %v2196 = vpop.xlane.xlu0 %2195
      %v2197 = vsel %vm1937, %v2121, 0.0
      %2198 = vadd.xlane.f32.xlu0 %v2197
      %v2199 = vpop.xlane.xlu0 %2198
      %v2200 = vsel %vm1937, %v2122, 0.0
      %2201 = vadd.xlane.f32.xlu0 %v2200
      %v2202 = vpop.xlane.xlu0 %2201
      %v2203 = vsel %vm1937, %v2123, 0.0
      %2204 = vadd.xlane.f32.xlu0 %v2203
      %v2205 = vpop.xlane.xlu0 %2204
      %v2206 = vsel %vm1937, %v2124, 0.0
      %2207 = vadd.xlane.f32.xlu0 %v2206
      %v2208 = vpop.xlane.xlu0 %2207
      %v2209 = vsel %vm1937, %v2125, 0.0
      %2210 = vadd.xlane.f32.xlu0 %v2209
      %v2211 = vpop.xlane.xlu0 %2210
      %v2212 = vsel %vm1937, %v2126, 0.0
      %2213 = vadd.xlane.f32.xlu0 %v2212
      %v2214 = vpop.xlane.xlu0 %2213
      %v2215 = vsel %vm1937, %v2127, 0.0
      %2216 = vadd.xlane.f32.xlu0 %v2215
      %v2217 = vpop.xlane.xlu0 %2216
      %v2218 = vsel %vm1937, %v2128, 0.0
      %2219 = vadd.xlane.f32.xlu0 %v2218
      %v2220 = vpop.xlane.xlu0 %2219
      %v2221 = vsel %vm1937, %v2129, 0.0
      %2222 = vadd.xlane.f32.xlu0 %v2221
      %v2223 = vpop.xlane.xlu0 %2222
      %v2224 = vsel %vm1937, %v2130, 0.0
      %2225 = vadd.xlane.f32.xlu0 %v2224
      %v2226 = vpop.xlane.xlu0 %2225
      %v2227 = vmul.f32 %v2133, %v2034
      %v2228 = vmul.f32 %v2136, %v2034
      %v2229 = vmul.f32 %v2139, %v2034
      %v2230 = vmul.f32 %v2142, %v2034
      %v2231 = vmul.f32 %v2145, %v2034
      %v2232 = vmul.f32 %v2148, %v2034
      %v2233 = vmul.f32 %v2151, %v2034
      %v2234 = vmul.f32 %v2154, %v2034
      %v2235 = vmul.f32 %v2157, %v2034
      %v2236 = vmul.f32 %v2160, %v2034
      %v2237 = vmul.f32 %v2163, %v2034
      %v2238 = vmul.f32 %v2166, %v2034
      %v2239 = vmul.f32 %v2169, %v2034
      %v2240 = vmul.f32 %v2172, %v2034
      %v2241 = vmul.f32 %v2175, %v2034
      %v2242 = vmul.f32 %v2178, %v2034
      %v2243 = vmul.f32 %v2181, %v2034
      %v2244 = vmul.f32 %v2184, %v2034
      %v2245 = vmul.f32 %v2187, %v2034
      %v2246 = vmul.f32 %v2190, %v2034
      %v2247 = vmul.f32 %v2193, %v2034
      %v2248 = vmul.f32 %v2196, %v2034
      %v2249 = vmul.f32 %v2199, %v2034
      %v2250 = vmul.f32 %v2202, %v2034
      %v2251 = vmul.f32 %v2205, %v2034
      %v2252 = vmul.f32 %v2208, %v2034
      %v2253 = vmul.f32 %v2211, %v2034
      %v2254 = vmul.f32 %v2214, %v2034
      %v2255 = vmul.f32 %v2217, %v2034
      %v2256 = vmul.f32 %v2220, %v2034
      %v2257 = vmul.f32 %v2223, %v2034
      %v2258 = vmul.f32 %v2226, %v2034
      %v2259 = vadd.f32 %v2227, 1e-06
      %v2260 = vadd.f32 %v2228, 1e-06
      %v2261 = vadd.f32 %v2229, 1e-06
      %v2262 = vadd.f32 %v2230, 1e-06
      %v2263 = vadd.f32 %v2231, 1e-06
      %v2264 = vadd.f32 %v2232, 1e-06
      %v2265 = vadd.f32 %v2233, 1e-06
      %v2266 = vadd.f32 %v2234, 1e-06
      %v2267 = vadd.f32 %v2235, 1e-06
      %v2268 = vadd.f32 %v2236, 1e-06
      %v2269 = vadd.f32 %v2237, 1e-06
      %v2270 = vadd.f32 %v2238, 1e-06
      %v2271 = vadd.f32 %v2239, 1e-06
      %v2272 = vadd.f32 %v2240, 1e-06
      %v2273 = vadd.f32 %v2241, 1e-06
      %v2274 = vadd.f32 %v2242, 1e-06
      %v2275 = vadd.f32 %v2243, 1e-06
      %v2276 = vadd.f32 %v2244, 1e-06
      %v2277 = vadd.f32 %v2245, 1e-06
      %v2278 = vadd.f32 %v2246, 1e-06
      %v2279 = vadd.f32 %v2247, 1e-06
      %v2280 = vadd.f32 %v2248, 1e-06
      %v2281 = vadd.f32 %v2249, 1e-06
      %v2282 = vadd.f32 %v2250, 1e-06
      %v2283 = vadd.f32 %v2251, 1e-06
      %v2284 = vadd.f32 %v2252, 1e-06
      %v2285 = vadd.f32 %v2253, 1e-06
      %v2286 = vadd.f32 %v2254, 1e-06
      %v2287 = vadd.f32 %v2255, 1e-06
      %v2288 = vadd.f32 %v2256, 1e-06
      %v2289 = vadd.f32 %v2257, 1e-06
      %v2290 = vadd.f32 %v2258, 1e-06
      %v2291 = vrsqrt.pop %v2259
      %v2292 = vrsqrt.pop %v2260
      %v2293 = vrsqrt.pop %v2261
      %v2294 = vrsqrt.pop %v2262
      %v2295 = vrsqrt.pop %v2263
      %v2296 = vrsqrt.pop %v2264
      %v2297 = vrsqrt.pop %v2265
      %v2298 = vrsqrt.pop %v2266
      %v2299 = vrsqrt.pop %v2267
      %v2300 = vrsqrt.pop %v2268
      %v2301 = vrsqrt.pop %v2269
      %v2302 = vrsqrt.pop %v2270
      %v2303 = vrsqrt.pop %v2271
      %v2304 = vrsqrt.pop %v2272
      %v2305 = vrsqrt.pop %v2273
      %v2306 = vrsqrt.pop %v2274
      %v2307 = vrsqrt.pop %v2275
      %v2308 = vrsqrt.pop %v2276
      %v2309 = vrsqrt.pop %v2277
      %v2310 = vrsqrt.pop %v2278
      %v2311 = vrsqrt.pop %v2279
      %v2312 = vrsqrt.pop %v2280
      %v2313 = vrsqrt.pop %v2281
      %v2314 = vrsqrt.pop %v2282
      %v2315 = vrsqrt.pop %v2283
      %v2316 = vrsqrt.pop %v2284
      %v2317 = vrsqrt.pop %v2285
      %v2318 = vrsqrt.pop %v2286
      %v2319 = vrsqrt.pop %v2287
      %v2320 = vrsqrt.pop %v2288
      %v2321 = vrsqrt.pop %v2289
      %v2322 = vrsqrt.pop %v2290
      %v2323 = vmul.f32 %v2067, %v2291
      %v2324 = vmul.f32 %v2068, %v2292
      %v2325 = vmul.f32 %v2069, %v2293
      %v2326 = vmul.f32 %v2070, %v2294
      %v2327 = vmul.f32 %v2071, %v2295
      %v2328 = vmul.f32 %v2072, %v2296
      %v2329 = vmul.f32 %v2073, %v2297
      %v2330 = vmul.f32 %v2074, %v2298
      %v2331 = vmul.f32 %v2075, %v2299
      %v2332 = vmul.f32 %v2076, %v2300
      %v2333 = vmul.f32 %v2077, %v2301
      %v2334 = vmul.f32 %v2078, %v2302
      %v2335 = vmul.f32 %v2079, %v2303
      %v2336 = vmul.f32 %v2080, %v2304
      %v2337 = vmul.f32 %v2081, %v2305
      %v2338 = vmul.f32 %v2082, %v2306
      %v2339 = vmul.f32 %v2083, %v2307
      %v2340 = vmul.f32 %v2084, %v2308
      %v2341 = vmul.f32 %v2085, %v2309
      %v2342 = vmul.f32 %v2086, %v2310
      %v2343 = vmul.f32 %v2087, %v2311
      %v2344 = vmul.f32 %v2088, %v2312
      %v2345 = vmul.f32 %v2089, %v2313
      %v2346 = vmul.f32 %v2090, %v2314
      %v2347 = vmul.f32 %v2091, %v2315
      %v2348 = vmul.f32 %v2092, %v2316
      %v2349 = vmul.f32 %v2093, %v2317
      %v2350 = vmul.f32 %v2094, %v2318
      %v2351 = vmul.f32 %v2095, %v2319
      %v2352 = vmul.f32 %v2096, %v2320
      %v2353 = vmul.f32 %v2097, %v2321
      %v2354 = vmul.f32 %v2098, %v2322
      %2355 = vst.msk [vmem:[%s170] sm:$0xff] %vm1937, %v2323
      %2356 = vst.msk [vmem:[%s170 + $0x8] sm:$0xff] %vm1937, %v2324
      %2357 = vst.msk [vmem:[%s170 + $0x10] sm:$0xff] %vm1937, %v2325
      %2358 = vst.msk [vmem:[%s170 + $0x18] sm:$0xff] %vm1937, %v2326
      %2359 = vst.msk [vmem:[%s170 + $0x20] sm:$0xff] %vm1937, %v2327
      %2360 = vst.msk [vmem:[%s170 + $0x28] sm:$0xff] %vm1937, %v2328
      %2361 = vst.msk [vmem:[%s170 + $0x30] sm:$0xff] %vm1937, %v2329
      %2362 = vst.msk [vmem:[%s170 + $0x38] sm:$0xff] %vm1937, %v2330
      %2363 = vst.msk [vmem:[%s170 + $0x40] sm:$0xff] %vm1937, %v2331
      %2364 = vst.msk [vmem:[%s170 + $0x48] sm:$0xff] %vm1937, %v2332
      %2365 = vst.msk [vmem:[%s170 + $0x50] sm:$0xff] %vm1937, %v2333
      %2366 = vst.msk [vmem:[%s170 + $0x58] sm:$0xff] %vm1937, %v2334
      %2367 = vst.msk [vmem:[%s170 + $0x60] sm:$0xff] %vm1937, %v2335
      %2368 = vst.msk [vmem:[%s170 + $0x68] sm:$0xff] %vm1937, %v2336
      %2369 = vst.msk [vmem:[%s170 + $0x70] sm:$0xff] %vm1937, %v2337
      %2370 = vst.msk [vmem:[%s170 + $0x78] sm:$0xff] %vm1937, %v2338
      %2371 = vst.msk [vmem:[%s170 + $0x80] sm:$0xff] %vm1937, %v2339
      %2372 = vst.msk [vmem:[%s170 + $0x88] sm:$0xff] %vm1937, %v2340
      %2373 = vst.msk [vmem:[%s170 + $0x90] sm:$0xff] %vm1937, %v2341
      %2374 = vst.msk [vmem:[%s170 + $0x98] sm:$0xff] %vm1937, %v2342
      %2375 = vst.msk [vmem:[%s170 + $0xa0] sm:$0xff] %vm1937, %v2343
      %2376 = vst.msk [vmem:[%s170 + $0xa8] sm:$0xff] %vm1937, %v2344
      %2377 = vst.msk [vmem:[%s170 + $0xb0] sm:$0xff] %vm1937, %v2345
      %2378 = vst.msk [vmem:[%s170 + $0xb8] sm:$0xff] %vm1937, %v2346
      %2379 = vst.msk [vmem:[%s170 + $0xc0] sm:$0xff] %vm1937, %v2347
      %2380 = vst.msk [vmem:[%s170 + $0xc8] sm:$0xff] %vm1937, %v2348
      %2381 = vst.msk [vmem:[%s170 + $0xd0] sm:$0xff] %vm1937, %v2349
      %2382 = vst.msk [vmem:[%s170 + $0xd8] sm:$0xff] %vm1937, %v2350
      %2383 = vst.msk [vmem:[%s170 + $0xe0] sm:$0xff] %vm1937, %v2351
      %2384 = vst.msk [vmem:[%s170 + $0xe8] sm:$0xff] %vm1937, %v2352
      %2385 = vst.msk [vmem:[%s170 + $0xf0] sm:$0xff] %vm1937, %v2353
      %2386 = vst.msk [vmem:[%s170 + $0xf8] sm:$0xff] %vm1937, %v2354
      %p2387 = scmp.lt.s32.totalorder %s14, 1
      %s2388 = scalar_select %p2387, %s14, 1
      %s2389 = smul.addr %s2388, 32
      %s2390 = smul.addr %s2389, 8
      %s2391 = scalar_lea.vmem %s3, %s2390
      // Predicated region
      $region33: #{sd_cascade_res_block.2} parent=31 // pred_check
        %p2392 = pneg %p100
      $region34: #{sd_cascade_res_block.2} parent=31 // pred_check_branch
        %2394 = sbr.rel (%p2392) target = $region36
      $region35: #{sd_cascade_res_block.2} parent=31 // pred_region
        _
      $region36: #{sd_cascade_res_block.2} parent=31 // pred_fallthru
        _
    $region32: #{sd_cascade_res_block.2} parent=5 // pred_fallthru
      _
    %p2395 = scmp.le.s32.totalorder 2, %s9
    // Predicated region
    $region37: #{sd_cascade_res_block.2} parent=5 // pred_check
      %p2396 = pneg %p2395
    $region38: #{sd_cascade_res_block.2} parent=5 // pred_check_branch
      %2398 = sbr.rel (%p2396) target = $region40
    $region39: #{sd_cascade_res_block.2} parent=5 // pred_region
      %s2399 = ssub.s32 %s9, 2
      // Predicated region
      $region41: #{sd_cascade_res_block.2} parent=39 // pred_check
        %p2400 = pneg %p106
      $region42: #{sd_cascade_res_block.2} parent=39 // pred_check_branch
        %2402 = sbr.rel (%p2400) target = $region44
      $region43: #{sd_cascade_res_block.2} parent=39 // pred_region
        %p2403 = scmp.lt.s32.totalorder %s15, 1
        %s2404 = scalar_select %p2403, %s15, 1
        %s2405 = smul.addr %s2404, 32
        %s2406 = smul.addr %s2405, 8
        %s2407 = scalar_lea.vmem %s3, %s2406
      $region44: #{sd_cascade_res_block.2} parent=39 // pred_fallthru
        _
    $region40: #{sd_cascade_res_block.2} parent=5 // pred_fallthru
      _
  $region6: #{sd_cascade_res_block.2} parent=0 // loop_footer
    %s13 = sadd.s32 1, %s9
  $region7: #{sd_cascade_res_block.2} parent=0 // loop_footer_branch
    %8 = sbr.rel target = $region3
  $region8: #{sd_cascade_res_block.2} parent=0 // loop_exit
    _

// kernel: sd_cascade_res_block.3
$region0: #{sd_cascade_res_block.3}
  #allocation0 [shape = 'u32[]', space=smem, size = 0x4, offset = 0x4, fixed_abs, tag = 'smem constant byte address 0x4 - core index']
  #allocation1 [shape = 'u32[144,128]{1,0:T(1,128)}', space=vmem, size = 0x12000, scoped, tag = 'internal scratch']
  #allocation2 [shape = 'f32[256,64]{1,0:T(8,128)}', space=vmem, size = 0x20000, scoped, tag = 'scratch operand']
  #allocation3 [shape = 'f32[1,64]{1,0:T(1,128)}', space=vmem, size = 0x200, scoped, tag = 'scratch operand']
  #allocation4 [shape = 'f32[1,64]{1,0:T(1,128)}', space=vmem, size = 0x200, scoped, tag = 'scratch operand']
  %s0 = inlined_call_operand.vmem [shape: f32[2,256,16], index: 0, kind: input, shape index: {}]
  %s1 = inlined_call_operand.vmem [shape: f32[16,64], index: 1, kind: input, shape index: {}]
  %s2 = inlined_call_operand.vmem [shape: f32[1,64], index: 2, kind: input, shape index: {}]
  %s3 = inlined_call_operand.vmem [shape: f32[1,64], index: 3, kind: input, shape index: {}]
  %s4 = inlined_call_operand.vmem [shape: f32[1,64], index: 4, kind: input, shape index: {}]
  %s5 = inlined_call_operand.vmem [shape: f32[64,16], index: 5, kind: input, shape index: {}]
  %s6 = inlined_call_operand.vmem [shape: f32[1,16], index: 6, kind: input, shape index: {}]
  %s7 = inlined_call_operand.vmem [shape: f32[2,256,16], index: 7, kind: input, shape index: {}]
  %s8 = inlined_call_operand.vmem [shape: f32[2,256,16], index: 8, kind: output, shape index: {}]
  %s9 = sld [smem:[#allocation0]]
  $region81: #{sd_cascade_res_block.3} parent=0
    _
  %s11 = ssub.s32 1, %s9
  %s12 = scalar_select 0, %s11, %s9
  loop: start=0, step=1, limit=6
  $region2: #{sd_cascade_res_block.3} parent=0 // loop_pre_header
    _
  $region3: #{sd_cascade_res_block.3} parent=0 // loop_header
    %s14 = sphi 0, %s18
    %p15 = scmp.ge.s32.totalorder %s14, 6
    %s21 = sphi 0, %s40
    %s22 = sphi 0, %s36
    %s23 = sphi 0, %s32
    %s24 = sphi 0, %s21
    %s25 = sphi 0, %s22
    %s26 = sphi 0, %s23
    %s27 = sphi 0, %s24
    %s28 = sphi 0, %s25
    %s29 = sphi 0, %s26
    %s49 = sphi 0, %s51
    %s52 = sphi 0, %s49
    %s53 = sphi 0, %s52
    %s69 = sphi 0, %s53
    %s73 = sphi 0, %s73
    %s75 = sphi 0, %s73
    %s76 = sphi 0, %s75
    %s90 = sphi 0, %s76
    %s94 = sphi 0, %s94
    %s96 = sphi 0, %s94
    %s97 = sphi 0, %s96
    %s111 = sphi 0, %s97
    %s115 = sphi 0, %s115
    %s117 = sphi 0, %s115
    %s118 = sphi 0, %s117
    %s132 = sphi 0, %s118
    %s136 = sphi 0, %s136
    %s138 = sphi 0, %s136
    %s139 = sphi 0, %s138
    %s153 = sphi 0, %s139
    %s157 = sphi 0, %s157
    %s159 = sphi 0, %s157
    %s160 = sphi 0, %s159
    %s174 = sphi 0, %s160
    %s178 = sphi 0, %s178
    %s180 = sphi 0, %s178
    %s181 = sphi 0, %s180
    %s195 = sphi 0, %s181
    %s205 = sphi 0, %s207
    %s208 = sphi 0, %s205
    %s209 = sphi 0, %s208
    %s225 = sphi 0, %s209
    %s235 = sphi 0, %s237
    %s238 = sphi 0, %s235
    %s239 = sphi 0, %s238
    %s255 = sphi 0, %s239
  $region4: #{sd_cascade_res_block.3} parent=0 // loop_header_branch
    %17 = sbr.rel (%p15) target = $region8
  $region5: #{sd_cascade_res_block.3} parent=0 // loop_body
    %s19 = ssub.s32 %s14, 1
    %s20 = ssub.s32 %s14, 2
    %s30 = sadd.s32 1, %s23
    %p31 = scmp.ge.s32.totalorder %s30, 1
    %s32 = scalar_select %p31, 0, %s30
    %s33 = sadd.s32 1, %s22
    %s34 = scalar_select %p31, %s33, %s22
    %p35 = scmp.ge.s32.totalorder %s34, 2
    %s36 = scalar_select %p35, 0, %s34
    %s37 = sadd.s32 1, %s21
    %s38 = scalar_select %p35, %s37, %s21
    %p39 = scmp.ge.s32.totalorder %s38, 2
    %s40 = scalar_select %p39, 0, %s38
    %s41 = ssub.s32 1, %s22
    %s42 = smul.u32 %s41, %s23
    %s43 = ssub.s32 1, %s36
    %s44 = smul.u32 %s43, %s32
    %s45 = ssub.s32 %s21, %s40
    %s46 = ssub.s32 %s42, %s44
    %s47 = sor.u32 %s45, %s46
    %p48 = scmp.eq.s32.totalorder %s47, 0
    %s50 = sadd.s32 %s49, 1
    %s51 = scalar_select %p48, %s49, %s50
    %p54 = pneg %p48
    %p55 = scmp.eq.s32.totalorder %s14, 3
    %p56 = por %p54, %p55
    %p57 = scmp.ne.s32.totalorder %s49, %s52
    %p58 = scmp.eq.s32.totalorder %s14, 0
    %p59 = por %p57, %p58
    %p60 = scmp.ne.s32.totalorder %s49, %s52
    %p61 = scmp.eq.s32.totalorder %s19, 3
    %p62 = por %p60, %p61
    %p63 = scmp.ne.s32.totalorder %s52, %s53
    %p64 = scmp.eq.s32.totalorder %s19, 0
    %p65 = por %p63, %p64
    %p66 = scmp.ne.s32.totalorder %s52, %s53
    %p67 = scmp.eq.s32.totalorder %s20, 3
    %p68 = por %p66, %p67
    %p70 = scmp.ne.s32.totalorder %s53, %s69
    %p71 = scmp.eq.s32.totalorder %s20, 0
    %p72 = por %p70, %p71
    %s74 = sadd.s32 %s73, 1
    %p77 = scmp.eq.s32.totalorder %s14, 3
    %p78 = scmp.ne.s32.totalorder %s73, %s75
    %p79 = scmp.eq.s32.totalorder %s14, 0
    %p80 = por %p78, %p79
    %p81 = scmp.ne.s32.totalorder %s73, %s75
    %p82 = scmp.eq.s32.totalorder %s19, 3
    %p83 = por %p81, %p82
    %p84 = scmp.ne.s32.totalorder %s75, %s76
    %p85 = scmp.eq.s32.totalorder %s19, 0
    %p86 = por %p84, %p85
    %p87 = scmp.ne.s32.totalorder %s75, %s76
    %p88 = scmp.eq.s32.totalorder %s20, 3
    %p89 = por %p87, %p88
    %p91 = scmp.ne.s32.totalorder %s76, %s90
    %p92 = scmp.eq.s32.totalorder %s20, 0
    %p93 = por %p91, %p92
    %s95 = sadd.s32 %s94, 1
    %p98 = scmp.eq.s32.totalorder %s14, 3
    %p99 = scmp.ne.s32.totalorder %s94, %s96
    %p100 = scmp.eq.s32.totalorder %s14, 0
    %p101 = por %p99, %p100
    %p102 = scmp.ne.s32.totalorder %s94, %s96
    %p103 = scmp.eq.s32.totalorder %s19, 3
    %p104 = por %p102, %p103
    %p105 = scmp.ne.s32.totalorder %s96, %s97
    %p106 = scmp.eq.s32.totalorder %s19, 0
    %p107 = por %p105, %p106
    %p108 = scmp.ne.s32.totalorder %s96, %s97
    %p109 = scmp.eq.s32.totalorder %s20, 3
    %p110 = por %p108, %p109
    %p112 = scmp.ne.s32.totalorder %s97, %s111
    %p113 = scmp.eq.s32.totalorder %s20, 0
    %p114 = por %p112, %p113
    %s116 = sadd.s32 %s115, 1
    %p119 = scmp.eq.s32.totalorder %s14, 3
    %p120 = scmp.ne.s32.totalorder %s115, %s117
    %p121 = scmp.eq.s32.totalorder %s14, 0
    %p122 = por %p120, %p121
    %p123 = scmp.ne.s32.totalorder %s115, %s117
    %p124 = scmp.eq.s32.totalorder %s19, 3
    %p125 = por %p123, %p124
    %p126 = scmp.ne.s32.totalorder %s117, %s118
    %p127 = scmp.eq.s32.totalorder %s19, 0
    %p128 = por %p126, %p127
    %p129 = scmp.ne.s32.totalorder %s117, %s118
    %p130 = scmp.eq.s32.totalorder %s20, 3
    %p131 = por %p129, %p130
    %p133 = scmp.ne.s32.totalorder %s118, %s132
    %p134 = scmp.eq.s32.totalorder %s20, 0
    %p135 = por %p133, %p134
    %s137 = sadd.s32 %s136, 1
    %p140 = scmp.eq.s32.totalorder %s14, 3
    %p141 = scmp.ne.s32.totalorder %s136, %s138
    %p142 = scmp.eq.s32.totalorder %s14, 0
    %p143 = por %p141, %p142
    %p144 = scmp.ne.s32.totalorder %s136, %s138
    %p145 = scmp.eq.s32.totalorder %s19, 3
    %p146 = por %p144, %p145
    %p147 = scmp.ne.s32.totalorder %s138, %s139
    %p148 = scmp.eq.s32.totalorder %s19, 0
    %p149 = por %p147, %p148
    %p150 = scmp.ne.s32.totalorder %s138, %s139
    %p151 = scmp.eq.s32.totalorder %s20, 3
    %p152 = por %p150, %p151
    %p154 = scmp.ne.s32.totalorder %s139, %s153
    %p155 = scmp.eq.s32.totalorder %s20, 0
    %p156 = por %p154, %p155
    %s158 = sadd.s32 %s157, 1
    %p161 = scmp.eq.s32.totalorder %s14, 3
    %p162 = scmp.ne.s32.totalorder %s157, %s159
    %p163 = scmp.eq.s32.totalorder %s14, 0
    %p164 = por %p162, %p163
    %p165 = scmp.ne.s32.totalorder %s157, %s159
    %p166 = scmp.eq.s32.totalorder %s19, 3
    %p167 = por %p165, %p166
    %p168 = scmp.ne.s32.totalorder %s159, %s160
    %p169 = scmp.eq.s32.totalorder %s19, 0
    %p170 = por %p168, %p169
    %p171 = scmp.ne.s32.totalorder %s159, %s160
    %p172 = scmp.eq.s32.totalorder %s20, 3
    %p173 = por %p171, %p172
    %p175 = scmp.ne.s32.totalorder %s160, %s174
    %p176 = scmp.eq.s32.totalorder %s20, 0
    %p177 = por %p175, %p176
    %s179 = sadd.s32 %s178, 1
    %p182 = scmp.eq.s32.totalorder %s14, 3
    %p183 = scmp.ne.s32.totalorder %s178, %s180
    %p184 = scmp.eq.s32.totalorder %s14, 0
    %p185 = por %p183, %p184
    %p186 = scmp.ne.s32.totalorder %s178, %s180
    %p187 = scmp.eq.s32.totalorder %s19, 3
    %p188 = por %p186, %p187
    %p189 = scmp.ne.s32.totalorder %s180, %s181
    %p190 = scmp.eq.s32.totalorder %s19, 0
    %p191 = por %p189, %p190
    %p192 = scmp.ne.s32.totalorder %s180, %s181
    %p193 = scmp.eq.s32.totalorder %s20, 3
    %p194 = por %p192, %p193
    %p196 = scmp.ne.s32.totalorder %s181, %s195
    %p197 = scmp.eq.s32.totalorder %s20, 0
    %p198 = por %p196, %p197
    %s199 = smul.u32 %s22, %s23
    %s200 = smul.u32 %s36, %s32
    %s201 = ssub.s32 %s21, %s40
    %s202 = ssub.s32 %s199, %s200
    %s203 = sor.u32 %s201, %s202
    %p204 = scmp.eq.s32.totalorder %s203, 0
    %s206 = sadd.s32 %s205, 1
    %s207 = scalar_select %p204, %s205, %s206
    %p210 = pneg %p204
    %p211 = scmp.eq.s32.totalorder %s14, 3
    %p212 = por %p210, %p211
    %p213 = scmp.ne.s32.totalorder %s205, %s208
    %p214 = scmp.eq.s32.totalorder %s14, 0
    %p215 = por %p213, %p214
    %p216 = scmp.ne.s32.totalorder %s205, %s208
    %p217 = scmp.eq.s32.totalorder %s19, 3
    %p218 = por %p216, %p217
    %p219 = scmp.ne.s32.totalorder %s208, %s209
    %p220 = scmp.eq.s32.totalorder %s19, 0
    %p221 = por %p219, %p220
    %p222 = scmp.ne.s32.totalorder %s208, %s209
    %p223 = scmp.eq.s32.totalorder %s20, 3
    %p224 = por %p222, %p223
    %p226 = scmp.ne.s32.totalorder %s209, %s225
    %p227 = scmp.eq.s32.totalorder %s20, 0
    %p228 = por %p226, %p227
    %s229 = smul.u32 %s22, %s23
    %s230 = smul.u32 %s36, %s32
    %s231 = ssub.s32 %s21, %s40
    %s232 = ssub.s32 %s229, %s230
    %s233 = sor.u32 %s231, %s232
    %p234 = scmp.eq.s32.totalorder %s233, 0
    %s236 = sadd.s32 %s235, 1
    %s237 = scalar_select %p234, %s235, %s236
    %p240 = pneg %p234
    %p241 = scmp.eq.s32.totalorder %s14, 3
    %p242 = por %p240, %p241
    %p243 = scmp.ne.s32.totalorder %s235, %s238
    %p244 = scmp.eq.s32.totalorder %s14, 0
    %p245 = por %p243, %p244
    %p246 = scmp.ne.s32.totalorder %s235, %s238
    %p247 = scmp.eq.s32.totalorder %s19, 3
    %p248 = por %p246, %p247
    %p249 = scmp.ne.s32.totalorder %s238, %s239
    %p250 = scmp.eq.s32.totalorder %s19, 0
    %p251 = por %p249, %p250
    %p252 = scmp.ne.s32.totalorder %s238, %s239
    %p253 = scmp.eq.s32.totalorder %s20, 3
    %p254 = por %p252, %p253
    %p256 = scmp.ne.s32.totalorder %s239, %s255
    %p257 = scmp.eq.s32.totalorder %s20, 0
    %p258 = por %p256, %p257
    %p259 = scmp.le.s32.totalorder 1, %s14
    %p260 = scmp.lt.s32.totalorder %s14, 5
    %p261 = pnand %p259, %p260
    %p262 = pneg %p261
    // Predicated region
    $region9: #{sd_cascade_res_block.3} parent=5 // pred_check
      _
    $region10: #{sd_cascade_res_block.3} parent=5 // pred_check_branch
      %264 = sbr.rel (%p261) target = $region12
    $region11: #{sd_cascade_res_block.3} parent=5 // pred_region
      %s265 = ssub.s32 %s14, 1
      // Predicated region
      $region13: #{sd_cascade_res_block.3} parent=11 // pred_check
        %p266 = pneg %p86
      $region14: #{sd_cascade_res_block.3} parent=11 // pred_check_branch
        %268 = sbr.rel (%p266) target = $region16
      $region15: #{sd_cascade_res_block.3} parent=11 // pred_region
        _
      $region16: #{sd_cascade_res_block.3} parent=11 // pred_fallthru
        _
      // Predicated region
      $region17: #{sd_cascade_res_block.3} parent=11 // pred_check
        %p269 = pneg %p107
      $region18: #{sd_cascade_res_block.3} parent=11 // pred_check_branch
        %271 = sbr.rel (%p269) target = $region20
      $region19: #{sd_cascade_res_block.3} parent=11 // pred_region
        _
      $region20: #{sd_cascade_res_block.3} parent=11 // pred_fallthru
        _
      // Predicated region
      $region21: #{sd_cascade_res_block.3} parent=11 // pred_check
        %p272 = pneg %p128
      $region22: #{sd_cascade_res_block.3} parent=11 // pred_check_branch
        %274 = sbr.rel (%p272) target = $region24
      $region23: #{sd_cascade_res_block.3} parent=11 // pred_region
        _
      $region24: #{sd_cascade_res_block.3} parent=11 // pred_fallthru
        _
      // Predicated region
      $region25: #{sd_cascade_res_block.3} parent=11 // pred_check
        %p275 = pneg %p149
      $region26: #{sd_cascade_res_block.3} parent=11 // pred_check_branch
        %277 = sbr.rel (%p275) target = $region28
      $region27: #{sd_cascade_res_block.3} parent=11 // pred_region
        _
      $region28: #{sd_cascade_res_block.3} parent=11 // pred_fallthru
        _
      // Predicated region
      $region29: #{sd_cascade_res_block.3} parent=11 // pred_check
        %p278 = pneg %p170
      $region30: #{sd_cascade_res_block.3} parent=11 // pred_check_branch
        %280 = sbr.rel (%p278) target = $region32
      $region31: #{sd_cascade_res_block.3} parent=11 // pred_region
        _
      $region32: #{sd_cascade_res_block.3} parent=11 // pred_fallthru
        _
      // Predicated region
      $region33: #{sd_cascade_res_block.3} parent=11 // pred_check
        %p281 = pneg %p191
      $region34: #{sd_cascade_res_block.3} parent=11 // pred_check_branch
        %283 = sbr.rel (%p281) target = $region36
      $region35: #{sd_cascade_res_block.3} parent=11 // pred_region
        _
      $region36: #{sd_cascade_res_block.3} parent=11 // pred_fallthru
        _
    $region12: #{sd_cascade_res_block.3} parent=5 // pred_fallthru
      _
    %p284 = scmp.lt.s32.totalorder %s14, 4
    // Predicated region
    $region37: #{sd_cascade_res_block.3} parent=5 // pred_check
      %p285 = pneg %p284
    $region38: #{sd_cascade_res_block.3} parent=5 // pred_check_branch
      %287 = sbr.rel (%p285) target = $region40
    $region39: #{sd_cascade_res_block.3} parent=5 // pred_region
      // Predicated region
      $region41: #{sd_cascade_res_block.3} parent=39 // pred_check
        %p288 = pneg %p59
      $region42: #{sd_cascade_res_block.3} parent=39 // pred_check_branch
        %290 = sbr.rel (%p288) target = $region44
      $region43: #{sd_cascade_res_block.3} parent=39 // pred_region
        %s291 = ssub.s32 1, %s22
        %s292 = smul.u32 %s291, %s23
        %s293 = smul.u32 32, %s292
        %p294 = scmp.lt.s32.totalorder %s21, 1
        %s295 = scalar_select %p294, %s21, 1
        %p296 = scmp.lt.s32.totalorder %s293, 31
        %s297 = scalar_select %p296, %s293, 31
        %s298 = smul.addr %s295, 32
        %s299 = sadd.s32 %s297, %s298
        %s300 = smul.addr %s299, 8
        %s301 = scalar_lea.vmem %s0, %s300
        %s302 = ssub.s32 1, %s22
        %s303 = smul.u32 %s302, %s23
        %s304 = smul.u32 32, %s303
      $region44: #{sd_cascade_res_block.3} parent=39 // pred_fallthru
        _
      // Predicated region
      $region45: #{sd_cascade_res_block.3} parent=39 // pred_check
        %p305 = pneg %p215
      $region46: #{sd_cascade_res_block.3} parent=39 // pred_check_branch
        %307 = sbr.rel (%p305) target = $region48
      $region47: #{sd_cascade_res_block.3} parent=39 // pred_region
        %s308 = smul.u32 %s22, %s23
        %s309 = smul.u32 32, %s308
        %p310 = scmp.lt.s32.totalorder %s21, 1
        %s311 = scalar_select %p310, %s21, 1
        %p312 = scmp.lt.s32.totalorder %s309, 31
        %s313 = scalar_select %p312, %s309, 31
        %s314 = smul.addr %s311, 32
        %s315 = sadd.s32 %s313, %s314
        %s316 = smul.addr %s315, 8
        %s317 = scalar_lea.vmem %s7, %s316
        %s318 = smul.u32 %s22, %s23
        %s319 = smul.u32 32, %s318
      $region48: #{sd_cascade_res_block.3} parent=39 // pred_fallthru
        _
    $region40: #{sd_cascade_res_block.3} parent=5 // pred_fallthru
      _
    %p320 = scmp.le.s32.totalorder 1, %s14
    %p321 = scmp.lt.s32.totalorder %s14, 5
    %p322 = pnand %p320, %p321
    %p323 = pneg %p322
    // Predicated region
    $region49: #{sd_cascade_res_block.3} parent=5 // pred_check
      _
    $region50: #{sd_cascade_res_block.3} parent=5 // pred_check_branch
      %325 = sbr.rel (%p322) target = $region52
    $region51: #{sd_cascade_res_block.3} parent=5 // pred_region
      %s326 = ssub.s32 %s14, 1
      %s327 = ssub.s32 1, %s25
      %s328 = smul.u32 %s327, %s26
      %s329 = smul.u32 32, %s328
      %p330 = scmp.lt.s32.totalorder %s24, 1
      %s331 = scalar_select %p330, %s24, 1
      %p332 = scmp.lt.s32.totalorder %s329, 31
      %s333 = scalar_select %p332, %s329, 31
      %s334 = smul.addr %s331, 32
      %s335 = sadd.s32 %s333, %s334
      %s336 = smul.addr %s335, 8
      %s337 = scalar_lea.vmem %s0, %s336
      %p338 = pneg %p65
      %p339 = pneg %p62
      %p340 = pneg %p86
      %p341 = pneg %p83
      %p342 = pneg %p107
      %p343 = pneg %p104
      %p344 = pneg %p128
      %p345 = pneg %p125
      %p346 = pneg %p149
      %p347 = pneg %p146
      %p348 = pneg %p170
      %p349 = pneg %p167
      %p350 = pneg %p191
      %p351 = pneg %p188
      %s352 = smul.u32 %s25, %s26
      %s353 = smul.u32 32, %s352
      %p354 = scmp.lt.s32.totalorder %s24, 1
      %s355 = scalar_select %p354, %s24, 1
      %p356 = scmp.lt.s32.totalorder %s353, 31
      %s357 = scalar_select %p356, %s353, 31
      %s358 = smul.addr %s355, 32
      %s359 = sadd.s32 %s357, %s358
      %s360 = smul.addr %s359, 8
      %s361 = scalar_lea.vmem %s7, %s360
      %p362 = pneg %p221
      %p363 = pneg %p218
      %p364 = pneg %p251
      %p365 = pneg %p248
      %s366 = smul.u32 %s25, %s26
      %s367 = smul.u32 32, %s366
      %p368 = scmp.lt.s32.totalorder %s24, 1
      %s369 = scalar_select %p368, %s24, 1
      %p370 = scmp.lt.s32.totalorder %s367, 31
      %s371 = scalar_select %p370, %s367, 31
      %s372 = smul.addr %s369, 32
      %s373 = sadd.s32 %s371, %s372
      %s374 = smul.addr %s373, 8
      %s375 = scalar_lea.vmem %s8, %s374
      %s376 = ssub.s32 1, %s25
      %s377 = smul.u32 %s376, %s26
      %s378 = smul.u32 32, %s377
      %p379 = scmp.lt.s32.totalorder %s24, 1
      %s380 = scalar_select %p379, %s24, 1
      %p381 = scmp.lt.s32.totalorder %s378, 31
      %s382 = scalar_select %p381, %s378, 31
      %s383 = smul.addr %s380, 32
      %s384 = sadd.s32 %s382, %s383
      %s385 = smul.addr %s384, 8
      %s386 = scalar_lea.vmem %s0, %s385
      %s387 = ssub.s32 1, %s25
      %s388 = smul.u32 %s387, %s26
      %s389 = smul.u32 32, %s388
      %s390 = smul.u32 %s25, %s26
      %s391 = smul.u32 32, %s390
      %p392 = scmp.lt.s32.totalorder %s24, 1
      %s393 = scalar_select %p392, %s24, 1
      %p394 = scmp.lt.s32.totalorder %s391, 31
      %s395 = scalar_select %p394, %s391, 31
      %s396 = smul.addr %s393, 32
      %s397 = sadd.s32 %s395, %s396
      %s398 = smul.addr %s397, 8
      %s399 = scalar_lea.vmem %s7, %s398
      %s400 = smul.u32 %s25, %s26
      %s401 = smul.u32 32, %s400
      %s402 = smul.u32 %s25, %s26
      %s403 = smul.u32 32, %s402
      %p404 = scmp.lt.s32.totalorder %s24, 1
      %s405 = scalar_select %p404, %s24, 1
      %p406 = scmp.lt.s32.totalorder %s403, 31
      %s407 = scalar_select %p406, %s403, 31
      %s408 = smul.addr %s405, 32
      %s409 = sadd.s32 %s407, %s408
      %s410 = smul.addr %s409, 8
      %s411 = scalar_lea.vmem %s8, %s410
      %s412 = smul.u32 %s25, %s26
      %s413 = smul.u32 32, %s412
      %s414 = smul.u32 %s26, 256
      %p415 = scmp.eq.s32.totalorder %s25, 0
      // Predicated region
      $region53: #{sd_cascade_res_block.3} parent=51 // pred_check
        %p416 = pneg %p415
      $region54: #{sd_cascade_res_block.3} parent=51 // pred_check_branch
        %418 = sbr.rel (%p416) target = $region56
      $region55: #{sd_cascade_res_block.3} parent=51 // pred_region
        %p419 = scmp.eq.s32.totalorder %s26, 0
        // Predicated region
        $region57: #{sd_cascade_res_block.3} parent=55 // pred_check
          %p420 = pneg %p419
        $region58: #{sd_cascade_res_block.3} parent=55 // pred_check_branch
          %422 = sbr.rel (%p420) target = $region60
        $region59: #{sd_cascade_res_block.3} parent=55 // pred_region
          %vm423 = vcmask 516096
          %424 = vst.msk [vmem:[#allocation3] sm:$0x1] %vm423, 0.0
        $region60: #{sd_cascade_res_block.3} parent=55 // pred_fallthru
          _
        %v425 = vld [vmem:[%s386] sm:$0xff]
        %v426 = vld [vmem:[%s386 + $0x8] sm:$0xff]
        %v427 = vld [vmem:[%s386 + $0x10] sm:$0xff]
        %v428 = vld [vmem:[%s386 + $0x18] sm:$0xff]
        %v429 = vld [vmem:[%s386 + $0x20] sm:$0xff]
        %v430 = vld [vmem:[%s386 + $0x28] sm:$0xff]
        %v431 = vld [vmem:[%s386 + $0x30] sm:$0xff]
        %v432 = vld [vmem:[%s386 + $0x38] sm:$0xff]
        %v433 = vld [vmem:[%s386 + $0x40] sm:$0xff]
        %v434 = vld [vmem:[%s386 + $0x48] sm:$0xff]
        %v435 = vld [vmem:[%s386 + $0x50] sm:$0xff]
        %v436 = vld [vmem:[%s386 + $0x58] sm:$0xff]
        %v437 = vld [vmem:[%s386 + $0x60] sm:$0xff]
        %v438 = vld [vmem:[%s386 + $0x68] sm:$0xff]
        %v439 = vld [vmem:[%s386 + $0x70] sm:$0xff]
        %v440 = vld [vmem:[%s386 + $0x78] sm:$0xff]
        %v441 = vld [vmem:[%s386 + $0x80] sm:$0xff]
        %v442 = vld [vmem:[%s386 + $0x88] sm:$0xff]
        %v443 = vld [vmem:[%s386 + $0x90] sm:$0xff]
        %v444 = vld [vmem:[%s386 + $0x98] sm:$0xff]
        %v445 = vld [vmem:[%s386 + $0xa0] sm:$0xff]
        %v446 = vld [vmem:[%s386 + $0xa8] sm:$0xff]
        %v447 = vld [vmem:[%s386 + $0xb0] sm:$0xff]
        %v448 = vld [vmem:[%s386 + $0xb8] sm:$0xff]
        %v449 = vld [vmem:[%s386 + $0xc0] sm:$0xff]
        %v450 = vld [vmem:[%s386 + $0xc8] sm:$0xff]
        %v451 = vld [vmem:[%s386 + $0xd0] sm:$0xff]
        %v452 = vld [vmem:[%s386 + $0xd8] sm:$0xff]
        %v453 = vld [vmem:[%s386 + $0xe0] sm:$0xff]
        %v454 = vld [vmem:[%s386 + $0xe8] sm:$0xff]
        %v455 = vld [vmem:[%s386 + $0xf0] sm:$0xff]
        %v456 = vld [vmem:[%s386 + $0xf8] sm:$0xff]
        %v457 = vld [vmem:[%s1] sm:$0xff]
        %v458 = vld [vmem:[%s1 + $0x8] sm:$0xff]
        %v459 = vld [vmem:[%s2] sm:$0x1]
        %v461 = vlaneseq
        %v462 = vshrl.u32 %v461, 7
        %v463 = vsub.s32 0, %v462
        %v464 = vrot.slane %v459, %v463
        %vm466 = vcmask 130048
        %v468 = vsel %vm466, %v425, 0
        %v471 = vsel %vm466, %v426, 0
        %v474 = vsel %vm466, %v427, 0
        %v477 = vsel %vm466, %v428, 0
        %v480 = vsel %vm466, %v429, 0
        %v483 = vsel %vm466, %v430, 0
        %v486 = vsel %vm466, %v431, 0
        %v489 = vsel %vm466, %v432, 0
        %v492 = vsel %vm466, %v433, 0
        %v495 = vsel %vm466, %v434, 0
        %v498 = vsel %vm466, %v435, 0
        %v501 = vsel %vm466, %v436, 0
        %v504 = vsel %vm466, %v437, 0
        %v507 = vsel %vm466, %v438, 0
        %v510 = vsel %vm466, %v439, 0
        %v513 = vsel %vm466, %v440, 0
        %v516 = vsel %vm466, %v441, 0
        %v519 = vsel %vm466, %v442, 0
        %v522 = vsel %vm466, %v443, 0
        %v525 = vsel %vm466, %v444, 0
        %v528 = vsel %vm466, %v445, 0
        %v531 = vsel %vm466, %v446, 0
        %v534 = vsel %vm466, %v447, 0
        %v537 = vsel %vm466, %v448, 0
        %v540 = vsel %vm466, %v449, 0
        %v543 = vsel %vm466, %v450, 0
        %v546 = vsel %vm466, %v451, 0
        %v549 = vsel %vm466, %v452, 0
        %v552 = vsel %vm466, %v453, 0
        %v555 = vsel %vm466, %v454, 0
        %v558 = vsel %vm466, %v455, 0
        %v561 = vsel %vm466, %v456, 0
        %563 = vmatprep.subr.mxu0 0.0
        %564 = vmatpush1.msra.mxu0 %v457
        %565 = vmatprep.subr.mxu0 0.0
        %566 = vmatpush1.msra.mxu0 %v458
        %567 = vmatprep.subr.mxu0 0.0
        %568 = vmatpush1.msra.mxu0 0.0
        %569 = vmatprep.subr.mxu0 0.0
        %570 = vmatpush1.msra.mxu0 0.0
        %571 = vmatprep.subr.mxu0 0.0
        %572 = vmatpush1.msra.mxu0 0.0
        %573 = vmatprep.subr.mxu0 0.0
        %574 = vmatpush1.msra.mxu0 0.0
        %575 = vmatprep.subr.mxu0 0.0
        %576 = vmatpush1.msra.mxu0 0.0
        %577 = vmatprep.subr.mxu0 0.0
        %578 = vmatpush1.msra.mxu0 0.0
        %579 = vmatprep.subr.mxu0 0.0
        %580 = vmatpush1.msra.mxu0 0.0
        %581 = vmatprep.subr.mxu0 0.0
        %582 = vmatpush1.msra.mxu0 0.0
        %583 = vmatprep.subr.mxu0 0.0
        %584 = vmatpush1.msra.mxu0 0.0
        %585 = vmatprep.subr.mxu0 0.0
        %586 = vmatpush1.msra.mxu0 0.0
        %587 = vmatprep.subr.mxu0 0.0
        %588 = vmatpush1.msra.mxu0 0.0
        %589 = vmatprep.subr.mxu0 0.0
        %590 = vmatpush1.msra.mxu0 0.0
        %591 = vmatprep.subr.mxu0 0.0
        %592 = vmatpush1.msra.mxu0 0.0
        %593 = vmatprep.subr.mxu0 0.0
        %594 = vmatpush1.msra.mxu0 0.0
        %595 = vmatprep.subr.mxu0 0.0
        %596 = vmatpush1.msra.mxu0 0.0
        %597 = vmatprep.subr.mxu0 0.0
        %598 = vmatpush1.msra.mxu0 0.0
        %599 = vmatprep.subr.mxu0 0.0
        %600 = vmatpush1.msra.mxu0 0.0
        %601 = vmatprep.subr.mxu0 0.0
        %602 = vmatpush1.msra.mxu0 0.0
        %603 = vmatprep.subr.mxu0 0.0
        %604 = vmatpush1.msra.mxu0 0.0
        %605 = vmatprep.subr.mxu0 0.0
        %606 = vmatpush1.msra.mxu0 0.0
        %607 = vmatprep.subr.mxu0 0.0
        %608 = vmatpush1.msra.mxu0 0.0
        %609 = vmatprep.subr.mxu0 0.0
        %610 = vmatpush1.msra.mxu0 0.0
        %611 = vmatprep.subr.mxu0 0.0
        %612 = vmatpush1.msra.mxu0 0.0
        %613 = vmatprep.subr.mxu0 0.0
        %614 = vmatpush1.msra.mxu0 0.0
        %615 = vmatprep.subr.mxu0 0.0
        %616 = vmatpush1.msra.mxu0 0.0
        %617 = vmatprep.subr.mxu0 0.0
        %618 = vmatpush1.msra.mxu0 0.0
        %619 = vmatprep.subr.mxu0 0.0
        %620 = vmatpush1.msra.mxu0 0.0
        %621 = vmatprep.subr.mxu0 0.0
        %622 = vmatpush1.msra.mxu0 0.0
        %623 = vmatprep.subr.mxu0 0.0
        %624 = vmatpush1.msra.mxu0 0.0
        %625 = vmatprep.subr.mxu0 0.0
        %626 = vmatpush1.msra.mxu0 0.0
        %627 = vmatprep.mubr.f32.mxu0 0.0
        %628 = vmatmul.mubr.f32.gmra.mrb[0].mxu0 %v468
        %v629 = vpop.f32.mrb[0].mxu0
        %v630 = vadd.f32 %v464, %v629
        %v631 = vpop.f32.mrb[0].mxu0
        %632 = vmatprep.mubr.f32.mxu0 0.0
        %633 = vmatmul.mubr.f32.gmra.mrb[0].mxu0 %v471
        %v634 = vpop.f32.mrb[0].mxu0
        %v635 = vadd.f32 %v464, %v634
        %v636 = vpop.f32.mrb[0].mxu0
        %637 = vmatprep.mubr.f32.mxu0 0.0
        %638 = vmatmul.mubr.f32.gmra.mrb[0].mxu0 %v474
        %v639 = vpop.f32.mrb[0].mxu0
        %v640 = vadd.f32 %v464, %v639
        %v641 = vpop.f32.mrb[0].mxu0
        %642 = vmatprep.mubr.f32.mxu0 0.0
        %643 = vmatmul.mubr.f32.gmra.mrb[0].mxu0 %v477
        %v644 = vpop.f32.mrb[0].mxu0
        %v645 = vadd.f32 %v464, %v644
        %v646 = vpop.f32.mrb[0].mxu0
        %647 = vmatprep.mubr.f32.mxu0 0.0
        %648 = vmatmul.mubr.f32.gmra.mrb[0].mxu0 %v480
        %v649 = vpop.f32.mrb[0].mxu0
        %v650 = vadd.f32 %v464, %v649
        %v651 = vpop.f32.mrb[0].mxu0
        %652 = vmatprep.mubr.f32.mxu0 0.0
        %653 = vmatmul.mubr.f32.gmra.mrb[0].mxu0 %v483
        %v654 = vpop.f32.mrb[0].mxu0
        %v655 = vadd.f32 %v464, %v654
        %v656 = vpop.f32.mrb[0].mxu0
        %657 = vmatprep.mubr.f32.mxu0 0.0
        %658 = vmatmul.mubr.f32.gmra.mrb[0].mxu0 %v486
        %v659 = vpop.f32.mrb[0].mxu0
        %v660 = vadd.f32 %v464, %v659
        %v661 = vpop.f32.mrb[0].mxu0
        %662 = vmatprep.mubr.f32.mxu0 0.0
        %663 = vmatmul.mubr.f32.gmra.mrb[0].mxu0 %v489
        %v664 = vpop.f32.mrb[0].mxu0
        %v665 = vadd.f32 %v464, %v664
        %v666 = vpop.f32.mrb[0].mxu0
        %667 = vmatprep.mubr.f32.mxu0 0.0
        %668 = vmatmul.mubr.f32.gmra.mrb[0].mxu0 %v492
        %v669 = vpop.f32.mrb[0].mxu0
        %v670 = vadd.f32 %v464, %v669
        %v671 = vpop.f32.mrb[0].mxu0
        %672 = vmatprep.mubr.f32.mxu0 0.0
        %673 = vmatmul.mubr.f32.gmra.mrb[0].mxu0 %v495
        %v674 = vpop.f32.mrb[0].mxu0
        %v675 = vadd.f32 %v464, %v674
        %v676 = vpop.f32.mrb[0].mxu0
        %677 = vmatprep.mubr.f32.mxu0 0.0
        %678 = vmatmul.mubr.f32.gmra.mrb[0].mxu0 %v498
        %v679 = vpop.f32.mrb[0].mxu0
        %v680 = vadd.f32 %v464, %v679
        %v681 = vpop.f32.mrb[0].mxu0
        %682 = vmatprep.mubr.f32.mxu0 0.0
        %683 = vmatmul.mubr.f32.gmra.mrb[0].mxu0 %v501
        %v684 = vpop.f32.mrb[0].mxu0
        %v685 = vadd.f32 %v464, %v684
        %v686 = vpop.f32.mrb[0].mxu0
        %687 = vmatprep.mubr.f32.mxu0 0.0
        %688 = vmatmul.mubr.f32.gmra.mrb[0].mxu0 %v504
        %v689 = vpop.f32.mrb[0].mxu0
        %v690 = vadd.f32 %v464, %v689
        %v691 = vpop.f32.mrb[0].mxu0
        %692 = vmatprep.mubr.f32.mxu0 0.0
        %693 = vmatmul.mubr.f32.gmra.mrb[0].mxu0 %v507
        %v694 = vpop.f32.mrb[0].mxu0
        %v695 = vadd.f32 %v464, %v694
        %v696 = vpop.f32.mrb[0].mxu0
        %697 = vmatprep.mubr.f32.mxu0 0.0
        %698 = vmatmul.mubr.f32.gmra.mrb[0].mxu0 %v510
        %v699 = vpop.f32.mrb[0].mxu0
        %v700 = vadd.f32 %v464, %v699
        %v701 = vpop.f32.mrb[0].mxu0
        %702 = vmatprep.mubr.f32.mxu0 0.0
        %703 = vmatmul.mubr.f32.gmra.mrb[0].mxu0 %v513
        %v704 = vpop.f32.mrb[0].mxu0
        %v705 = vadd.f32 %v464, %v704
        %v706 = vpop.f32.mrb[0].mxu0
        %707 = vmatprep.mubr.f32.mxu0 0.0
        %708 = vmatmul.mubr.f32.gmra.mrb[0].mxu0 %v516
        %v709 = vpop.f32.mrb[0].mxu0
        %v710 = vadd.f32 %v464, %v709
        %v711 = vpop.f32.mrb[0].mxu0
        %712 = vmatprep.mubr.f32.mxu0 0.0
        %713 = vmatmul.mubr.f32.gmra.mrb[0].mxu0 %v519
        %v714 = vpop.f32.mrb[0].mxu0
        %v715 = vadd.f32 %v464, %v714
        %v716 = vpop.f32.mrb[0].mxu0
        %717 = vmatprep.mubr.f32.mxu0 0.0
        %718 = vmatmul.mubr.f32.gmra.mrb[0].mxu0 %v522
        %v719 = vpop.f32.mrb[0].mxu0
        %v720 = vadd.f32 %v464, %v719
        %v721 = vpop.f32.mrb[0].mxu0
        %722 = vmatprep.mubr.f32.mxu0 0.0
        %723 = vmatmul.mubr.f32.gmra.mrb[0].mxu0 %v525
        %v724 = vpop.f32.mrb[0].mxu0
        %v725 = vadd.f32 %v464, %v724
        %v726 = vpop.f32.mrb[0].mxu0
        %727 = vmatprep.mubr.f32.mxu0 0.0
        %728 = vmatmul.mubr.f32.gmra.mrb[0].mxu0 %v528
        %v729 = vpop.f32.mrb[0].mxu0
        %v730 = vadd.f32 %v464, %v729
        %v731 = vpop.f32.mrb[0].mxu0
        %732 = vmatprep.mubr.f32.mxu0 0.0
        %733 = vmatmul.mubr.f32.gmra.mrb[0].mxu0 %v531
        %v734 = vpop.f32.mrb[0].mxu0
        %v735 = vadd.f32 %v464, %v734
        %v736 = vpop.f32.mrb[0].mxu0
        %737 = vmatprep.mubr.f32.mxu0 0.0
        %738 = vmatmul.mubr.f32.gmra.mrb[0].mxu0 %v534
        %v739 = vpop.f32.mrb[0].mxu0
        %v740 = vadd.f32 %v464, %v739
        %v741 = vpop.f32.mrb[0].mxu0
        %742 = vmatprep.mubr.f32.mxu0 0.0
        %743 = vmatmul.mubr.f32.gmra.mrb[0].mxu0 %v537
        %v744 = vpop.f32.mrb[0].mxu0
        %v745 = vadd.f32 %v464, %v744
        %v746 = vpop.f32.mrb[0].mxu0
        %747 = vmatprep.mubr.f32.mxu0 0.0
        %748 = vmatmul.mubr.f32.gmra.mrb[0].mxu0 %v540
        %v749 = vpop.f32.mrb[0].mxu0
        %v750 = vadd.f32 %v464, %v749
        %v751 = vpop.f32.mrb[0].mxu0
        %752 = vmatprep.mubr.f32.mxu0 0.0
        %753 = vmatmul.mubr.f32.gmra.mrb[0].mxu0 %v543
        %v754 = vpop.f32.mrb[0].mxu0
        %v755 = vadd.f32 %v464, %v754
        %v756 = vpop.f32.mrb[0].mxu0
        %757 = vmatprep.mubr.f32.mxu0 0.0
        %758 = vmatmul.mubr.f32.gmra.mrb[0].mxu0 %v546
        %v759 = vpop.f32.mrb[0].mxu0
        %v760 = vadd.f32 %v464, %v759
        %v761 = vpop.f32.mrb[0].mxu0
        %762 = vmatprep.mubr.f32.mxu0 0.0
        %763 = vmatmul.mubr.f32.gmra.mrb[0].mxu0 %v549
        %v764 = vpop.f32.mrb[0].mxu0
        %v765 = vadd.f32 %v464, %v764
        %v766 = vpop.f32.mrb[0].mxu0
        %767 = vmatprep.mubr.f32.mxu0 0.0
        %768 = vmatmul.mubr.f32.gmra.mrb[0].mxu0 %v552
        %v769 = vpop.f32.mrb[0].mxu0
        %v770 = vadd.f32 %v464, %v769
        %v771 = vpop.f32.mrb[0].mxu0
        %772 = vmatprep.mubr.f32.mxu0 0.0
        %773 = vmatmul.mubr.f32.gmra.mrb[0].mxu0 %v555
        %v774 = vpop.f32.mrb[0].mxu0
        %v775 = vadd.f32 %v464, %v774
        %v776 = vpop.f32.mrb[0].mxu0
        %777 = vmatprep.mubr.f32.mxu0 0.0
        %778 = vmatmul.mubr.f32.gmra.mrb[0].mxu0 %v558
        %v779 = vpop.f32.mrb[0].mxu0
        %v780 = vadd.f32 %v464, %v779
        %v781 = vpop.f32.mrb[0].mxu0
        %782 = vmatprep.mubr.f32.mxu0 0.0
        %783 = vmatmul.mubr.f32.gmra.mrb[0].mxu0 %v561
        %v784 = vpop.f32.mrb[0].mxu0
        %v785 = vadd.f32 %v464, %v784
        %v786 = vpop.f32.mrb[0].mxu0
        %787 = vdwg.mxu0
        %v788 = vmul.f32 %v630, 0.70710677
        %v789 = vmul.f32 %v635, 0.70710677
        %v790 = vmul.f32 %v640, 0.70710677
        %v791 = vmul.f32 %v645, 0.70710677
        %v792 = vmul.f32 %v650, 0.70710677
        %v793 = vmul.f32 %v655, 0.70710677
        %v794 = vmul.f32 %v660, 0.70710677
        %v795 = vmul.f32 %v665, 0.70710677
        %v796 = vmul.f32 %v670, 0.70710677
        %v797 = vmul.f32 %v675, 0.70710677
        %v798 = vmul.f32 %v680, 0.70710677
        %v799 = vmul.f32 %v685, 0.70710677
        %v800 = vmul.f32 %v690, 0.70710677
        %v801 = vmul.f32 %v695, 0.70710677
        %v802 = vmul.f32 %v700, 0.70710677
        %v803 = vmul.f32 %v705, 0.70710677
        %v804 = vmul.f32 %v710, 0.70710677
        %v805 = vmul.f32 %v715, 0.70710677
        %v806 = vmul.f32 %v720, 0.70710677
        %v807 = vmul.f32 %v725, 0.70710677
        %v808 = vmul.f32 %v730, 0.70710677
        %v809 = vmul.f32 %v735, 0.70710677
        %v810 = vmul.f32 %v740, 0.70710677
        %v811 = vmul.f32 %v745, 0.70710677
        %v812 = vmul.f32 %v750, 0.70710677
        %v813 = vmul.f32 %v755, 0.70710677
        %v814 = vmul.f32 %v760, 0.70710677
        %v815 = vmul.f32 %v765, 0.70710677
        %v816 = vmul.f32 %v770, 0.70710677
        %v817 = vmul.f32 %v775, 0.70710677
        %v818 = vmul.f32 %v780, 0.70710677
        %v819 = vmul.f32 %v785, 0.70710677
        %v820 = vand.u32 2147483647, %v788
        %v821 = vand.u32 2147483647, %v789
        %v822 = vand.u32 2147483647, %v790
        %v823 = vand.u32 2147483647, %v791
        %v824 = vand.u32 2147483647, %v792
        %v825 = vand.u32 2147483647, %v793
        %v826 = vand.u32 2147483647, %v794
        %v827 = vand.u32 2147483647, %v795
        %v828 = vand.u32 2147483647, %v796
        %v829 = vand.u32 2147483647, %v797
        %v830 = vand.u32 2147483647, %v798
        %v831 = vand.u32 2147483647, %v799
        %v832 = vand.u32 2147483647, %v800
        %v833 = vand.u32 2147483647, %v801
        %v834 = vand.u32 2147483647, %v802
        %v835 = vand.u32 2147483647, %v803
        %v836 = vand.u32 2147483647, %v804
        %v837 = vand.u32 2147483647, %v805
        %v838 = vand.u32 2147483647, %v806
        %v839 = vand.u32 2147483647, %v807
        %v840 = vand.u32 2147483647, %v808
        %v841 = vand.u32 2147483647, %v809
        %v842 = vand.u32 2147483647, %v810
        %v843 = vand.u32 2147483647, %v811
        %v844 = vand.u32 2147483647, %v812
        %v845 = vand.u32 2147483647, %v813
        %v846 = vand.u32 2147483647, %v814
        %v847 = vand.u32 2147483647, %v815
        %v848 = vand.u32 2147483647, %v816
        %v849 = vand.u32 2147483647, %v817
        %v850 = vand.u32 2147483647, %v818
        %v851 = vand.u32 2147483647, %v819
        %v852 = vmul.f32 %v820, 0.3275911
        %v853 = vmul.f32 %v821, 0.3275911
        %v854 = vmul.f32 %v822, 0.3275911
        %v855 = vmul.f32 %v823, 0.3275911
        %v856 = vmul.f32 %v824, 0.3275911
        %v857 = vmul.f32 %v825, 0.3275911
        %v858 = vmul.f32 %v826, 0.3275911
        %v859 = vmul.f32 %v827, 0.3275911
        %v860 = vmul.f32 %v828, 0.3275911
        %v861 = vmul.f32 %v829, 0.3275911
        %v862 = vmul.f32 %v830, 0.3275911
        %v863 = vmul.f32 %v831, 0.3275911
        %v864 = vmul.f32 %v832, 0.3275911
        %v865 = vmul.f32 %v833, 0.3275911
        %v866 = vmul.f32 %v834, 0.3275911
        %v867 = vmul.f32 %v835, 0.3275911
        %v868 = vmul.f32 %v836, 0.3275911
        %v869 = vmul.f32 %v837, 0.3275911
        %v870 = vmul.f32 %v838, 0.3275911
        %v871 = vmul.f32 %v839, 0.3275911
        %v872 = vmul.f32 %v840, 0.3275911
        %v873 = vmul.f32 %v841, 0.3275911
        %v874 = vmul.f32 %v842, 0.3275911
        %v875 = vmul.f32 %v843, 0.3275911
        %v876 = vmul.f32 %v844, 0.3275911
        %v877 = vmul.f32 %v845, 0.3275911
        %v878 = vmul.f32 %v846, 0.3275911
        %v879 = vmul.f32 %v847, 0.3275911
        %v880 = vmul.f32 %v848, 0.3275911
        %v881 = vmul.f32 %v849, 0.3275911
        %v882 = vmul.f32 %v850, 0.3275911
        %v883 = vmul.f32 %v851, 0.3275911
        %v884 = vadd.f32 %v852, 1.0
        %v885 = vadd.f32 %v853, 1.0
        %v886 = vadd.f32 %v854, 1.0
        %v887 = vadd.f32 %v855, 1.0
        %v888 = vadd.f32 %v856, 1.0
        %v889 = vadd.f32 %v857, 1.0
        %v890 = vadd.f32 %v858, 1.0
        %v891 = vadd.f32 %v859, 1.0
        %v892 = vadd.f32 %v860, 1.0
        %v893 = vadd.f32 %v861, 1.0
        %v894 = vadd.f32 %v862, 1.0
        %v895 = vadd.f32 %v863, 1.0
        %v896 = vadd.f32 %v864, 1.0
        %v897 = vadd.f32 %v865, 1.0
        %v898 = vadd.f32 %v866, 1.0
        %v899 = vadd.f32 %v867, 1.0
        %v900 = vadd.f32 %v868, 1.0
        %v901 = vadd.f32 %v869, 1.0
        %v902 = vadd.f32 %v870, 1.0
        %v903 = vadd.f32 %v871, 1.0
        %v904 = vadd.f32 %v872, 1.0
        %v905 = vadd.f32 %v873, 1.0
        %v906 = vadd.f32 %v874, 1.0
        %v907 = vadd.f32 %v875, 1.0
        %v908 = vadd.f32 %v876, 1.0
        %v909 = vadd.f32 %v877, 1.0
        %v910 = vadd.f32 %v878, 1.0
        %v911 = vadd.f32 %v879, 1.0
        %v912 = vadd.f32 %v880, 1.0
        %v913 = vadd.f32 %v881, 1.0
        %v914 = vadd.f32 %v882, 1.0
        %v915 = vadd.f32 %v883, 1.0
        %v916 = vrcp.pop %v884
        %v917 = vmul.f32 1.0, %v916
        %v918 = vrcp.pop %v885
        %v919 = vmul.f32 1.0, %v918
        %v920 = vrcp.pop %v886
        %v921 = vmul.f32 1.0, %v920
        %v922 = vrcp.pop %v887
        %v923 = vmul.f32 1.0, %v922
        %v924 = vrcp.pop %v888
        %v925 = vmul.f32 1.0, %v924
        %v926 = vrcp.pop %v889
        %v927 = vmul.f32 1.0, %v926
        %v928 = vrcp.pop %v890
        %v929 = vmul.f32 1.0, %v928
        %v930 = vrcp.pop %v891
        %v931 = vmul.f32 1.0, %v930
        %v932 = vrcp.pop %v892
        %v933 = vmul.f32 1.0, %v932
        %v934 = vrcp.pop %v893
        %v935 = vmul.f32 1.0, %v934
        %v936 = vrcp.pop %v894
        %v937 = vmul.f32 1.0, %v936
        %v938 = vrcp.pop %v895
        %v939 = vmul.f32 1.0, %v938
        %v940 = vrcp.pop %v896
        %v941 = vmul.f32 1.0, %v940
        %v942 = vrcp.pop %v897
        %v943 = vmul.f32 1.0, %v942
        %v944 = vrcp.pop %v898
        %v945 = vmul.f32 1.0, %v944
        %v946 = vrcp.pop %v899
        %v947 = vmul.f32 1.0, %v946
        %v948 = vrcp.pop %v900
        %v949 = vmul.f32 1.0, %v948
        %v950 = vrcp.pop %v901
        %v951 = vmul.f32 1.0, %v950
        %v952 = vrcp.pop %v902
        %v953 = vmul.f32 1.0, %v952
        %v954 = vrcp.pop %v903
        %v955 = vmul.f32 1.0, %v954
        %v956 = vrcp.pop %v904
        %v957 = vmul.f32 1.0, %v956
        %v958 = vrcp.pop %v905
        %v959 = vmul.f32 1.0, %v958
        %v960 = vrcp.pop %v906
        %v961 = vmul.f32 1.0, %v960
        %v962 = vrcp.pop %v907
        %v963 = vmul.f32 1.0, %v962
        %v964 = vrcp.pop %v908
        %v965 = vmul.f32 1.0, %v964
        %v966 = vrcp.pop %v909
        %v967 = vmul.f32 1.0, %v966
        %v968 = vrcp.pop %v910
        %v969 = vmul.f32 1.0, %v968
        %v970 = vrcp.pop %v911
        %v971 = vmul.f32 1.0, %v970
        %v972 = vrcp.pop %v912
        %v973 = vmul.f32 1.0, %v972
        %v974 = vrcp.pop %v913
        %v975 = vmul.f32 1.0, %v974
        %v976 = vrcp.pop %v914
        %v977 = vmul.f32 1.0, %v976
        %v978 = vrcp.pop %v915
        %v979 = vmul.f32 1.0, %v978
        %v980 = vmul.f32 %v917, 1.0614054
        %v981 = vmul.f32 %v919, 1.0614054
        %v982 = vmul.f32 %v921, 1.0614054
        %v983 = vmul.f32 %v923, 1.0614054
        %v984 = vmul.f32 %v925, 1.0614054
        %v985 = vmul.f32 %v927, 1.0614054
        %v986 = vmul.f32 %v929, 1.0614054
        %v987 = vmul.f32 %v931, 1.0614054
        %v988 = vmul.f32 %v933, 1.0614054
        %v989 = vmul.f32 %v935, 1.0614054
        %v990 = vmul.f32 %v937, 1.0614054
        %v991 = vmul.f32 %v939, 1.0614054
        %v992 = vmul.f32 %v941, 1.0614054
        %v993 = vmul.f32 %v943, 1.0614054
        %v994 = vmul.f32 %v945, 1.0614054
        %v995 = vmul.f32 %v947, 1.0614054
        %v996 = vmul.f32 %v949, 1.0614054
        %v997 = vmul.f32 %v951, 1.0614054
        %v998 = vmul.f32 %v953, 1.0614054
        %v999 = vmul.f32 %v955, 1.0614054
        %v1000 = vmul.f32 %v957, 1.0614054
        %v1001 = vmul.f32 %v959, 1.0614054
        %v1002 = vmul.f32 %v961, 1.0614054
        %v1003 = vmul.f32 %v963, 1.0614054
        %v1004 = vmul.f32 %v965, 1.0614054
        %v1005 = vmul.f32 %v967, 1.0614054
        %v1006 = vmul.f32 %v969, 1.0614054
        %v1007 = vmul.f32 %v971, 1.0614054
        %v1008 = vmul.f32 %v973, 1.0614054
        %v1009 = vmul.f32 %v975, 1.0614054
        %v1010 = vmul.f32 %v977, 1.0614054
        %v1011 = vmul.f32 %v979, 1.0614054
        %v1012 = vadd.f32 %v980, -1.4531521
        %v1013 = vadd.f32 %v981, -1.4531521
        %v1014 = vadd.f32 %v982, -1.4531521
        %v1015 = vadd.f32 %v983, -1.4531521
        %v1016 = vadd.f32 %v984, -1.4531521
        %v1017 = vadd.f32 %v985, -1.4531521
        %v1018 = vadd.f32 %v986, -1.4531521
        %v1019 = vadd.f32 %v987, -1.4531521
        %v1020 = vadd.f32 %v988, -1.4531521
        %v1021 = vadd.f32 %v989, -1.4531521
        %v1022 = vadd.f32 %v990, -1.4531521
        %v1023 = vadd.f32 %v991, -1.4531521
        %v1024 = vadd.f32 %v992, -1.4531521
        %v1025 = vadd.f32 %v993, -1.4531521
        %v1026 = vadd.f32 %v994, -1.4531521
        %v1027 = vadd.f32 %v995, -1.4531521
        %v1028 = vadd.f32 %v996, -1.4531521
        %v1029 = vadd.f32 %v997, -1.4531521
        %v1030 = vadd.f32 %v998, -1.4531521
        %v1031 = vadd.f32 %v999, -1.4531521
        %v1032 = vadd.f32 %v1000, -1.4531521
        %v1033 = vadd.f32 %v1001, -1.4531521
        %v1034 = vadd.f32 %v1002, -1.4531521
        %v1035 = vadd.f32 %v1003, -1.4531521
        %v1036 = vadd.f32 %v1004, -1.4531521
        %v1037 = vadd.f32 %v1005, -1.4531521
        %v1038 = vadd.f32 %v1006, -1.4531521
        %v1039 = vadd.f32 %v1007, -1.4531521
        %v1040 = vadd.f32 %v1008, -1.4531521
        %v1041 = vadd.f32 %v1009, -1.4531521
        %v1042 = vadd.f32 %v1010, -1.4531521
        %v1043 = vadd.f32 %v1011, -1.4531521
        %v1044 = vmul.f32 %v1012, %v917
        %v1045 = vmul.f32 %v1013, %v919
        %v1046 = vmul.f32 %v1014, %v921
        %v1047 = vmul.f32 %v1015, %v923
        %v1048 = vmul.f32 %v1016, %v925
        %v1049 = vmul.f32 %v1017, %v927
        %v1050 = vmul.f32 %v1018, %v929
        %v1051 = vmul.f32 %v1019, %v931
        %v1052 = vmul.f32 %v1020, %v933
        %v1053 = vmul.f32 %v1021, %v935
        %v1054 = vmul.f32 %v1022, %v937
        %v1055 = vmul.f32 %v1023, %v939
        %v1056 = vmul.f32 %v1024, %v941
        %v1057 = vmul.f32 %v1025, %v943
        %v1058 = vmul.f32 %v1026, %v945
        %v1059 = vmul.f32 %v1027, %v947
        %v1060 = vmul.f32 %v1028, %v949
        %v1061 = vmul.f32 %v1029, %v951
        %v1062 = vmul.f32 %v1030, %v953
        %v1063 = vmul.f32 %v1031, %v955
        %v1064 = vmul.f32 %v1032, %v957
        %v1065 = vmul.f32 %v1033, %v959
        %v1066 = vmul.f32 %v1034, %v961
        %v1067 = vmul.f32 %v1035, %v963
        %v1068 = vmul.f32 %v1036, %v965
        %v1069 = vmul.f32 %v1037, %v967
        %v1070 = vmul.f32 %v1038, %v969
        %v1071 = vmul.f32 %v1039, %v971
        %v1072 = vmul.f32 %v1040, %v973
        %v1073 = vmul.f32 %v1041, %v975
        %v1074 = vmul.f32 %v1042, %v977
        %v1075 = vmul.f32 %v1043, %v979
        %v1076 = vadd.f32 %v1044, 1.4214138
        %v1077 = vadd.f32 %v1045, 1.4214138
        %v1078 = vadd.f32 %v1046, 1.4214138
        %v1079 = vadd.f32 %v1047, 1.4214138
        %v1080 = vadd.f32 %v1048, 1.4214138
        %v1081 = vadd.f32 %v1049, 1.4214138
        %v1082 = vadd.f32 %v1050, 1.4214138
        %v1083 = vadd.f32 %v1051, 1.4214138
        %v1084 = vadd.f32 %v1052, 1.4214138
        %v1085 = vadd.f32 %v1053, 1.4214138
        %v1086 = vadd.f32 %v1054, 1.4214138
        %v1087 = vadd.f32 %v1055, 1.4214138
        %v1088 = vadd.f32 %v1056, 1.4214138
        %v1089 = vadd.f32 %v1057, 1.4214138
        %v1090 = vadd.f32 %v1058, 1.4214138
        %v1091 = vadd.f32 %v1059, 1.4214138
        %v1092 = vadd.f32 %v1060, 1.4214138
        %v1093 = vadd.f32 %v1061, 1.4214138
        %v1094 = vadd.f32 %v1062, 1.4214138
        %v1095 = vadd.f32 %v1063, 1.4214138
        %v1096 = vadd.f32 %v1064, 1.4214138
        %v1097 = vadd.f32 %v1065, 1.4214138
        %v1098 = vadd.f32 %v1066, 1.4214138
        %v1099 = vadd.f32 %v1067, 1.4214138
        %v1100 = vadd.f32 %v1068, 1.4214138
        %v1101 = vadd.f32 %v1069, 1.4214138
        %v1102 = vadd.f32 %v1070, 1.4214138
        %v1103 = vadd.f32 %v1071, 1.4214138
        %v1104 = vadd.f32 %v1072, 1.4214138
        %v1105 = vadd.f32 %v1073, 1.4214138
        %v1106 = vadd.f32 %v1074, 1.4214138
        %v1107 = vadd.f32 %v1075, 1.4214138
        %v1108 = vmul.f32 %v1076, %v917
        %v1109 = vmul.f32 %v1077, %v919
        %v1110 = vmul.f32 %v1078, %v921
        %v1111 = vmul.f32 %v1079, %v923
        %v1112 = vmul.f32 %v1080, %v925
        %v1113 = vmul.f32 %v1081, %v927
        %v1114 = vmul.f32 %v1082, %v929
        %v1115 = vmul.f32 %v1083, %v931
        %v1116 = vmul.f32 %v1084, %v933
        %v1117 = vmul.f32 %v1085, %v935
        %v1118 = vmul.f32 %v1086, %v937
        %v1119 = vmul.f32 %v1087, %v939
        %v1120 = vmul.f32 %v1088, %v941
        %v1121 = vmul.f32 %v1089, %v943
        %v1122 = vmul.f32 %v1090, %v945
        %v1123 = vmul.f32 %v1091, %v947
        %v1124 = vmul.f32 %v1092, %v949
        %v1125 = vmul.f32 %v1093, %v951
        %v1126 = vmul.f32 %v1094, %v953
        %v1127 = vmul.f32 %v1095, %v955
        %v1128 = vmul.f32 %v1096, %v957
        %v1129 = vmul.f32 %v1097, %v959
        %v1130 = vmul.f32 %v1098, %v961
        %v1131 = vmul.f32 %v1099, %v963
        %v1132 = vmul.f32 %v1100, %v965
        %v1133 = vmul.f32 %v1101, %v967
        %v1134 = vmul.f32 %v1102, %v969
        %v1135 = vmul.f32 %v1103, %v971
        %v1136 = vmul.f32 %v1104, %v973
        %v1137 = vmul.f32 %v1105, %v975
        %v1138 = vmul.f32 %v1106, %v977
        %v1139 = vmul.f32 %v1107, %v979
        %v1140 = vadd.f32 %v1108, -0.28449672
        %v1141 = vadd.f32 %v1109, -0.28449672
        %v1142 = vadd.f32 %v1110, -0.28449672
        %v1143 = vadd.f32 %v1111, -0.28449672
        %v1144 = vadd.f32 %v1112, -0.28449672
        %v1145 = vadd.f32 %v1113, -0.28449672
        %v1146 = vadd.f32 %v1114, -0.28449672
        %v1147 = vadd.f32 %v1115, -0.28449672
        %v1148 = vadd.f32 %v1116, -0.28449672
        %v1149 = vadd.f32 %v1117, -0.28449672
        %v1150 = vadd.f32 %v1118, -0.28449672
        %v1151 = vadd.f32 %v1119, -0.28449672
        %v1152 = vadd.f32 %v1120, -0.28449672
        %v1153 = vadd.f32 %v1121, -0.28449672
        %v1154 = vadd.f32 %v1122, -0.28449672
        %v1155 = vadd.f32 %v1123, -0.28449672
        %v1156 = vadd.f32 %v1124, -0.28449672
        %v1157 = vadd.f32 %v1125, -0.28449672
        %v1158 = vadd.f32 %v1126, -0.28449672
        %v1159 = vadd.f32 %v1127, -0.28449672
        %v1160 = vadd.f32 %v1128, -0.28449672
        %v1161 = vadd.f32 %v1129, -0.28449672
        %v1162 = vadd.f32 %v1130, -0.28449672
        %v1163 = vadd.f32 %v1131, -0.28449672
        %v1164 = vadd.f32 %v1132, -0.28449672
        %v1165 = vadd.f32 %v1133, -0.28449672
        %v1166 = vadd.f32 %v1134, -0.28449672
        %v1167 = vadd.f32 %v1135, -0.28449672
        %v1168 = vadd.f32 %v1136, -0.28449672
        %v1169 = vadd.f32 %v1137, -0.28449672
        %v1170 = vadd.f32 %v1138, -0.28449672
        %v1171 = vadd.f32 %v1139, -0.28449672
        %v1172 = vmul.f32 %v1140, %v917
        %v1173 = vmul.f32 %v1141, %v919
        %v1174 = vmul.f32 %v1142, %v921
        %v1175 = vmul.f32 %v1143, %v923
        %v1176 = vmul.f32 %v1144, %v925
        %v1177 = vmul.f32 %v1145, %v927
        %v1178 = vmul.f32 %v1146, %v929
        %v1179 = vmul.f32 %v1147, %v931
        %v1180 = vmul.f32 %v1148, %v933
        %v1181 = vmul.f32 %v1149, %v935
        %v1182 = vmul.f32 %v1150, %v937
        %v1183 = vmul.f32 %v1151, %v939
        %v1184 = vmul.f32 %v1152, %v941
        %v1185 = vmul.f32 %v1153, %v943
        %v1186 = vmul.f32 %v1154, %v945
        %v1187 = vmul.f32 %v1155, %v947
        %v1188 = vmul.f32 %v1156, %v949
        %v1189 = vmul.f32 %v1157, %v951
        %v1190 = vmul.f32 %v1158, %v953
        %v1191 = vmul.f32 %v1159, %v955
        %v1192 = vmul.f32 %v1160, %v957
        %v1193 = vmul.f32 %v1161, %v959
        %v1194 = vmul.f32 %v1162, %v961
        %v1195 = vmul.f32 %v1163, %v963
        %v1196 = vmul.f32 %v1164, %v965
        %v1197 = vmul.f32 %v1165, %v967
        %v1198 = vmul.f32 %v1166, %v969
        %v1199 = vmul.f32 %v1167, %v971
        %v1200 = vmul.f32 %v1168, %v973
        %v1201 = vmul.f32 %v1169, %v975
        %v1202 = vmul.f32 %v1170, %v977
        %v1203 = vmul.f32 %v1171, %v979
        %v1204 = vadd.f32 %v1172, 0.2548296
        %v1205 = vadd.f32 %v1173, 0.2548296
        %v1206 = vadd.f32 %v1174, 0.2548296
        %v1207 = vadd.f32 %v1175, 0.2548296
        %v1208 = vadd.f32 %v1176, 0.2548296
        %v1209 = vadd.f32 %v1177, 0.2548296
        %v1210 = vadd.f32 %v1178, 0.2548296
        %v1211 = vadd.f32 %v1179, 0.2548296
        %v1212 = vadd.f32 %v1180, 0.2548296
        %v1213 = vadd.f32 %v1181, 0.2548296
        %v1214 = vadd.f32 %v1182, 0.2548296
        %v1215 = vadd.f32 %v1183, 0.2548296
        %v1216 = vadd.f32 %v1184, 0.2548296
        %v1217 = vadd.f32 %v1185, 0.2548296
        %v1218 = vadd.f32 %v1186, 0.2548296
        %v1219 = vadd.f32 %v1187, 0.2548296
        %v1220 = vadd.f32 %v1188, 0.2548296
        %v1221 = vadd.f32 %v1189, 0.2548296
        %v1222 = vadd.f32 %v1190, 0.2548296
        %v1223 = vadd.f32 %v1191, 0.2548296
        %v1224 = vadd.f32 %v1192, 0.2548296
        %v1225 = vadd.f32 %v1193, 0.2548296
        %v1226 = vadd.f32 %v1194, 0.2548296
        %v1227 = vadd.f32 %v1195, 0.2548296
        %v1228 = vadd.f32 %v1196, 0.2548296
        %v1229 = vadd.f32 %v1197, 0.2548296
        %v1230 = vadd.f32 %v1198, 0.2548296
        %v1231 = vadd.f32 %v1199, 0.2548296
        %v1232 = vadd.f32 %v1200, 0.2548296
        %v1233 = vadd.f32 %v1201, 0.2548296
        %v1234 = vadd.f32 %v1202, 0.2548296
        %v1235 = vadd.f32 %v1203, 0.2548296
        %v1236 = vmul.f32 %v1204, %v917
        %v1237 = vmul.f32 %v1205, %v919
        %v1238 = vmul.f32 %v1206, %v921
        %v1239 = vmul.f32 %v1207, %v923
        %v1240 = vmul.f32 %v1208, %v925
        %v1241 = vmul.f32 %v1209, %v927
        %v1242 = vmul.f32 %v1210, %v929
        %v1243 = vmul.f32 %v1211, %v931
        %v1244 = vmul.f32 %v1212, %v933
        %v1245 = vmul.f32 %v1213, %v935
        %v1246 = vmul.f32 %v1214, %v937
        %v1247 = vmul.f32 %v1215, %v939
        %v1248 = vmul.f32 %v1216, %v941
        %v1249 = vmul.f32 %v1217, %v943
        %v1250 = vmul.f32 %v1218, %v945
        %v1251 = vmul.f32 %v1219, %v947
        %v1252 = vmul.f32 %v1220, %v949
        %v1253 = vmul.f32 %v1221, %v951
        %v1254 = vmul.f32 %v1222, %v953
        %v1255 = vmul.f32 %v1223, %v955
        %v1256 = vmul.f32 %v1224, %v957
        %v1257 = vmul.f32 %v1225, %v959
        %v1258 = vmul.f32 %v1226, %v961
        %v1259 = vmul.f32 %v1227, %v963
        %v1260 = vmul.f32 %v1228, %v965
        %v1261 = vmul.f32 %v1229, %v967
        %v1262 = vmul.f32 %v1230, %v969
        %v1263 = vmul.f32 %v1231, %v971
        %v1264 = vmul.f32 %v1232, %v973
        %v1265 = vmul.f32 %v1233, %v975
        %v1266 = vmul.f32 %v1234, %v977
        %v1267 = vmul.f32 %v1235, %v979
        %v1268 = vsub.f32 0.0, %v820
        %v1269 = vsub.f32 0.0, %v821
        %v1270 = vsub.f32 0.0, %v822
        %v1271 = vsub.f32 0.0, %v823
        %v1272 = vsub.f32 0.0, %v824
        %v1273 = vsub.f32 0.0, %v825
        %v1274 = vsub.f32 0.0, %v826
        %v1275 = vsub.f32 0.0, %v827
        %v1276 = vsub.f32 0.0, %v828
        %v1277 = vsub.f32 0.0, %v829
        %v1278 = vsub.f32 0.0, %v830
        %v1279 = vsub.f32 0.0, %v831
        %v1280 = vsub.f32 0.0, %v832
        %v1281 = vsub.f32 0.0, %v833
        %v1282 = vsub.f32 0.0, %v834
        %v1283 = vsub.f32 0.0, %v835
        %v1284 = vsub.f32 0.0, %v836
        %v1285 = vsub.f32 0.0, %v837
        %v1286 = vsub.f32 0.0, %v838
        %v1287 = vsub.f32 0.0, %v839
        %v1288 = vsub.f32 0.0, %v840
        %v1289 = vsub.f32 0.0, %v841
        %v1290 = vsub.f32 0.0, %v842
        %v1291 = vsub.f32 0.0, %v843
        %v1292 = vsub.f32 0.0, %v844
        %v1293 = vsub.f32 0.0, %v845
        %v1294 = vsub.f32 0.0, %v846
        %v1295 = vsub.f32 0.0, %v847
        %v1296 = vsub.f32 0.0, %v848
        %v1297 = vsub.f32 0.0, %v849
        %v1298 = vsub.f32 0.0, %v850
        %v1299 = vsub.f32 0.0, %v851
        %v1300 = vmul.f32 %v1268, %v820
        %v1301 = vmul.f32 %v1269, %v821
        %v1302 = vmul.f32 %v1270, %v822
        %v1303 = vmul.f32 %v1271, %v823
        %v1304 = vmul.f32 %v1272, %v824
        %v1305 = vmul.f32 %v1273, %v825
        %v1306 = vmul.f32 %v1274, %v826
        %v1307 = vmul.f32 %v1275, %v827
        %v1308 = vmul.f32 %v1276, %v828
        %v1309 = vmul.f32 %v1277, %v829
        %v1310 = vmul.f32 %v1278, %v830
        %v1311 = vmul.f32 %v1279, %v831
        %v1312 = vmul.f32 %v1280, %v832
        %v1313 = vmul.f32 %v1281, %v833
        %v1314 = vmul.f32 %v1282, %v834
        %v1315 = vmul.f32 %v1283, %v835
        %v1316 = vmul.f32 %v1284, %v836
        %v1317 = vmul.f32 %v1285, %v837
        %v1318 = vmul.f32 %v1286, %v838
        %v1319 = vmul.f32 %v1287, %v839
        %v1320 = vmul.f32 %v1288, %v840
        %v1321 = vmul.f32 %v1289, %v841
        %v1322 = vmul.f32 %v1290, %v842
        %v1323 = vmul.f32 %v1291, %v843
        %v1324 = vmul.f32 %v1292, %v844
        %v1325 = vmul.f32 %v1293, %v845
        %v1326 = vmul.f32 %v1294, %v846
        %v1327 = vmul.f32 %v1295, %v847
        %v1328 = vmul.f32 %v1296, %v848
        %v1329 = vmul.f32 %v1297, %v849
        %v1330 = vmul.f32 %v1298, %v850
        %v1331 = vmul.f32 %v1299, %v851
        %v1332 = vmul.f32 %v1300, 1.442695
        %v1333 = vpow.pop %v1332
        %v1334 = vmul.f32 %v1301, 1.442695
        %v1335 = vpow.pop %v1334
        %v1336 = vmul.f32 %v1302, 1.442695
        %v1337 = vpow.pop %v1336
        %v1338 = vmul.f32 %v1303, 1.442695
        %v1339 = vpow.pop %v1338
        %v1340 = vmul.f32 %v1304, 1.442695
        %v1341 = vpow.pop %v1340
        %v1342 = vmul.f32 %v1305, 1.442695
        %v1343 = vpow.pop %v1342
        %v1344 = vmul.f32 %v1306, 1.442695
        %v1345 = vpow.pop %v1344
        %v1346 = vmul.f32 %v1307, 1.442695
        %v1347 = vpow.pop %v1346
        %v1348 = vmul.f32 %v1308, 1.442695
        %v1349 = vpow.pop %v1348
        %v1350 = vmul.f32 %v1309, 1.442695
        %v1351 = vpow.pop %v1350
        %v1352 = vmul.f32 %v1310, 1.442695
        %v1353 = vpow.pop %v1352
        %v1354 = vmul.f32 %v1311, 1.442695
        %v1355 = vpow.pop %v1354
        %v1356 = vmul.f32 %v1312, 1.442695
        %v1357 = vpow.pop %v1356
        %v1358 = vmul.f32 %v1313, 1.442695
        %v1359 = vpow.pop %v1358
        %v1360 = vmul.f32 %v1314, 1.442695
        %v1361 = vpow.pop %v1360
        %v1362 = vmul.f32 %v1315, 1.442695
        %v1363 = vpow.pop %v1362
        %v1364 = vmul.f32 %v1316, 1.442695
        %v1365 = vpow.pop %v1364
        %v1366 = vmul.f32 %v1317, 1.442695
        %v1367 = vpow.pop %v1366
        %v1368 = vmul.f32 %v1318, 1.442695
        %v1369 = vpow.pop %v1368
        %v1370 = vmul.f32 %v1319, 1.442695
        %v1371 = vpow.pop %v1370
        %v1372 = vmul.f32 %v1320, 1.442695
        %v1373 = vpow.pop %v1372
        %v1374 = vmul.f32 %v1321, 1.442695
        %v1375 = vpow.pop %v1374
        %v1376 = vmul.f32 %v1322, 1.442695
        %v1377 = vpow.pop %v1376
        %v1378 = vmul.f32 %v1323, 1.442695
        %v1379 = vpow.pop %v1378
        %v1380 = vmul.f32 %v1324, 1.442695
        %v1381 = vpow.pop %v1380
        %v1382 = vmul.f32 %v1325, 1.442695
        %v1383 = vpow.pop %v1382
        %v1384 = vmul.f32 %v1326, 1.442695
        %v1385 = vpow.pop %v1384
        %v1386 = vmul.f32 %v1327, 1.442695
        %v1387 = vpow.pop %v1386
        %v1388 = vmul.f32 %v1328, 1.442695
        %v1389 = vpow.pop %v1388
        %v1390 = vmul.f32 %v1329, 1.442695
        %v1391 = vpow.pop %v1390
        %v1392 = vmul.f32 %v1330, 1.442695
        %v1393 = vpow.pop %v1392
        %v1394 = vmul.f32 %v1331, 1.442695
        %v1395 = vpow.pop %v1394
        %v1396 = vmul.f32 %v1236, %v1333
        %v1397 = vmul.f32 %v1237, %v1335
        %v1398 = vmul.f32 %v1238, %v1337
        %v1399 = vmul.f32 %v1239, %v1339
        %v1400 = vmul.f32 %v1240, %v1341
        %v1401 = vmul.f32 %v1241, %v1343
        %v1402 = vmul.f32 %v1242, %v1345
        %v1403 = vmul.f32 %v1243, %v1347
        %v1404 = vmul.f32 %v1244, %v1349
        %v1405 = vmul.f32 %v1245, %v1351
        %v1406 = vmul.f32 %v1246, %v1353
        %v1407 = vmul.f32 %v1247, %v1355
        %v1408 = vmul.f32 %v1248, %v1357
        %v1409 = vmul.f32 %v1249, %v1359
        %v1410 = vmul.f32 %v1250, %v1361
        %v1411 = vmul.f32 %v1251, %v1363
        %v1412 = vmul.f32 %v1252, %v1365
        %v1413 = vmul.f32 %v1253, %v1367
        %v1414 = vmul.f32 %v1254, %v1369
        %v1415 = vmul.f32 %v1255, %v1371
        %v1416 = vmul.f32 %v1256, %v1373
        %v1417 = vmul.f32 %v1257, %v1375
        %v1418 = vmul.f32 %v1258, %v1377
        %v1419 = vmul.f32 %v1259, %v1379
        %v1420 = vmul.f32 %v1260, %v1381
        %v1421 = vmul.f32 %v1261, %v1383
        %v1422 = vmul.f32 %v1262, %v1385
        %v1423 = vmul.f32 %v1263, %v1387
        %v1424 = vmul.f32 %v1264, %v1389
        %v1425 = vmul.f32 %v1265, %v1391
        %v1426 = vmul.f32 %v1266, %v1393
        %v1427 = vmul.f32 %v1267, %v1395
        %v1428 = vsub.f32 1.0, %v1396
        %v1429 = vsub.f32 1.0, %v1397
        %v1430 = vsub.f32 1.0, %v1398
        %v1431 = vsub.f32 1.0, %v1399
        %v1432 = vsub.f32 1.0, %v1400
        %v1433 = vsub.f32 1.0, %v1401
        %v1434 = vsub.f32 1.0, %v1402
        %v1435 = vsub.f32 1.0, %v1403
        %v1436 = vsub.f32 1.0, %v1404
        %v1437 = vsub.f32 1.0, %v1405
        %v1438 = vsub.f32 1.0, %v1406
        %v1439 = vsub.f32 1.0, %v1407
        %v1440 = vsub.f32 1.0, %v1408
        %v1441 = vsub.f32 1.0, %v1409
        %v1442 = vsub.f32 1.0, %v1410
        %v1443 = vsub.f32 1.0, %v1411
        %v1444 = vsub.f32 1.0, %v1412
        %v1445 = vsub.f32 1.0, %v1413
        %v1446 = vsub.f32 1.0, %v1414
        %v1447 = vsub.f32 1.0, %v1415
        %v1448 = vsub.f32 1.0, %v1416
        %v1449 = vsub.f32 1.0, %v1417
        %v1450 = vsub.f32 1.0, %v1418
        %v1451 = vsub.f32 1.0, %v1419
        %v1452 = vsub.f32 1.0, %v1420
        %v1453 = vsub.f32 1.0, %v1421
        %v1454 = vsub.f32 1.0, %v1422
        %v1455 = vsub.f32 1.0, %v1423
        %v1456 = vsub.f32 1.0, %v1424
        %v1457 = vsub.f32 1.0, %v1425
        %v1458 = vsub.f32 1.0, %v1426
        %v1459 = vsub.f32 1.0, %v1427
        %vm1460 = vcmp.lt.f32.partialorder %v788, 0.0
        %vm1461 = vcmp.lt.f32.partialorder %v789, 0.0
        %vm1462 = vcmp.lt.f32.partialorder %v790, 0.0
        %vm1463 = vcmp.lt.f32.partialorder %v791, 0.0
        %vm1464 = vcmp.lt.f32.partialorder %v792, 0.0
        %vm1465 = vcmp.lt.f32.partialorder %v793, 0.0
        %vm1466 = vcmp.lt.f32.partialorder %v794, 0.0
        %vm1467 = vcmp.lt.f32.partialorder %v795, 0.0
        %vm1468 = vcmp.lt.f32.partialorder %v796, 0.0
        %vm1469 = vcmp.lt.f32.partialorder %v797, 0.0
        %vm1470 = vcmp.lt.f32.partialorder %v798, 0.0
        %vm1471 = vcmp.lt.f32.partialorder %v799, 0.0
        %vm1472 = vcmp.lt.f32.partialorder %v800, 0.0
        %vm1473 = vcmp.lt.f32.partialorder %v801, 0.0
        %vm1474 = vcmp.lt.f32.partialorder %v802, 0.0
        %vm1475 = vcmp.lt.f32.partialorder %v803, 0.0
        %vm1476 = vcmp.lt.f32.partialorder %v804, 0.0
        %vm1477 = vcmp.lt.f32.partialorder %v805, 0.0
        %vm1478 = vcmp.lt.f32.partialorder %v806, 0.0
        %vm1479 = vcmp.lt.f32.partialorder %v807, 0.0
        %vm1480 = vcmp.lt.f32.partialorder %v808, 0.0
        %vm1481 = vcmp.lt.f32.partialorder %v809, 0.0
        %vm1482 = vcmp.lt.f32.partialorder %v810, 0.0
        %vm1483 = vcmp.lt.f32.partialorder %v811, 0.0
        %vm1484 = vcmp.lt.f32.partialorder %v812, 0.0
        %vm1485 = vcmp.lt.f32.partialorder %v813, 0.0
        %vm1486 = vcmp.lt.f32.partialorder %v814, 0.0
        %vm1487 = vcmp.lt.f32.partialorder %v815, 0.0
        %vm1488 = vcmp.lt.f32.partialorder %v816, 0.0
        %vm1489 = vcmp.lt.f32.partialorder %v817, 0.0
        %vm1490 = vcmp.lt.f32.partialorder %v818, 0.0
        %vm1491 = vcmp.lt.f32.partialorder %v819, 0.0
        %v1492 = vsub.f32 0.0, %v1428
        %v1493 = vsub.f32 0.0, %v1429
        %v1494 = vsub.f32 0.0, %v1430
        %v1495 = vsub.f32 0.0, %v1431
        %v1496 = vsub.f32 0.0, %v1432
        %v1497 = vsub.f32 0.0, %v1433
        %v1498 = vsub.f32 0.0, %v1434
        %v1499 = vsub.f32 0.0, %v1435
        %v1500 = vsub.f32 0.0, %v1436
        %v1501 = vsub.f32 0.0, %v1437
        %v1502 = vsub.f32 0.0, %v1438
        %v1503 = vsub.f32 0.0, %v1439
        %v1504 = vsub.f32 0.0, %v1440
        %v1505 = vsub.f32 0.0, %v1441
        %v1506 = vsub.f32 0.0, %v1442
        %v1507 = vsub.f32 0.0, %v1443
        %v1508 = vsub.f32 0.0, %v1444
        %v1509 = vsub.f32 0.0, %v1445
        %v1510 = vsub.f32 0.0, %v1446
        %v1511 = vsub.f32 0.0, %v1447
        %v1512 = vsub.f32 0.0, %v1448
        %v1513 = vsub.f32 0.0, %v1449
        %v1514 = vsub.f32 0.0, %v1450
        %v1515 = vsub.f32 0.0, %v1451
        %v1516 = vsub.f32 0.0, %v1452
        %v1517 = vsub.f32 0.0, %v1453
        %v1518 = vsub.f32 0.0, %v1454
        %v1519 = vsub.f32 0.0, %v1455
        %v1520 = vsub.f32 0.0, %v1456
        %v1521 = vsub.f32 0.0, %v1457
        %v1522 = vsub.f32 0.0, %v1458
        %v1523 = vsub.f32 0.0, %v1459
        %v1524 = vsel %vm1460, %v1492, %v1428
        %v1525 = vsel %vm1461, %v1493, %v1429
        %v1526 = vsel %vm1462, %v1494, %v1430
        %v1527 = vsel %vm1463, %v1495, %v1431
        %v1528 = vsel %vm1464, %v1496, %v1432
        %v1529 = vsel %vm1465, %v1497, %v1433
        %v1530 = vsel %vm1466, %v1498, %v1434
        %v1531 = vsel %vm1467, %v1499, %v1435
        %v1532 = vsel %vm1468, %v1500, %v1436
        %v1533 = vsel %vm1469, %v1501, %v1437
        %v1534 = vsel %vm1470, %v1502, %v1438
        %v1535 = vsel %vm1471, %v1503, %v1439
        %v1536 = vsel %vm1472, %v1504, %v1440
        %v1537 = vsel %vm1473, %v1505, %v1441
        %v1538 = vsel %vm1474, %v1506, %v1442
        %v1539 = vsel %vm1475, %v1507, %v1443
        %v1540 = vsel %vm1476, %v1508, %v1444
        %v1541 = vsel %vm1477, %v1509, %v1445
        %v1542 = vsel %vm1478, %v1510, %v1446
        %v1543 = vsel %vm1479, %v1511, %v1447
        %v1544 = vsel %vm1480, %v1512, %v1448
        %v1545 = vsel %vm1481, %v1513, %v1449
        %v1546 = vsel %vm1482, %v1514, %v1450
        %v1547 = vsel %vm1483, %v1515, %v1451
        %v1548 = vsel %vm1484, %v1516, %v1452
        %v1549 = vsel %vm1485, %v1517, %v1453
        %v1550 = vsel %vm1486, %v1518, %v1454
        %v1551 = vsel %vm1487, %v1519, %v1455
        %v1552 = vsel %vm1488, %v1520, %v1456
        %v1553 = vsel %vm1489, %v1521, %v1457
        %v1554 = vsel %vm1490, %v1522, %v1458
        %v1555 = vsel %vm1491, %v1523, %v1459
        %v1556 = vmul.f32 %v630, 0.5
        %v1557 = vmul.f32 %v635, 0.5
        %v1558 = vmul.f32 %v640, 0.5
        %v1559 = vmul.f32 %v645, 0.5
        %v1560 = vmul.f32 %v650, 0.5
        %v1561 = vmul.f32 %v655, 0.5
        %v1562 = vmul.f32 %v660, 0.5
        %v1563 = vmul.f32 %v665, 0.5
        %v1564 = vmul.f32 %v670, 0.5
        %v1565 = vmul.f32 %v675, 0.5
        %v1566 = vmul.f32 %v680, 0.5
        %v1567 = vmul.f32 %v685, 0.5
        %v1568 = vmul.f32 %v690, 0.5
        %v1569 = vmul.f32 %v695, 0.5
        %v1570 = vmul.f32 %v700, 0.5
        %v1571 = vmul.f32 %v705, 0.5
        %v1572 = vmul.f32 %v710, 0.5
        %v1573 = vmul.f32 %v715, 0.5
        %v1574 = vmul.f32 %v720, 0.5
        %v1575 = vmul.f32 %v725, 0.5
        %v1576 = vmul.f32 %v730, 0.5
        %v1577 = vmul.f32 %v735, 0.5
        %v1578 = vmul.f32 %v740, 0.5
        %v1579 = vmul.f32 %v745, 0.5
        %v1580 = vmul.f32 %v750, 0.5
        %v1581 = vmul.f32 %v755, 0.5
        %v1582 = vmul.f32 %v760, 0.5
        %v1583 = vmul.f32 %v765, 0.5
        %v1584 = vmul.f32 %v770, 0.5
        %v1585 = vmul.f32 %v775, 0.5
        %v1586 = vmul.f32 %v780, 0.5
        %v1587 = vmul.f32 %v785, 0.5
        %v1588 = vadd.f32 %v1524, 1.0
        %v1589 = vadd.f32 %v1525, 1.0
        %v1590 = vadd.f32 %v1526, 1.0
        %v1591 = vadd.f32 %v1527, 1.0
        %v1592 = vadd.f32 %v1528, 1.0
        %v1593 = vadd.f32 %v1529, 1.0
        %v1594 = vadd.f32 %v1530, 1.0
        %v1595 = vadd.f32 %v1531, 1.0
        %v1596 = vadd.f32 %v1532, 1.0
        %v1597 = vadd.f32 %v1533, 1.0
        %v1598 = vadd.f32 %v1534, 1.0
        %v1599 = vadd.f32 %v1535, 1.0
        %v1600 = vadd.f32 %v1536, 1.0
        %v1601 = vadd.f32 %v1537, 1.0
        %v1602 = vadd.f32 %v1538, 1.0
        %v1603 = vadd.f32 %v1539, 1.0
        %v1604 = vadd.f32 %v1540, 1.0
        %v1605 = vadd.f32 %v1541, 1.0
        %v1606 = vadd.f32 %v1542, 1.0
        %v1607 = vadd.f32 %v1543, 1.0
        %v1608 = vadd.f32 %v1544, 1.0
        %v1609 = vadd.f32 %v1545, 1.0
        %v1610 = vadd.f32 %v1546, 1.0
        %v1611 = vadd.f32 %v1547, 1.0
        %v1612 = vadd.f32 %v1548, 1.0
        %v1613 = vadd.f32 %v1549, 1.0
        %v1614 = vadd.f32 %v1550, 1.0
        %v1615 = vadd.f32 %v1551, 1.0
        %v1616 = vadd.f32 %v1552, 1.0
        %v1617 = vadd.f32 %v1553, 1.0
        %v1618 = vadd.f32 %v1554, 1.0
        %v1619 = vadd.f32 %v1555, 1.0
        %v1620 = vmul.f32 %v1556, %v1588
        %v1621 = vmul.f32 %v1557, %v1589
        %v1622 = vmul.f32 %v1558, %v1590
        %v1623 = vmul.f32 %v1559, %v1591
        %v1624 = vmul.f32 %v1560, %v1592
        %v1625 = vmul.f32 %v1561, %v1593
        %v1626 = vmul.f32 %v1562, %v1594
        %v1627 = vmul.f32 %v1563, %v1595
        %v1628 = vmul.f32 %v1564, %v1596
        %v1629 = vmul.f32 %v1565, %v1597
        %v1630 = vmul.f32 %v1566, %v1598
        %v1631 = vmul.f32 %v1567, %v1599
        %v1632 = vmul.f32 %v1568, %v1600
        %v1633 = vmul.f32 %v1569, %v1601
        %v1634 = vmul.f32 %v1570, %v1602
        %v1635 = vmul.f32 %v1571, %v1603
        %v1636 = vmul.f32 %v1572, %v1604
        %v1637 = vmul.f32 %v1573, %v1605
        %v1638 = vmul.f32 %v1574, %v1606
        %v1639 = vmul.f32 %v1575, %v1607
        %v1640 = vmul.f32 %v1576, %v1608
        %v1641 = vmul.f32 %v1577, %v1609
        %v1642 = vmul.f32 %v1578, %v1610
        %v1643 = vmul.f32 %v1579, %v1611
        %v1644 = vmul.f32 %v1580, %v1612
        %v1645 = vmul.f32 %v1581, %v1613
        %v1646 = vmul.f32 %v1582, %v1614
        %v1647 = vmul.f32 %v1583, %v1615
        %v1648 = vmul.f32 %v1584, %v1616
        %v1649 = vmul.f32 %v1585, %v1617
        %v1650 = vmul.f32 %v1586, %v1618
        %v1651 = vmul.f32 %v1587, %v1619
        %s1652 = scalar_lea.vmem [#allocation2], %s414
        %vm1653 = vcmask 523264
        %1654 = vst.msk [vmem:[%s1652] sm:$0xff] %vm1653, %v1620
        %1655 = vst.msk [vmem:[%s1652 + $0x8] sm:$0xff] %vm1653, %v1621
        %1656 = vst.msk [vmem:[%s1652 + $0x10] sm:$0xff] %vm1653, %v1622
        %1657 = vst.msk [vmem:[%s1652 + $0x18] sm:$0xff] %vm1653, %v1623
        %1658 = vst.msk [vmem:[%s1652 + $0x20] sm:$0xff] %vm1653, %v1624
        %1659 = vst.msk [vmem:[%s1652 + $0x28] sm:$0xff] %vm1653, %v1625
        %1660 = vst.msk [vmem:[%s1652 + $0x30] sm:$0xff] %vm1653, %v1626
        %1661 = vst.msk [vmem:[%s1652 + $0x38] sm:$0xff] %vm1653, %v1627
        %1662 = vst.msk [vmem:[%s1652 + $0x40] sm:$0xff] %vm1653, %v1628
        %1663 = vst.msk [vmem:[%s1652 + $0x48] sm:$0xff] %vm1653, %v1629
        %1664 = vst.msk [vmem:[%s1652 + $0x50] sm:$0xff] %vm1653, %v1630
        %1665 = vst.msk [vmem:[%s1652 + $0x58] sm:$0xff] %vm1653, %v1631
        %1666 = vst.msk [vmem:[%s1652 + $0x60] sm:$0xff] %vm1653, %v1632
        %1667 = vst.msk [vmem:[%s1652 + $0x68] sm:$0xff] %vm1653, %v1633
        %1668 = vst.msk [vmem:[%s1652 + $0x70] sm:$0xff] %vm1653, %v1634
        %1669 = vst.msk [vmem:[%s1652 + $0x78] sm:$0xff] %vm1653, %v1635
        %1670 = vst.msk [vmem:[%s1652 + $0x80] sm:$0xff] %vm1653, %v1636
        %1671 = vst.msk [vmem:[%s1652 + $0x88] sm:$0xff] %vm1653, %v1637
        %1672 = vst.msk [vmem:[%s1652 + $0x90] sm:$0xff] %vm1653, %v1638
        %1673 = vst.msk [vmem:[%s1652 + $0x98] sm:$0xff] %vm1653, %v1639
        %1674 = vst.msk [vmem:[%s1652 + $0xa0] sm:$0xff] %vm1653, %v1640
        %1675 = vst.msk [vmem:[%s1652 + $0xa8] sm:$0xff] %vm1653, %v1641
        %1676 = vst.msk [vmem:[%s1652 + $0xb0] sm:$0xff] %vm1653, %v1642
        %1677 = vst.msk [vmem:[%s1652 + $0xb8] sm:$0xff] %vm1653, %v1643
        %1678 = vst.msk [vmem:[%s1652 + $0xc0] sm:$0xff] %vm1653, %v1644
        %1679 = vst.msk [vmem:[%s1652 + $0xc8] sm:$0xff] %vm1653, %v1645
        %1680 = vst.msk [vmem:[%s1652 + $0xd0] sm:$0xff] %vm1653, %v1646
        %1681 = vst.msk [vmem:[%s1652 + $0xd8] sm:$0xff] %vm1653, %v1647
        %1682 = vst.msk [vmem:[%s1652 + $0xe0] sm:$0xff] %vm1653, %v1648
        %1683 = vst.msk [vmem:[%s1652 + $0xe8] sm:$0xff] %vm1653, %v1649
        %1684 = vst.msk [vmem:[%s1652 + $0xf0] sm:$0xff] %vm1653, %v1650
        %1685 = vst.msk [vmem:[%s1652 + $0xf8] sm:$0xff] %vm1653, %v1651
        %v1686 = vld [vmem:[#allocation3] sm:$0x1]
        %v1687 = vmul.f32 %v1620, %v1620
        %v1688 = vmul.f32 %v1621, %v1621
        %v1689 = vmul.f32 %v1622, %v1622
        %v1690 = vmul.f32 %v1623, %v1623
        %v1691 = vmul.f32 %v1624, %v1624
        %v1692 = vmul.f32 %v1625, %v1625
        %v1693 = vmul.f32 %v1626, %v1626
        %v1694 = vmul.f32 %v1627, %v1627
        %v1695 = vmul.f32 %v1628, %v1628
        %v1696 = vmul.f32 %v1629, %v1629
        %v1697 = vmul.f32 %v1630, %v1630
        %v1698 = vmul.f32 %v1631, %v1631
        %v1699 = vmul.f32 %v1632, %v1632
        %v1700 = vmul.f32 %v1633, %v1633
        %v1701 = vmul.f32 %v1634, %v1634
        %v1702 = vmul.f32 %v1635, %v1635
        %v1703 = vmul.f32 %v1636, %v1636
        %v1704 = vmul.f32 %v1637, %v1637
        %v1705 = vmul.f32 %v1638, %v1638
        %v1706 = vmul.f32 %v1639, %v1639
        %v1707 = vmul.f32 %v1640, %v1640
        %v1708 = vmul.f32 %v1641, %v1641
        %v1709 = vmul.f32 %v1642, %v1642
        %v1710 = vmul.f32 %v1643, %v1643
        %v1711 = vmul.f32 %v1644, %v1644
        %v1712 = vmul.f32 %v1645, %v1645
        %v1713 = vmul.f32 %v1646, %v1646
        %v1714 = vmul.f32 %v1647, %v1647
        %v1715 = vmul.f32 %v1648, %v1648
        %v1716 = vmul.f32 %v1649, %v1649
        %v1717 = vmul.f32 %v1650, %v1650
        %v1718 = vmul.f32 %v1651, %v1651
        %v1719 = vsel %vm1653, %v1687, 0.0
        %v1720 = vsel %vm1653, %v1688, 0.0
        %v1721 = vadd.f32 %v1719, %v1720
        %v1722 = vsel %vm1653, %v1689, 0.0
        %v1723 = vadd.f32 %v1721, %v1722
        %v1724 = vsel %vm1653, %v1690, 0.0
        %v1725 = vadd.f32 %v1723, %v1724
        %v1726 = vsel %vm1653, %v1691, 0.0
        %v1727 = vadd.f32 %v1725, %v1726
        %v1728 = vsel %vm1653, %v1692, 0.0
        %v1729 = vadd.f32 %v1727, %v1728
        %v1730 = vsel %vm1653, %v1693, 0.0
        %v1731 = vadd.f32 %v1729, %v1730
        %v1732 = vsel %vm1653, %v1694, 0.0
        %v1733 = vadd.f32 %v1731, %v1732
        %v1734 = vsel %vm1653, %v1695, 0.0
        %v1735 = vadd.f32 %v1733, %v1734
        %v1736 = vsel %vm1653, %v1696, 0.0
        %v1737 = vadd.f32 %v1735, %v1736
        %v1738 = vsel %vm1653, %v1697, 0.0
        %v1739 = vadd.f32 %v1737, %v1738
        %v1740 = vsel %vm1653, %v1698, 0.0
        %v1741 = vadd.f32 %v1739, %v1740
        %v1742 = vsel %vm1653, %v1699, 0.0
        %v1743 = vadd.f32 %v1741, %v1742
        %v1744 = vsel %vm1653, %v1700, 0.0
        %v1745 = vadd.f32 %v1743, %v1744
        %v1746 = vsel %vm1653, %v1701, 0.0
        %v1747 = vadd.f32 %v1745, %v1746
        %v1748 = vsel %vm1653, %v1702, 0.0
        %v1749 = vadd.f32 %v1747, %v1748
        %v1750 = vsel %vm1653, %v1703, 0.0
        %v1751 = vadd.f32 %v1749, %v1750
        %v1752 = vsel %vm1653, %v1704, 0.0
        %v1753 = vadd.f32 %v1751, %v1752
        %v1754 = vsel %vm1653, %v1705, 0.0
        %v1755 = vadd.f32 %v1753, %v1754
        %v1756 = vsel %vm1653, %v1706, 0.0
        %v1757 = vadd.f32 %v1755, %v1756
        %v1758 = vsel %vm1653, %v1707, 0.0
        %v1759 = vadd.f32 %v1757, %v1758
        %v1760 = vsel %vm1653, %v1708, 0.0
        %v1761 = vadd.f32 %v1759, %v1760
        %v1762 = vsel %vm1653, %v1709, 0.0
        %v1763 = vadd.f32 %v1761, %v1762
        %v1764 = vsel %vm1653, %v1710, 0.0
        %v1765 = vadd.f32 %v1763, %v1764
        %v1766 = vsel %vm1653, %v1711, 0.0
        %v1767 = vadd.f32 %v1765, %v1766
        %v1768 = vsel %vm1653, %v1712, 0.0
        %v1769 = vadd.f32 %v1767, %v1768
        %v1770 = vsel %vm1653, %v1713, 0.0
        %v1771 = vadd.f32 %v1769, %v1770
        %v1772 = vsel %vm1653, %v1714, 0.0
        %v1773 = vadd.f32 %v1771, %v1772
        %v1774 = vsel %vm1653, %v1715, 0.0
        %v1775 = vadd.f32 %v1773, %v1774
        %v1776 = vsel %vm1653, %v1716, 0.0
        %v1777 = vadd.f32 %v1775, %v1776
        %v1778 = vsel %vm1653, %v1717, 0.0
        %v1779 = vadd.f32 %v1777, %v1778
        %v1780 = vsel %vm1653, %v1718, 0.0
        %v1781 = vadd.f32 %v1779, %v1780
        %v1782 = vrot.slane %v1781, 4
        %v1783 = vadd.f32 %v1781, %v1782
        %v1784 = vrot.slane %v1783, 2
        %v1785 = vadd.f32 %v1783, %v1784
        %v1786 = vrot.slane %v1785, 1
        %v1787 = vadd.f32 %v1785, %v1786
        %v1788 = vadd.f32 %v1686, %v1787
        %vm1789 = vcmask 516096
        %1790 = vst.msk [vmem:[#allocation3] sm:$0x1] %vm1789, %v1788
        // Predicated region
        $region61: #{sd_cascade_res_block.3} parent=55 // pred_check
          %p1791 = pneg %p419
        $region62: #{sd_cascade_res_block.3} parent=55 // pred_check_branch
          %1793 = sbr.rel (%p1791) target = $region64
        $region63: #{sd_cascade_res_block.3} parent=55 // pred_region
          %v1794 = vld [vmem:[#allocation3] sm:$0x1]
          %v1795 = vld [vmem:[%s3] sm:$0x1]
          %v1796 = vrsqrt.pop %v1794
          %v1797 = vmul.f32 %v1794, %v1796
          %vm1798 = vcmp.eq.f32.partialorder %v1794, inf
          %v1799 = vsel %vm1798, %v1794, %v1797
          %vm1800 = vcmp.eq.f32.partialorder %v1794, 0.0
          %v1801 = vand.u32 %v1794, 2147483648
          %v1802 = vsel %vm1800, %v1801, %v1799
          %v1803 = vsel %vm1789, %v1802, 0.0
          %1804 = vadd.xlane.f32.xlu0 %v1803
          %v1805 = vpop.xlane.xlu0 %1804
          %v1806 = vrcp.pop 64.0
          %v1807 = vmul.f32 %v1805, %v1806
          %v1808 = vadd.f32 %v1807, 1e-06
          %v1809 = vrcp.pop %v1808
          %v1810 = vmul.f32 %v1802, %v1809
          %v1811 = vmul.f32 %v1795, %v1810
          %v1812 = vadd.f32 %v1811, 1.0
          %1813 = vst.msk [vmem:[#allocation4] sm:$0x1] %vm1789, %v1812
        $region64: #{sd_cascade_res_block.3} parent=55 // pred_fallthru
          _
      $region56: #{sd_cascade_res_block.3} parent=51 // pred_fallthru
        _
      %p1814 = scmp.eq.s32.totalorder %s25, 1
      // Predicated region
      $region65: #{sd_cascade_res_block.3} parent=51 // pred_check
        %p1815 = pneg %p1814
      $region66: #{sd_cascade_res_block.3} parent=51 // pred_check_branch
        %1817 = sbr.rel (%p1815) target = $region68
      $region67: #{sd_cascade_res_block.3} parent=51 // pred_region
        %s1818 = scalar_lea.vmem [#allocation2], %s414
        %v1819 = vld [vmem:[%s1818] sm:$0xff]
        %v1820 = vld [vmem:[%s1818 + $0x8] sm:$0xff]
        %v1821 = vld [vmem:[%s1818 + $0x10] sm:$0xff]
        %v1822 = vld [vmem:[%s1818 + $0x18] sm:$0xff]
        %v1823 = vld [vmem:[%s1818 + $0x20] sm:$0xff]
        %v1824 = vld [vmem:[%s1818 + $0x28] sm:$0xff]
        %v1825 = vld [vmem:[%s1818 + $0x30] sm:$0xff]
        %v1826 = vld [vmem:[%s1818 + $0x38] sm:$0xff]
        %v1827 = vld [vmem:[%s1818 + $0x40] sm:$0xff]
        %v1828 = vld [vmem:[%s1818 + $0x48] sm:$0xff]
        %v1829 = vld [vmem:[%s1818 + $0x50] sm:$0xff]
        %v1830 = vld [vmem:[%s1818 + $0x58] sm:$0xff]
        %v1831 = vld [vmem:[%s1818 + $0x60] sm:$0xff]
        %v1832 = vld [vmem:[%s1818 + $0x68] sm:$0xff]
        %v1833 = vld [vmem:[%s1818 + $0x70] sm:$0xff]
        %v1834 = vld [vmem:[%s1818 + $0x78] sm:$0xff]
        %v1835 = vld [vmem:[%s1818 + $0x80] sm:$0xff]
        %v1836 = vld [vmem:[%s1818 + $0x88] sm:$0xff]
        %v1837 = vld [vmem:[%s1818 + $0x90] sm:$0xff]
        %v1838 = vld [vmem:[%s1818 + $0x98] sm:$0xff]
        %v1839 = vld [vmem:[%s1818 + $0xa0] sm:$0xff]
        %v1840 = vld [vmem:[%s1818 + $0xa8] sm:$0xff]
        %v1841 = vld [vmem:[%s1818 + $0xb0] sm:$0xff]
        %v1842 = vld [vmem:[%s1818 + $0xb8] sm:$0xff]
        %v1843 = vld [vmem:[%s1818 + $0xc0] sm:$0xff]
        %v1844 = vld [vmem:[%s1818 + $0xc8] sm:$0xff]
        %v1845 = vld [vmem:[%s1818 + $0xd0] sm:$0xff]
        %v1846 = vld [vmem:[%s1818 + $0xd8] sm:$0xff]
        %v1847 = vld [vmem:[%s1818 + $0xe0] sm:$0xff]
        %v1848 = vld [vmem:[%s1818 + $0xe8] sm:$0xff]
        %v1849 = vld [vmem:[%s1818 + $0xf0] sm:$0xff]
        %v1850 = vld [vmem:[%s1818 + $0xf8] sm:$0xff]
        %v1851 = vld [vmem:[#allocation4] sm:$0x1]
        %v1853 = vlaneseq
        %v1854 = vshrl.u32 %v1853, 7
        %v1855 = vsub.s32 0, %v1854
        %v1856 = vrot.slane %v1851, %v1855
        %v1858 = vmul.f32 %v1819, %v1856
        %v1859 = vmul.f32 %v1820, %v1856
        %v1860 = vmul.f32 %v1821, %v1856
        %v1861 = vmul.f32 %v1822, %v1856
        %v1862 = vmul.f32 %v1823, %v1856
        %v1863 = vmul.f32 %v1824, %v1856
        %v1864 = vmul.f32 %v1825, %v1856
        %v1865 = vmul.f32 %v1826, %v1856
        %v1866 = vmul.f32 %v1827, %v1856
        %v1867 = vmul.f32 %v1828, %v1856
        %v1868 = vmul.f32 %v1829, %v1856
        %v1869 = vmul.f32 %v1830, %v1856
        %v1870 = vmul.f32 %v1831, %v1856
        %v1871 = vmul.f32 %v1832, %v1856
        %v1872 = vmul.f32 %v1833, %v1856
        %v1873 = vmul.f32 %v1834, %v1856
        %v1874 = vmul.f32 %v1835, %v1856
        %v1875 = vmul.f32 %v1836, %v1856
        %v1876 = vmul.f32 %v1837, %v1856
        %v1877 = vmul.f32 %v1838, %v1856
        %v1878 = vmul.f32 %v1839, %v1856
        %v1879 = vmul.f32 %v1840, %v1856
        %v1880 = vmul.f32 %v1841, %v1856
        %v1881 = vmul.f32 %v1842, %v1856
        %v1882 = vmul.f32 %v1843, %v1856
        %v1883 = vmul.f32 %v1844, %v1856
        %v1884 = vmul.f32 %v1845, %v1856
        %v1885 = vmul.f32 %v1846, %v1856
        %v1886 = vmul.f32 %v1847, %v1856
        %v1887 = vmul.f32 %v1848, %v1856
        %v1888 = vmul.f32 %v1849, %v1856
        %v1889 = vmul.f32 %v1850, %v1856
        %v1890 = vld [vmem:[%s4] sm:$0x1]
        %v1892 = vlaneseq
        %v1893 = vshrl.u32 %v1892, 7
        %v1894 = vsub.s32 0, %v1893
        %v1895 = vrot.slane %v1890, %v1894
        %v1897 = vadd.f32 %v1858, %v1895
        %v1898 = vadd.f32 %v1859, %v1895
        %v1899 = vadd.f32 %v1860, %v1895
        %v1900 = vadd.f32 %v1861, %v1895
        %v1901 = vadd.f32 %v1862, %v1895
        %v1902 = vadd.f32 %v1863, %v1895
        %v1903 = vadd.f32 %v1864, %v1895
        %v1904 = vadd.f32 %v1865, %v1895
        %v1905 = vadd.f32 %v1866, %v1895
        %v1906 = vadd.f32 %v1867, %v1895
        %v1907 = vadd.f32 %v1868, %v1895
        %v1908 = vadd.f32 %v1869, %v1895
        %v1909 = vadd.f32 %v1870, %v1895
        %v1910 = vadd.f32 %v1871, %v1895
        %v1911 = vadd.f32 %v1872, %v1895
        %v1912 = vadd.f32 %v1873, %v1895
        %v1913 = vadd.f32 %v1874, %v1895
        %v1914 = vadd.f32 %v1875, %v1895
        %v1915 = vadd.f32 %v1876, %v1895
        %v1916 = vadd.f32 %v1877, %v1895
        %v1917 = vadd.f32 %v1878, %v1895
        %v1918 = vadd.f32 %v1879, %v1895
        %v1919 = vadd.f32 %v1880, %v1895
        %v1920 = vadd.f32 %v1881, %v1895
        %v1921 = vadd.f32 %v1882, %v1895
        %v1922 = vadd.f32 %v1883, %v1895
        %v1923 = vadd.f32 %v1884, %v1895
        %v1924 = vadd.f32 %v1885, %v1895
        %v1925 = vadd.f32 %v1886, %v1895
        %v1926 = vadd.f32 %v1887, %v1895
        %v1927 = vadd.f32 %v1888, %v1895
        %v1928 = vadd.f32 %v1889, %v1895
        %v1929 = vld [vmem:[%s5] sm:$0xff]
        %v1930 = vld [vmem:[%s5 + $0x8] sm:$0xff]
        %v1931 = vld [vmem:[%s5 + $0x10] sm:$0xff]
        %v1932 = vld [vmem:[%s5 + $0x18] sm:$0xff]
        %v1933 = vld [vmem:[%s5 + $0x20] sm:$0xff]
        %v1934 = vld [vmem:[%s5 + $0x28] sm:$0xff]
        %v1935 = vld [vmem:[%s5 + $0x30] sm:$0xff]
        %v1936 = vld [vmem:[%s5 + $0x38] sm:$0xff]
        %v1937 = vld [vmem:[%s6] sm:$0x1]
        %v1939 = vlaneseq
        %v1940 = vshrl.u32 %v1939, 7
        %v1941 = vsub.s32 0, %v1940
        %v1942 = vrot.slane %v1937, %v1941
        %vm1944 = vcmask 523264
        %v1946 = vsel %vm1944, %v1897, 0
        %v1949 = vsel %vm1944, %v1898, 0
        %v1952 = vsel %vm1944, %v1899, 0
        %v1955 = vsel %vm1944, %v1900, 0
        %v1958 = vsel %vm1944, %v1901, 0
        %v1961 = vsel %vm1944, %v1902, 0
        %v1964 = vsel %vm1944, %v1903, 0
        %v1967 = vsel %vm1944, %v1904, 0
        %v1970 = vsel %vm1944, %v1905, 0
        %v1973 = vsel %vm1944, %v1906, 0
        %v1976 = vsel %vm1944, %v1907, 0
        %v1979 = vsel %vm1944, %v1908, 0
        %v1982 = vsel %vm1944, %v1909, 0
        %v1985 = vsel %vm1944, %v1910, 0
        %v1988 = vsel %vm1944, %v1911, 0
        %v1991 = vsel %vm1944, %v1912, 0
        %v1994 = vsel %vm1944, %v1913, 0
        %v1997 = vsel %vm1944, %v1914, 0
        %v2000 = vsel %vm1944, %v1915, 0
        %v2003 = vsel %vm1944, %v1916, 0
        %v2006 = vsel %vm1944, %v1917, 0
        %v2009 = vsel %vm1944, %v1918, 0
        %v2012 = vsel %vm1944, %v1919, 0
        %v2015 = vsel %vm1944, %v1920, 0
        %v2018 = vsel %vm1944, %v1921, 0
        %v2021 = vsel %vm1944, %v1922, 0
        %v2024 = vsel %vm1944, %v1923, 0
        %v2027 = vsel %vm1944, %v1924, 0
        %v2030 = vsel %vm1944, %v1925, 0
        %v2033 = vsel %vm1944, %v1926, 0
        %v2036 = vsel %vm1944, %v1927, 0
        %v2039 = vsel %vm1944, %v1928, 0
        %2041 = vmatprep.subr.mxu0 0.0
        %2042 = vmatpush1.msra.mxu0 %v1929
        %2043 = vmatprep.subr.mxu0 0.0
        %2044 = vmatpush1.msra.mxu0 %v1930
        %2045 = vmatprep.subr.mxu0 0.0
        %2046 = vmatpush1.msra.mxu0 %v1931
        %2047 = vmatprep.subr.mxu0 0.0
        %2048 = vmatpush1.msra.mxu0 %v1932
        %2049 = vmatprep.subr.mxu0 0.0
        %2050 = vmatpush1.msra.mxu0 %v1933
        %2051 = vmatprep.subr.mxu0 0.0
        %2052 = vmatpush1.msra.mxu0 %v1934
        %2053 = vmatprep.subr.mxu0 0.0
        %2054 = vmatpush1.msra.mxu0 %v1935
        %2055 = vmatprep.subr.mxu0 0.0
        %2056 = vmatpush1.msra.mxu0 %v1936
        %2057 = vmatprep.subr.mxu0 0.0
        %2058 = vmatpush1.msra.mxu0 0.0
        %2059 = vmatprep.subr.mxu0 0.0
        %2060 = vmatpush1.msra.mxu0 0.0
        %2061 = vmatprep.subr.mxu0 0.0
        %2062 = vmatpush1.msra.mxu0 0.0
        %2063 = vmatprep.subr.mxu0 0.0
        %2064 = vmatpush1.msra.mxu0 0.0
        %2065 = vmatprep.subr.mxu0 0.0
        %2066 = vmatpush1.msra.mxu0 0.0
        %2067 = vmatprep.subr.mxu0 0.0
        %2068 = vmatpush1.msra.mxu0 0.0
        %2069 = vmatprep.subr.mxu0 0.0
        %2070 = vmatpush1.msra.mxu0 0.0
        %2071 = vmatprep.subr.mxu0 0.0
        %2072 = vmatpush1.msra.mxu0 0.0
        %2073 = vmatprep.subr.mxu0 0.0
        %2074 = vmatpush1.msra.mxu0 0.0
        %2075 = vmatprep.subr.mxu0 0.0
        %2076 = vmatpush1.msra.mxu0 0.0
        %2077 = vmatprep.subr.mxu0 0.0
        %2078 = vmatpush1.msra.mxu0 0.0
        %2079 = vmatprep.subr.mxu0 0.0
        %2080 = vmatpush1.msra.mxu0 0.0
        %2081 = vmatprep.subr.mxu0 0.0
        %2082 = vmatpush1.msra.mxu0 0.0
        %2083 = vmatprep.subr.mxu0 0.0
        %2084 = vmatpush1.msra.mxu0 0.0
        %2085 = vmatprep.subr.mxu0 0.0
        %2086 = vmatpush1.msra.mxu0 0.0
        %2087 = vmatprep.subr.mxu0 0.0
        %2088 = vmatpush1.msra.mxu0 0.0
        %2089 = vmatprep.subr.mxu0 0.0
        %2090 = vmatpush1.msra.mxu0 0.0
        %2091 = vmatprep.subr.mxu0 0.0
        %2092 = vmatpush1.msra.mxu0 0.0
        %2093 = vmatprep.subr.mxu0 0.0
        %2094 = vmatpush1.msra.mxu0 0.0
        %2095 = vmatprep.subr.mxu0 0.0
        %2096 = vmatpush1.msra.mxu0 0.0
        %2097 = vmatprep.subr.mxu0 0.0
        %2098 = vmatpush1.msra.mxu0 0.0
        %2099 = vmatprep.subr.mxu0 0.0
        %2100 = vmatpush1.msra.mxu0 0.0
        %2101 = vmatprep.subr.mxu0 0.0
        %2102 = vmatpush1.msra.mxu0 0.0
        %2103 = vmatprep.subr.mxu0 0.0
        %2104 = vmatpush1.msra.mxu0 0.0
        %2105 = vmatprep.mubr.f32.mxu0 0.0
        %2106 = vmatmul.mubr.f32.gmra.mrb[0].mxu0 %v1946
        %v2107 = vpop.f32.mrb[0].mxu0
        %v2108 = vadd.f32 %v1942, %v2107
        %v2109 = vpop.f32.mrb[0].mxu0
        %2110 = vmatprep.mubr.f32.mxu0 0.0
        %2111 = vmatmul.mubr.f32.gmra.mrb[0].mxu0 %v1949
        %v2112 = vpop.f32.mrb[0].mxu0
        %v2113 = vadd.f32 %v1942, %v2112
        %v2114 = vpop.f32.mrb[0].mxu0
        %2115 = vmatprep.mubr.f32.mxu0 0.0
        %2116 = vmatmul.mubr.f32.gmra.mrb[0].mxu0 %v1952
        %v2117 = vpop.f32.mrb[0].mxu0
        %v2118 = vadd.f32 %v1942, %v2117
        %v2119 = vpop.f32.mrb[0].mxu0
        %2120 = vmatprep.mubr.f32.mxu0 0.0
        %2121 = vmatmul.mubr.f32.gmra.mrb[0].mxu0 %v1955
        %v2122 = vpop.f32.mrb[0].mxu0
        %v2123 = vadd.f32 %v1942, %v2122
        %v2124 = vpop.f32.mrb[0].mxu0
        %2125 = vmatprep.mubr.f32.mxu0 0.0
        %2126 = vmatmul.mubr.f32.gmra.mrb[0].mxu0 %v1958
        %v2127 = vpop.f32.mrb[0].mxu0
        %v2128 = vadd.f32 %v1942, %v2127
        %v2129 = vpop.f32.mrb[0].mxu0
        %2130 = vmatprep.mubr.f32.mxu0 0.0
        %2131 = vmatmul.mubr.f32.gmra.mrb[0].mxu0 %v1961
        %v2132 = vpop.f32.mrb[0].mxu0
        %v2133 = vadd.f32 %v1942, %v2132
        %v2134 = vpop.f32.mrb[0].mxu0
        %2135 = vmatprep.mubr.f32.mxu0 0.0
        %2136 = vmatmul.mubr.f32.gmra.mrb[0].mxu0 %v1964
        %v2137 = vpop.f32.mrb[0].mxu0
        %v2138 = vadd.f32 %v1942, %v2137
        %v2139 = vpop.f32.mrb[0].mxu0
        %2140 = vmatprep.mubr.f32.mxu0 0.0
        %2141 = vmatmul.mubr.f32.gmra.mrb[0].mxu0 %v1967
        %v2142 = vpop.f32.mrb[0].mxu0
        %v2143 = vadd.f32 %v1942, %v2142
        %v2144 = vpop.f32.mrb[0].mxu0
        %2145 = vmatprep.mubr.f32.mxu0 0.0
        %2146 = vmatmul.mubr.f32.gmra.mrb[0].mxu0 %v1970
        %v2147 = vpop.f32.mrb[0].mxu0
        %v2148 = vadd.f32 %v1942, %v2147
        %v2149 = vpop.f32.mrb[0].mxu0
        %2150 = vmatprep.mubr.f32.mxu0 0.0
        %2151 = vmatmul.mubr.f32.gmra.mrb[0].mxu0 %v1973
        %v2152 = vpop.f32.mrb[0].mxu0
        %v2153 = vadd.f32 %v1942, %v2152
        %v2154 = vpop.f32.mrb[0].mxu0
        %2155 = vmatprep.mubr.f32.mxu0 0.0
        %2156 = vmatmul.mubr.f32.gmra.mrb[0].mxu0 %v1976
        %v2157 = vpop.f32.mrb[0].mxu0
        %v2158 = vadd.f32 %v1942, %v2157
        %v2159 = vpop.f32.mrb[0].mxu0
        %2160 = vmatprep.mubr.f32.mxu0 0.0
        %2161 = vmatmul.mubr.f32.gmra.mrb[0].mxu0 %v1979
        %v2162 = vpop.f32.mrb[0].mxu0
        %v2163 = vadd.f32 %v1942, %v2162
        %v2164 = vpop.f32.mrb[0].mxu0
        %2165 = vmatprep.mubr.f32.mxu0 0.0
        %2166 = vmatmul.mubr.f32.gmra.mrb[0].mxu0 %v1982
        %v2167 = vpop.f32.mrb[0].mxu0
        %v2168 = vadd.f32 %v1942, %v2167
        %v2169 = vpop.f32.mrb[0].mxu0
        %2170 = vmatprep.mubr.f32.mxu0 0.0
        %2171 = vmatmul.mubr.f32.gmra.mrb[0].mxu0 %v1985
        %v2172 = vpop.f32.mrb[0].mxu0
        %v2173 = vadd.f32 %v1942, %v2172
        %v2174 = vpop.f32.mrb[0].mxu0
        %2175 = vmatprep.mubr.f32.mxu0 0.0
        %2176 = vmatmul.mubr.f32.gmra.mrb[0].mxu0 %v1988
        %v2177 = vpop.f32.mrb[0].mxu0
        %v2178 = vadd.f32 %v1942, %v2177
        %v2179 = vpop.f32.mrb[0].mxu0
        %2180 = vmatprep.mubr.f32.mxu0 0.0
        %2181 = vmatmul.mubr.f32.gmra.mrb[0].mxu0 %v1991
        %v2182 = vpop.f32.mrb[0].mxu0
        %v2183 = vadd.f32 %v1942, %v2182
        %v2184 = vpop.f32.mrb[0].mxu0
        %2185 = vmatprep.mubr.f32.mxu0 0.0
        %2186 = vmatmul.mubr.f32.gmra.mrb[0].mxu0 %v1994
        %v2187 = vpop.f32.mrb[0].mxu0
        %v2188 = vadd.f32 %v1942, %v2187
        %v2189 = vpop.f32.mrb[0].mxu0
        %2190 = vmatprep.mubr.f32.mxu0 0.0
        %2191 = vmatmul.mubr.f32.gmra.mrb[0].mxu0 %v1997
        %v2192 = vpop.f32.mrb[0].mxu0
        %v2193 = vadd.f32 %v1942, %v2192
        %v2194 = vpop.f32.mrb[0].mxu0
        %2195 = vmatprep.mubr.f32.mxu0 0.0
        %2196 = vmatmul.mubr.f32.gmra.mrb[0].mxu0 %v2000
        %v2197 = vpop.f32.mrb[0].mxu0
        %v2198 = vadd.f32 %v1942, %v2197
        %v2199 = vpop.f32.mrb[0].mxu0
        %2200 = vmatprep.mubr.f32.mxu0 0.0
        %2201 = vmatmul.mubr.f32.gmra.mrb[0].mxu0 %v2003
        %v2202 = vpop.f32.mrb[0].mxu0
        %v2203 = vadd.f32 %v1942, %v2202
        %v2204 = vpop.f32.mrb[0].mxu0
        %2205 = vmatprep.mubr.f32.mxu0 0.0
        %2206 = vmatmul.mubr.f32.gmra.mrb[0].mxu0 %v2006
        %v2207 = vpop.f32.mrb[0].mxu0
        %v2208 = vadd.f32 %v1942, %v2207
        %v2209 = vpop.f32.mrb[0].mxu0
        %2210 = vmatprep.mubr.f32.mxu0 0.0
        %2211 = vmatmul.mubr.f32.gmra.mrb[0].mxu0 %v2009
        %v2212 = vpop.f32.mrb[0].mxu0
        %v2213 = vadd.f32 %v1942, %v2212
        %v2214 = vpop.f32.mrb[0].mxu0
        %2215 = vmatprep.mubr.f32.mxu0 0.0
        %2216 = vmatmul.mubr.f32.gmra.mrb[0].mxu0 %v2012
        %v2217 = vpop.f32.mrb[0].mxu0
        %v2218 = vadd.f32 %v1942, %v2217
        %v2219 = vpop.f32.mrb[0].mxu0
        %2220 = vmatprep.mubr.f32.mxu0 0.0
        %2221 = vmatmul.mubr.f32.gmra.mrb[0].mxu0 %v2015
        %v2222 = vpop.f32.mrb[0].mxu0
        %v2223 = vadd.f32 %v1942, %v2222
        %v2224 = vpop.f32.mrb[0].mxu0
        %2225 = vmatprep.mubr.f32.mxu0 0.0
        %2226 = vmatmul.mubr.f32.gmra.mrb[0].mxu0 %v2018
        %v2227 = vpop.f32.mrb[0].mxu0
        %v2228 = vadd.f32 %v1942, %v2227
        %v2229 = vpop.f32.mrb[0].mxu0
        %2230 = vmatprep.mubr.f32.mxu0 0.0
        %2231 = vmatmul.mubr.f32.gmra.mrb[0].mxu0 %v2021
        %v2232 = vpop.f32.mrb[0].mxu0
        %v2233 = vadd.f32 %v1942, %v2232
        %v2234 = vpop.f32.mrb[0].mxu0
        %2235 = vmatprep.mubr.f32.mxu0 0.0
        %2236 = vmatmul.mubr.f32.gmra.mrb[0].mxu0 %v2024
        %v2237 = vpop.f32.mrb[0].mxu0
        %v2238 = vadd.f32 %v1942, %v2237
        %v2239 = vpop.f32.mrb[0].mxu0
        %2240 = vmatprep.mubr.f32.mxu0 0.0
        %2241 = vmatmul.mubr.f32.gmra.mrb[0].mxu0 %v2027
        %v2242 = vpop.f32.mrb[0].mxu0
        %v2243 = vadd.f32 %v1942, %v2242
        %v2244 = vpop.f32.mrb[0].mxu0
        %2245 = vmatprep.mubr.f32.mxu0 0.0
        %2246 = vmatmul.mubr.f32.gmra.mrb[0].mxu0 %v2030
        %v2247 = vpop.f32.mrb[0].mxu0
        %v2248 = vadd.f32 %v1942, %v2247
        %v2249 = vpop.f32.mrb[0].mxu0
        %2250 = vmatprep.mubr.f32.mxu0 0.0
        %2251 = vmatmul.mubr.f32.gmra.mrb[0].mxu0 %v2033
        %v2252 = vpop.f32.mrb[0].mxu0
        %v2253 = vadd.f32 %v1942, %v2252
        %v2254 = vpop.f32.mrb[0].mxu0
        %2255 = vmatprep.mubr.f32.mxu0 0.0
        %2256 = vmatmul.mubr.f32.gmra.mrb[0].mxu0 %v2036
        %v2257 = vpop.f32.mrb[0].mxu0
        %v2258 = vadd.f32 %v1942, %v2257
        %v2259 = vpop.f32.mrb[0].mxu0
        %2260 = vmatprep.mubr.f32.mxu0 0.0
        %2261 = vmatmul.mubr.f32.gmra.mrb[0].mxu0 %v2039
        %v2262 = vpop.f32.mrb[0].mxu0
        %v2263 = vadd.f32 %v1942, %v2262
        %v2264 = vpop.f32.mrb[0].mxu0
        %2265 = vdwg.mxu0
        %v2266 = vld [vmem:[%s399] sm:$0xff]
        %v2267 = vld [vmem:[%s399 + $0x8] sm:$0xff]
        %v2268 = vld [vmem:[%s399 + $0x10] sm:$0xff]
        %v2269 = vld [vmem:[%s399 + $0x18] sm:$0xff]
        %v2270 = vld [vmem:[%s399 + $0x20] sm:$0xff]
        %v2271 = vld [vmem:[%s399 + $0x28] sm:$0xff]
        %v2272 = vld [vmem:[%s399 + $0x30] sm:$0xff]
        %v2273 = vld [vmem:[%s399 + $0x38] sm:$0xff]
        %v2274 = vld [vmem:[%s399 + $0x40] sm:$0xff]
        %v2275 = vld [vmem:[%s399 + $0x48] sm:$0xff]
        %v2276 = vld [vmem:[%s399 + $0x50] sm:$0xff]
        %v2277 = vld [vmem:[%s399 + $0x58] sm:$0xff]
        %v2278 = vld [vmem:[%s399 + $0x60] sm:$0xff]
        %v2279 = vld [vmem:[%s399 + $0x68] sm:$0xff]
        %v2280 = vld [vmem:[%s399 + $0x70] sm:$0xff]
        %v2281 = vld [vmem:[%s399 + $0x78] sm:$0xff]
        %v2282 = vld [vmem:[%s399 + $0x80] sm:$0xff]
        %v2283 = vld [vmem:[%s399 + $0x88] sm:$0xff]
        %v2284 = vld [vmem:[%s399 + $0x90] sm:$0xff]
        %v2285 = vld [vmem:[%s399 + $0x98] sm:$0xff]
        %v2286 = vld [vmem:[%s399 + $0xa0] sm:$0xff]
        %v2287 = vld [vmem:[%s399 + $0xa8] sm:$0xff]
        %v2288 = vld [vmem:[%s399 + $0xb0] sm:$0xff]
        %v2289 = vld [vmem:[%s399 + $0xb8] sm:$0xff]
        %v2290 = vld [vmem:[%s399 + $0xc0] sm:$0xff]
        %v2291 = vld [vmem:[%s399 + $0xc8] sm:$0xff]
        %v2292 = vld [vmem:[%s399 + $0xd0] sm:$0xff]
        %v2293 = vld [vmem:[%s399 + $0xd8] sm:$0xff]
        %v2294 = vld [vmem:[%s399 + $0xe0] sm:$0xff]
        %v2295 = vld [vmem:[%s399 + $0xe8] sm:$0xff]
        %v2296 = vld [vmem:[%s399 + $0xf0] sm:$0xff]
        %v2297 = vld [vmem:[%s399 + $0xf8] sm:$0xff]
        %v2298 = vadd.f32 %v2108, %v2266
        %v2299 = vadd.f32 %v2113, %v2267
        %v2300 = vadd.f32 %v2118, %v2268
        %v2301 = vadd.f32 %v2123, %v2269
        %v2302 = vadd.f32 %v2128, %v2270
        %v2303 = vadd.f32 %v2133, %v2271
        %v2304 = vadd.f32 %v2138, %v2272
        %v2305 = vadd.f32 %v2143, %v2273
        %v2306 = vadd.f32 %v2148, %v2274
        %v2307 = vadd.f32 %v2153, %v2275
        %v2308 = vadd.f32 %v2158, %v2276
        %v2309 = vadd.f32 %v2163, %v2277
        %v2310 = vadd.f32 %v2168, %v2278
        %v2311 = vadd.f32 %v2173, %v2279
        %v2312 = vadd.f32 %v2178, %v2280
        %v2313 = vadd.f32 %v2183, %v2281
        %v2314 = vadd.f32 %v2188, %v2282
        %v2315 = vadd.f32 %v2193, %v2283
        %v2316 = vadd.f32 %v2198, %v2284
        %v2317 = vadd.f32 %v2203, %v2285
        %v2318 = vadd.f32 %v2208, %v2286
        %v2319 = vadd.f32 %v2213, %v2287
        %v2320 = vadd.f32 %v2218, %v2288
        %v2321 = vadd.f32 %v2223, %v2289
        %v2322 = vadd.f32 %v2228, %v2290
        %v2323 = vadd.f32 %v2233, %v2291
        %v2324 = vadd.f32 %v2238, %v2292
        %v2325 = vadd.f32 %v2243, %v2293
        %v2326 = vadd.f32 %v2248, %v2294
        %v2327 = vadd.f32 %v2253, %v2295
        %v2328 = vadd.f32 %v2258, %v2296
        %v2329 = vadd.f32 %v2263, %v2297
        %vm2330 = vcmask 130048
        %2331 = vst.msk [vmem:[%s411] sm:$0xff] %vm2330, %v2298
        %2332 = vst.msk [vmem:[%s411 + $0x8] sm:$0xff] %vm2330, %v2299
        %2333 = vst.msk [vmem:[%s411 + $0x10] sm:$0xff] %vm2330, %v2300
        %2334 = vst.msk [vmem:[%s411 + $0x18] sm:$0xff] %vm2330, %v2301
        %2335 = vst.msk [vmem:[%s411 + $0x20] sm:$0xff] %vm2330, %v2302
        %2336 = vst.msk [vmem:[%s411 + $0x28] sm:$0xff] %vm2330, %v2303
        %2337 = vst.msk [vmem:[%s411 + $0x30] sm:$0xff] %vm2330, %v2304
        %2338 = vst.msk [vmem:[%s411 + $0x38] sm:$0xff] %vm2330, %v2305
        %2339 = vst.msk [vmem:[%s411 + $0x40] sm:$0xff] %vm2330, %v2306
        %2340 = vst.msk [vmem:[%s411 + $0x48] sm:$0xff] %vm2330, %v2307
        %2341 = vst.msk [vmem:[%s411 + $0x50] sm:$0xff] %vm2330, %v2308
        %2342 = vst.msk [vmem:[%s411 + $0x58] sm:$0xff] %vm2330, %v2309
        %2343 = vst.msk [vmem:[%s411 + $0x60] sm:$0xff] %vm2330, %v2310
        %2344 = vst.msk [vmem:[%s411 + $0x68] sm:$0xff] %vm2330, %v2311
        %2345 = vst.msk [vmem:[%s411 + $0x70] sm:$0xff] %vm2330, %v2312
        %2346 = vst.msk [vmem:[%s411 + $0x78] sm:$0xff] %vm2330, %v2313
        %2347 = vst.msk [vmem:[%s411 + $0x80] sm:$0xff] %vm2330, %v2314
        %2348 = vst.msk [vmem:[%s411 + $0x88] sm:$0xff] %vm2330, %v2315
        %2349 = vst.msk [vmem:[%s411 + $0x90] sm:$0xff] %vm2330, %v2316
        %2350 = vst.msk [vmem:[%s411 + $0x98] sm:$0xff] %vm2330, %v2317
        %2351 = vst.msk [vmem:[%s411 + $0xa0] sm:$0xff] %vm2330, %v2318
        %2352 = vst.msk [vmem:[%s411 + $0xa8] sm:$0xff] %vm2330, %v2319
        %2353 = vst.msk [vmem:[%s411 + $0xb0] sm:$0xff] %vm2330, %v2320
        %2354 = vst.msk [vmem:[%s411 + $0xb8] sm:$0xff] %vm2330, %v2321
        %2355 = vst.msk [vmem:[%s411 + $0xc0] sm:$0xff] %vm2330, %v2322
        %2356 = vst.msk [vmem:[%s411 + $0xc8] sm:$0xff] %vm2330, %v2323
        %2357 = vst.msk [vmem:[%s411 + $0xd0] sm:$0xff] %vm2330, %v2324
        %2358 = vst.msk [vmem:[%s411 + $0xd8] sm:$0xff] %vm2330, %v2325
        %2359 = vst.msk [vmem:[%s411 + $0xe0] sm:$0xff] %vm2330, %v2326
        %2360 = vst.msk [vmem:[%s411 + $0xe8] sm:$0xff] %vm2330, %v2327
        %2361 = vst.msk [vmem:[%s411 + $0xf0] sm:$0xff] %vm2330, %v2328
        %2362 = vst.msk [vmem:[%s411 + $0xf8] sm:$0xff] %vm2330, %v2329
      $region68: #{sd_cascade_res_block.3} parent=51 // pred_fallthru
        _
      %s2363 = smul.u32 %s25, %s26
      %s2364 = smul.u32 32, %s2363
      %p2365 = scmp.lt.s32.totalorder %s24, 1
      %s2366 = scalar_select %p2365, %s24, 1
      %p2367 = scmp.lt.s32.totalorder %s2364, 31
      %s2368 = scalar_select %p2367, %s2364, 31
      %s2369 = smul.addr %s2366, 32
      %s2370 = sadd.s32 %s2368, %s2369
      %s2371 = smul.addr %s2370, 8
      %s2372 = scalar_lea.vmem %s8, %s2371
      // Predicated region
      $region69: #{sd_cascade_res_block.3} parent=51 // pred_check
        %p2373 = pneg %p248
      $region70: #{sd_cascade_res_block.3} parent=51 // pred_check_branch
        %2375 = sbr.rel (%p2373) target = $region72
      $region71: #{sd_cascade_res_block.3} parent=51 // pred_region
        %s2376 = smul.u32 %s25, %s26
        %s2377 = smul.u32 32, %s2376
      $region72: #{sd_cascade_res_block.3} parent=51 // pred_fallthru
        _
    $region52: #{sd_cascade_res_block.3} parent=5 // pred_fallthru
      _
    %p2378 = scmp.le.s32.totalorder 2, %s14
    // Predicated region
    $region73: #{sd_cascade_res_block.3} parent=5 // pred_check
      %p2379 = pneg %p2378
    $region74: #{sd_cascade_res_block.3} parent=5 // pred_check_branch
      %2381 = sbr.rel (%p2379) target = $region76
    $region75: #{sd_cascade_res_block.3} parent=5 // pred_region
      %s2382 = ssub.s32 %s14, 2
      // Predicated region
      $region77: #{sd_cascade_res_block.3} parent=75 // pred_check
        %p2383 = pneg %p254
      $region78: #{sd_cascade_res_block.3} parent=75 // pred_check_branch
        %2385 = sbr.rel (%p2383) target = $region80
      $region79: #{sd_cascade_res_block.3} parent=75 // pred_region
        %s2386 = smul.u32 %s28, %s29
        %s2387 = smul.u32 32, %s2386
        %p2388 = scmp.lt.s32.totalorder %s27, 1
        %s2389 = scalar_select %p2388, %s27, 1
        %p2390 = scmp.lt.s32.totalorder %s2387, 31
        %s2391 = scalar_select %p2390, %s2387, 31
        %s2392 = smul.addr %s2389, 32
        %s2393 = sadd.s32 %s2391, %s2392
        %s2394 = smul.addr %s2393, 8
        %s2395 = scalar_lea.vmem %s8, %s2394
      $region80: #{sd_cascade_res_block.3} parent=75 // pred_fallthru
        _
    $region76: #{sd_cascade_res_block.3} parent=5 // pred_fallthru
      _
  $region6: #{sd_cascade_res_block.3} parent=0 // loop_footer
    %s18 = sadd.s32 1, %s14
  $region7: #{sd_cascade_res_block.3} parent=0 // loop_footer_branch
    %13 = sbr.rel target = $region3
  $region8: #{sd_cascade_res_block.3} parent=0 // loop_exit
    _

</llo_original>
